<compile_context>
chip_gen: v7x
topology: tpu7x:2x2x1
jax: 0.10.0
libtpu: 0.0.40
codegen_flags: <defaults>
</compile_context>

<pallas_src>
import math

import jax
import jax.numpy as jnp
from jax.experimental import pallas as pl
from jax.experimental.pallas import tpu as pltpu

EMBED_DIM = 32
NUM_CLASS = 19
Z_DIM = 16

TN = 512      # points per grid step (lane axis); sweep 512-2048 for big clouds
TP = 128      # inner point sub-tile — keeps class-loop working set < 64 vregs
CH = 4        # classes per chunk of the softmax/aggregate loop

SIGMOID_THRESHOLD = 0.8


def refine_kernel(xin_ref, coarse_ref, bigw_ref, bigb_ref, wcd_ref,
                  selw2_ref, bao_ref, thr_ref, out_ref):
    D, C = EMBED_DIM, NUM_CLASS
    tn = out_ref.shape[1]

    xin = xin_ref[...]                        # (D+3, tn)  [feat.T ; flow.T]
    coarse = coarse_ref[...]                  # (C, tn)
    big_w = bigw_ref[...]                     # (3D+C, D+3)
    big_b = bigb_ref[...]                     # (3D+C, 1)
    wc = wcd_ref[0]                           # (C, D)  cvae class embedding
    w_ao = wcd_ref[1]                         # (C, D)  (wv@wo@wt_bot@wout).T
    sel_w2 = selw2_ref[...]                   # (D, 1)
    b_ao = bao_ref[...]                       # (C, 1)
    thr = thr_ref[0]                          # scalar (SMEM): logit(0.8) - sel_b2

    # ---- one stacked MXU matmul for every feat/flow-side projection ----
    y = jnp.dot(big_w, xin, preferred_element_type=jnp.float32) + big_b   # (3D+C, tn)
    h = jnp.maximum(y[0:D, :], 0.0)           # select_mlp hidden (BN folded)
    qk = y[D:2 * D, :]                        # q @ Wk^T (1/sqrt(D) folded)
    base = y[2 * D:3 * D, :]                  # cvae base (z & flow terms folded)
    out_fo = y[3 * D:3 * D + C, :]            # feat-only output path (+ bias)

    flow = xin[D:D + 3, :]
    temp_mask = ((flow[0:1, :] != 0.0) |
                 (flow[1:2, :] != 0.0) |
                 (flow[2:3, :] != 0.0))                         # (1, tn)
    score = jnp.sum(h * sel_w2, axis=0, keepdims=True)          # (1, tn)
    valid = (score < thr) & temp_mask                           # (1, tn)

    # ---- coarse-pred softmax over the class (sublane) axis ----
    cm = jnp.max(coarse, axis=0, keepdims=True)
    ce = jnp.exp(coarse - cm)
    cp = ce * pl.reciprocal(jnp.sum(ce, axis=0, keepdims=True), approx=False)  # (C, tn)

    any_valid = jnp.sum(jnp.where(valid, 1.0, 0.0)) > 0.0

    @pl.when(jnp.logical_not(any_valid))
    def _():
        out_ref[...] = out_fo.astype(out_ref.dtype)

    @pl.when(any_valid)
    def _():
        agg_parts = []
        for p0 in range(0, tn, TP):                       # point sub-tiles
            base_p = base[:, p0:p0 + TP]                  # (D, TP)
            qk_p = qk[:, p0:p0 + TP]                      # (D, TP)
            cp_p = cp[:, p0:p0 + TP]                      # (C, TP)
            # Per-point bound M >= max_c logit_c  (|tanh| <= 1, cp >= 0), so
            # exp(logit - M) stays in (0, 1] without a running max / rescale.
            mb = (jnp.sum(jnp.abs(qk_p), axis=0, keepdims=True) *
                  jnp.max(cp_p, axis=0, keepdims=True))   # (1, TP)
            l = jnp.zeros((1, TP), jnp.float32)
            acc = jnp.zeros((D, TP), jnp.float32)
            for c0 in range(0, C, CH):                    # class chunks
                c1 = min(c0 + CH, C)
                gen = jnp.tanh(base_p[None, :, :]
                               + wc[c0:c1, :][:, :, None])              # (ch, D, TP)
                lg = cp_p[c0:c1, :] * jnp.sum(gen * qk_p[None, :, :], axis=1)  # (ch, TP)
                p = jnp.exp(lg - mb)                                     # (ch, TP)
                l = l + jnp.sum(p, axis=0, keepdims=True)
                w = p * cp_p[c0:c1, :]
                acc = acc + jnp.sum(w[:, None, :] * gen, axis=0)         # (D, TP)
            agg_parts.append(acc * pl.reciprocal(l, approx=False))
        agg = jnp.concatenate(agg_parts, axis=1)                         # (D, tn)
        contrib = jnp.dot(w_ao, agg, preferred_element_type=jnp.float32) + b_ao
        out_t = out_fo + jnp.where(valid, contrib, 0.0)
        out_ref[...] = out_t.astype(out_ref.dtype)


def fold_params(params, z):
    """Host-side algebraic folding of all parameter chains."""
    d, C = EMBED_DIM, NUM_CLASS
    inv = 1.0 / math.sqrt(d)

    a_sel1 = (params["sel_w1"] * params["bn_scale"]).T                    # (d, d)
    b_sel1 = params["bn_shift"].T                                         # (d, 1)

    a_qk = (params["wq"] @ params["wk"].T).T * inv                        # (d, d)
    b_qk = (params["bq"] @ params["wk"].T).T * inv                        # (d, 1)

    cvae_const = (z @ params["cvae_wz"] + params["cvae_b"]).T             # (d, 1)
    wf_t = params["cvae_wf"].T                                            # (d, 3)

    wt_top = params["wt"][:d, :]
    wt_bot = params["wt"][d:, :]
    w_fo = (wt_top @ params["wout"]).T                                    # (C, d)
    b_fo = (params["bt"] @ params["wout"] + params["bout"]).T             # (C, 1)
    w_ao = (params["wv"] @ params["wo"] @ wt_bot @ params["wout"]).T      # (C, d)
    b_ao = ((params["bv"] @ params["wo"] + params["bo"])
            @ wt_bot @ params["wout"]).T                                  # (C, 1)

    zd3 = jnp.zeros((d, 3), jnp.float32)
    big_w = jnp.concatenate([
        jnp.concatenate([a_sel1, zd3], axis=1),
        jnp.concatenate([a_qk, zd3], axis=1),
        jnp.concatenate([jnp.zeros((d, d), jnp.float32), wf_t], axis=1),
        jnp.concatenate([w_fo, jnp.zeros((C, 3), jnp.float32)], axis=1),
    ], axis=0).astype(jnp.float32)                                        # (3d+C, d+3)
    big_b = jnp.concatenate([b_sel1, b_qk, cvae_const, b_fo],
                            axis=0).astype(jnp.float32)                  # (3d+C, 1)
    wcd = jnp.stack([params["cvae_wc"], w_ao], axis=0)                    # (2, C, d)

    logit_thr = math.log(SIGMOID_THRESHOLD / (1.0 - SIGMOID_THRESHOLD))
    thresh = (logit_thr - params["sel_b2"].reshape(-1)).astype(jnp.float32)  # (1,)
    return big_w, big_b, wcd, params["sel_w2"], b_ao, thresh


def refine_forward(params, feat, scene_flow, coarse_pred, z, *, tn=TN):
    n, d = feat.shape
    assert d == EMBED_DIM and coarse_pred.shape[1] == NUM_CLASS
    assert tn % TP == 0
    C = NUM_CLASS
    n_pad = pl.cdiv(n, tn) * tn
    pad = n_pad - n

    # lane-dense transposed inputs; feat & flow packed into one (d+3, N) array
    xin = jnp.concatenate([
        jnp.pad(feat, ((0, pad), (0, 0))).T,            # (d, n_pad)
        jnp.pad(scene_flow, ((0, pad), (0, 0))).T,      # (3, n_pad) pad rows -> mask False
    ], axis=0)
    coarse_t = jnp.pad(coarse_pred, ((0, pad), (0, 0))).T                 # (C, n_pad)

    big_w, big_b, wcd, sel_w2, b_ao, thresh = fold_params(params, z)

    out_t = pl.pallas_call(
        refine_kernel,
        out_shape=jax.ShapeDtypeStruct((C, n_pad), jnp.float32),
        grid=(n_pad // tn,),
        in_specs=[
            pl.BlockSpec((d + 3, tn), lambda i: (0, i)),            # [feat.T ; flow.T]
            pl.BlockSpec((C, tn), lambda i: (0, i)),                # coarse_pred.T
            pl.BlockSpec((3 * d + C, d + 3), lambda i: (0, 0)),     # stacked proj matrix
            pl.BlockSpec((3 * d + C, 1), lambda i: (0, 0)),         # stacked proj biases
            pl.BlockSpec((2, C, d), lambda i: (0, 0, 0)),           # [cvae_wc, w_ao]
            pl.BlockSpec((d, 1), lambda i: (0, 0)),                 # sel_w2
            pl.BlockSpec((C, 1), lambda i: (0, 0)),                 # b_ao
            pl.BlockSpec(memory_space=pltpu.MemorySpace.SMEM),      # threshold scalar
        ],
        out_specs=pl.BlockSpec((C, tn), lambda i: (0, i)),          # lane-dense output
        compiler_params=pltpu.CompilerParams(
            dimension_semantics=("parallel",),
            vmem_limit_bytes=32 * 1024 * 1024,
        ),
    )(xin, coarse_t, big_w, big_b, wcd, sel_w2, b_ao, thresh)
    return out_t.T[:n]


def refine_reference(params, feat, scene_flow, coarse_pred, z):
    """Pure-JAX mirror of the PyTorch forward (target=None, based_argmax=False)."""
    cp = jax.nn.softmax(coarse_pred, axis=-1)
    temp_mask = (scene_flow[:, 0] != 0) | (scene_flow[:, 1] != 0) | (scene_flow[:, 2] != 0)
    h = feat @ params["sel_w1"]
    h = jax.nn.relu(h * params["bn_scale"] + params["bn_shift"])
    quality = jax.nn.sigmoid(h @ params["sel_w2"] + params["sel_b2"])[:, 0]
    valid = (quality < SIGMOID_THRESHOLD) & temp_mask

    base = z @ params["cvae_wz"] + scene_flow @ params["cvae_wf"] + params["cvae_b"]  # (n, d)
    gen = jnp.tanh(base[:, None, :] + params["cvae_wc"][None, :, :])                  # (n, C, d)
    gen = gen * cp[:, :, None]

    q = (feat @ params["wq"] + params["bq"])[:, None, :]           # (n, 1, d)
    k = gen @ params["wk"] + params["bk"]                          # (n, C, d)
    v = gen @ params["wv"] + params["bv"]
    attn = jnp.einsum("nqd,ncd->nqc", q, k) / math.sqrt(EMBED_DIM)
    attn = jax.nn.softmax(attn, axis=-1)
    aug = jnp.einsum("nqc,ncd->nqd", attn, v)[:, 0, :]
    aug = aug @ params["wo"] + params["bo"]
    new_feat = jnp.where(valid[:, None], aug, 0.0)
    refine = jnp.concatenate([feat, new_feat], axis=-1) @ params["wt"] + params["bt"]
    return refine @ params["wout"] + params["bout"]


def init_params(key):
    d, C, zd = EMBED_DIM, NUM_CLASS, Z_DIM
    ks = jax.random.split(key, 24)

    def lin(k, fan_in, shape):
        s = 1.0 / math.sqrt(fan_in)
        return jax.random.uniform(k, shape, jnp.float32, -s, s)

    eps = 1e-4
    gamma = 1.0 + 0.1 * jax.random.normal(ks[20], (1, d), jnp.float32)
    beta = 0.1 * jax.random.normal(ks[21], (1, d), jnp.float32)
    run_mean = 0.1 * jax.random.normal(ks[22], (1, d), jnp.float32)
    run_var = jnp.ones((1, d), jnp.float32)
    bn_scale = gamma / jnp.sqrt(run_var + eps)
    bn_shift = beta - run_mean * bn_scale

    return dict(
        sel_w1=lin(ks[0], d, (d, d)),
        bn_scale=bn_scale, bn_shift=bn_shift,
        sel_w2=lin(ks[1], d, (d, 1)), sel_b2=lin(ks[2], d, (1, 1)),
        wq=lin(ks[3], d, (d, d)), bq=lin(ks[4], d, (1, d)),
        wk=lin(ks[5], d, (d, d)), bk=lin(ks[6], d, (1, d)),
        wv=lin(ks[7], d, (d, d)), bv=lin(ks[8], d, (1, d)),
        wo=lin(ks[9], d, (d, d)), bo=lin(ks[10], d, (1, d)),
        wt=lin(ks[11], 2 * d, (2 * d, d)), bt=lin(ks[12], 2 * d, (1, d)),
        wout=lin(ks[13], d, (d, C)), bout=lin(ks[14], d, (1, C)),
        cvae_wz=lin(ks[15], zd, (zd, d)),
        cvae_wc=lin(ks[16], C, (C, d)),
        cvae_wf=lin(ks[17], 3, (3, d)),
        cvae_b=lin(ks[18], zd + C + 3, (1, d)),
    )


if __name__ == "__main__":
    key = jax.random.PRNGKey(0)
    k1, k2, k3, k4, k5, kp = jax.random.split(key, 6)

    n = 1000   # not a multiple of TN (exercises padding); grid length 2
    feat = jax.random.normal(k1, (n, EMBED_DIM), jnp.float32)
    scene_flow = jax.random.normal(k2, (n, 3), jnp.float32)
    # zero out ~25% of flows so temp_mask exercises both branches
    flow_zero = jax.random.bernoulli(k3, 0.25, (n,))
    scene_flow = jnp.where(flow_zero[:, None], 0.0, scene_flow)
    coarse_pred = jax.random.normal(k4, (n, NUM_CLASS), jnp.float32)
    z = jax.random.normal(k5, (1, Z_DIM), jnp.float32)   # torch.randn((1,1,z_dim)) analogue

    params = init_params(kp)

    out = refine_forward(params, feat, scene_flow, coarse_pred, z)
    out = jax.block_until_ready(out)
    assert out.shape == (n, NUM_CLASS)

    ref = refine_reference(params, feat, scene_flow, coarse_pred, z)
    max_err = float(jnp.max(jnp.abs(out - ref)))
    if not (max_err < 5e-2):
        raise AssertionError(f"kernel/reference mismatch, max abs err = {max_err}")

    print("KERNEL_OK")
</pallas_src>

<mosaic_0001>
module attributes {stable_mosaic.version = 11 : i64} {
  func.func @refine_kernel(%arg0: i32, %arg1: memref<35x512xf32, #tpu.memory_space<vmem>>, %arg2: memref<19x512xf32, #tpu.memory_space<vmem>>, %arg3: memref<115x35xf32, #tpu.memory_space<vmem>>, %arg4: memref<115x1xf32, #tpu.memory_space<vmem>>, %arg5: memref<2x19x32xf32, #tpu.memory_space<vmem>>, %arg6: memref<32x1xf32, #tpu.memory_space<vmem>>, %arg7: memref<19x1xf32, #tpu.memory_space<vmem>>, %arg8: memref<1xf32, #tpu.memory_space<smem>>, %arg9: memref<19x512xf32, #tpu.memory_space<vmem>>) attributes {dimension_semantics = [#tpu.dimension_semantics<parallel>], iteration_bounds = array<i64: 2>, scalar_prefetch = 0 : i64, scratch_operands = 0 : i64, tpu.core_type = #tpu.core_type<tc>, window_params = [{transform_indices = @transform_0, window_bounds = array<i64: 35, 512>}, {transform_indices = @transform_1, window_bounds = array<i64: 19, 512>}, {pipeline_mode = #tpu.pipeline_mode<synchronous>, transform_indices = @transform_2, window_bounds = array<i64: 115, 35>}, {pipeline_mode = #tpu.pipeline_mode<synchronous>, transform_indices = @transform_3, window_bounds = array<i64: 115, 1>}, {pipeline_mode = #tpu.pipeline_mode<synchronous>, transform_indices = @transform_4, window_bounds = array<i64: 2, 19, 32>}, {pipeline_mode = #tpu.pipeline_mode<synchronous>, transform_indices = @transform_5, window_bounds = array<i64: 32, 1>}, {pipeline_mode = #tpu.pipeline_mode<synchronous>, transform_indices = @transform_6, window_bounds = array<i64: 19, 1>}, {transform_indices = @transform_7, window_bounds = array<i64: 1>}, {transform_indices = @transform_8, window_bounds = array<i64: 19, 512>}]} {
    %c0 = arith.constant 0 : index
    %c0_0 = arith.constant 0 : index
    %0 = vector.load %arg1[%c0, %c0_0] : memref<35x512xf32, #tpu.memory_space<vmem>>, vector<35x512xf32>
    %c0_1 = arith.constant 0 : index
    %c0_2 = arith.constant 0 : index
    %1 = vector.load %arg2[%c0_1, %c0_2] : memref<19x512xf32, #tpu.memory_space<vmem>>, vector<19x512xf32>
    %c0_3 = arith.constant 0 : index
    %c0_4 = arith.constant 0 : index
    %2 = vector.load %arg3[%c0_3, %c0_4] : memref<115x35xf32, #tpu.memory_space<vmem>>, vector<115x35xf32>
    %c0_5 = arith.constant 0 : index
    %c0_6 = arith.constant 0 : index
    %3 = vector.load %arg4[%c0_5, %c0_6] : memref<115x1xf32, #tpu.memory_space<vmem>>, vector<115x1xf32>
    %c0_7 = arith.constant 0 : index
    %c0_8 = arith.constant 0 : index
    %c0_9 = arith.constant 0 : index
    %4 = vector.load %arg5[%c0_7, %c0_8, %c0_9] : memref<2x19x32xf32, #tpu.memory_space<vmem>>, vector<1x19x32xf32>
    %5 = vector.shape_cast %4 : vector<1x19x32xf32> to vector<19x32xf32>
    %c1 = arith.constant 1 : index
    %c0_10 = arith.constant 0 : index
    %c0_11 = arith.constant 0 : index
    %6 = vector.load %arg5[%c1, %c0_10, %c0_11] : memref<2x19x32xf32, #tpu.memory_space<vmem>>, vector<1x19x32xf32>
    %7 = vector.shape_cast %6 : vector<1x19x32xf32> to vector<19x32xf32>
    %c0_12 = arith.constant 0 : index
    %c0_13 = arith.constant 0 : index
    %8 = vector.load %arg6[%c0_12, %c0_13] : memref<32x1xf32, #tpu.memory_space<vmem>>, vector<32x1xf32>
    %c0_14 = arith.constant 0 : index
    %c0_15 = arith.constant 0 : index
    %9 = vector.load %arg7[%c0_14, %c0_15] : memref<19x1xf32, #tpu.memory_space<vmem>>, vector<19x1xf32>
    %c0_16 = arith.constant 0 : index
    %10 = memref.load %arg8[%c0_16] : memref<1xf32, #tpu.memory_space<smem>>
    %cst = arith.constant dense<0.000000e+00> : vector<115x512xf32>
    %11 = tpu.matmul %2, %0, %cst {dimension_numbers = #tpu.dot_dimension_numbers<[1], [0], [0], [1], [0, 0, 1, 1], [], []>} : vector<115x35xf32>, vector<35x512xf32>, vector<115x512xf32> -> vector<115x512xf32>
    %12 = vector.broadcast %3 : vector<115x1xf32> to vector<115x512xf32>
    %13 = arith.addf %11, %12 : vector<115x512xf32>
    %14 = vector.extract_strided_slice %13 {offsets = [0, 0], sizes = [32, 512], strides = [1, 1]} : vector<115x512xf32> to vector<32x512xf32>
    %cst_17 = arith.constant 0.000000e+00 : f32
    %15 = vector.broadcast %cst_17 : f32 to vector<32x512xf32>
    %16 = arith.maximumf %14, %15 : vector<32x512xf32>
    %17 = vector.extract_strided_slice %13 {offsets = [32, 0], sizes = [32, 512], strides = [1, 1]} : vector<115x512xf32> to vector<32x512xf32>
    %18 = vector.extract_strided_slice %13 {offsets = [64, 0], sizes = [32, 512], strides = [1, 1]} : vector<115x512xf32> to vector<32x512xf32>
    %19 = vector.extract_strided_slice %13 {offsets = [96, 0], sizes = [19, 512], strides = [1, 1]} : vector<115x512xf32> to vector<19x512xf32>
    %20 = vector.extract_strided_slice %0 {offsets = [32, 0], sizes = [3, 512], strides = [1, 1]} : vector<35x512xf32> to vector<3x512xf32>
    %21 = vector.extract_strided_slice %20 {offsets = [0, 0], sizes = [1, 512], strides = [1, 1]} : vector<3x512xf32> to vector<1x512xf32>
    %cst_18 = arith.constant 0.000000e+00 : f32
    %22 = vector.broadcast %cst_18 : f32 to vector<1x512xf32>
    %23 = arith.cmpf one, %21, %22 : vector<1x512xf32>
    %24 = vector.extract_strided_slice %20 {offsets = [1, 0], sizes = [1, 512], strides = [1, 1]} : vector<3x512xf32> to vector<1x512xf32>
    %cst_19 = arith.constant 0.000000e+00 : f32
    %25 = vector.broadcast %cst_19 : f32 to vector<1x512xf32>
    %26 = arith.cmpf one, %24, %25 : vector<1x512xf32>
    %27 = arith.ori %23, %26 : vector<1x512xi1>
    %28 = vector.extract_strided_slice %20 {offsets = [2, 0], sizes = [1, 512], strides = [1, 1]} : vector<3x512xf32> to vector<1x512xf32>
    %cst_20 = arith.constant 0.000000e+00 : f32
    %29 = vector.broadcast %cst_20 : f32 to vector<1x512xf32>
    %30 = arith.cmpf one, %28, %29 : vector<1x512xf32>
    %31 = arith.ori %27, %30 : vector<1x512xi1>
    %32 = vector.broadcast %8 : vector<32x1xf32> to vector<32x512xf32>
    %33 = arith.mulf %16, %32 : vector<32x512xf32>
    %cst_21 = arith.constant dense<0.000000e+00> : vector<512xf32>
    %34 = vector.multi_reduction <add>, %33, %cst_21 [0] : vector<32x512xf32> to vector<512xf32>
    %35 = vector.shape_cast %34 : vector<512xf32> to vector<1x512xf32>
    %36 = vector.broadcast %10 : f32 to vector<1x512xf32>
    %37 = arith.cmpf olt, %35, %36 : vector<1x512xf32>
    %38 = arith.andi %37, %31 : vector<1x512xi1>
    %cst_22 = arith.constant dense<0xFF800000> : vector<512xf32>
    %39 = vector.multi_reduction <maximumf>, %1, %cst_22 [0] : vector<19x512xf32> to vector<512xf32>
    %40 = vector.shape_cast %39 : vector<512xf32> to vector<1x512xf32>
    %41 = vector.broadcast %40 : vector<1x512xf32> to vector<19x512xf32>
    %42 = arith.subf %1, %41 : vector<19x512xf32>
    %43 = math.exp %42 : vector<19x512xf32>
    %cst_23 = arith.constant dense<0.000000e+00> : vector<512xf32>
    %44 = vector.multi_reduction <add>, %43, %cst_23 [0] : vector<19x512xf32> to vector<512xf32>
    %45 = vector.shape_cast %44 : vector<512xf32> to vector<1x512xf32>
    %46 = tpu.reciprocal %45 : vector<1x512xf32> -> vector<1x512xf32>
    %47 = vector.broadcast %46 : vector<1x512xf32> to vector<19x512xf32>
    %48 = arith.mulf %43, %47 : vector<19x512xf32>
    %cst_24 = arith.constant 1.000000e+00 : f32
    %cst_25 = arith.constant 0.000000e+00 : f32
    %49 = vector.broadcast %cst_24 : f32 to vector<1x512xf32>
    %50 = vector.broadcast %cst_25 : f32 to vector<1x512xf32>
    %51 = arith.select %38, %49, %50 : vector<1x512xi1>, vector<1x512xf32>
    %52 = vector.shape_cast %51 : vector<1x512xf32> to vector<1x1x512xf32>
    %cst_26 = arith.constant dense<0.000000e+00> : vector<1xf32>
    %53 = vector.multi_reduction <add>, %52, %cst_26 [1, 2] : vector<1x1x512xf32> to vector<1xf32>
    %54 = vector.shape_cast %53 : vector<1xf32> to vector<1x1x1xf32>
    %55 = vector.extract %54[0, 0, 0] : f32 from vector<1x1x1xf32>
    %cst_27 = arith.constant 0.000000e+00 : f32
    %56 = arith.cmpf ogt, %55, %cst_27 : f32
    %true = arith.constant true
    %57 = arith.xori %56, %true : i1
    %58 = arith.extui %57 : i1 to i32
    %c0_i32 = arith.constant 0 : i32
    %59 = arith.cmpi ne, %58, %c0_i32 : i32
    scf.if %59 {
      %c0_29 = arith.constant 0 : index
      %c0_30 = arith.constant 0 : index
      %62 = vector.load %arg9[%c0_29, %c0_30] : memref<19x512xf32, #tpu.memory_space<vmem>>, vector<19x512xf32>
      tpu.vector_store %arg9[%c0_29, %c0_30], %19 {strides = array<i32>} : memref<19x512xf32, #tpu.memory_space<vmem>>, vector<19x512xf32>,
    } else {
    }
    %60 = arith.extui %56 : i1 to i32
    %c0_i32_28 = arith.constant 0 : i32
    %61 = arith.cmpi ne, %60, %c0_i32_28 : i32
    scf.if %61 {
      %62 = vector.extract_strided_slice %18 {offsets = [0, 0], sizes = [32, 128], strides = [1, 1]} : vector<32x512xf32> to vector<32x128xf32>
      %63 = vector.extract_strided_slice %17 {offsets = [0, 0], sizes = [32, 128], strides = [1, 1]} : vector<32x512xf32> to vector<32x128xf32>
      %64 = vector.extract_strided_slice %48 {offsets = [0, 0], sizes = [19, 128], strides = [1, 1]} : vector<19x512xf32> to vector<19x128xf32>
      %65 = math.absf %63 : vector<32x128xf32>
      %cst_29 = arith.constant dense<0.000000e+00> : vector<128xf32>
      %66 = vector.multi_reduction <add>, %65, %cst_29 [0] : vector<32x128xf32> to vector<128xf32>
      %67 = vector.shape_cast %66 : vector<128xf32> to vector<1x128xf32>
      %cst_30 = arith.constant dense<0xFF800000> : vector<128xf32>
      %68 = vector.multi_reduction <maximumf>, %64, %cst_30 [0] : vector<19x128xf32> to vector<128xf32>
      %69 = vector.shape_cast %68 : vector<128xf32> to vector<1x128xf32>
      %70 = arith.mulf %67, %69 : vector<1x128xf32>
      %cst_31 = arith.constant 0.000000e+00 : f32
      %71 = vector.broadcast %cst_31 : f32 to vector<1x128xf32>
      %cst_32 = arith.constant 0.000000e+00 : f32
      %72 = vector.broadcast %cst_32 : f32 to vector<32x128xf32>
      %73 = vector.shape_cast %62 : vector<32x128xf32> to vector<1x32x128xf32>
      %74 = vector.extract_strided_slice %5 {offsets = [0, 0], sizes = [4, 32], strides = [1, 1]} : vector<19x32xf32> to vector<4x32xf32>
      %75 = vector.shape_cast %74 : vector<4x32xf32> to vector<4x32x1xf32>
      %76 = vector.broadcast %73 : vector<1x32x128xf32> to vector<4x32x128xf32>
      %77 = vector.broadcast %75 : vector<4x32x1xf32> to vector<4x32x128xf32>
      %78 = arith.addf %76, %77 : vector<4x32x128xf32>
      %79 = math.tanh %78 : vector<4x32x128xf32>
      %80 = vector.extract_strided_slice %64 {offsets = [0, 0], sizes = [4, 128], strides = [1, 1]} : vector<19x128xf32> to vector<4x128xf32>
      %81 = vector.shape_cast %63 : vector<32x128xf32> to vector<1x32x128xf32>
      %82 = vector.broadcast %81 : vector<1x32x128xf32> to vector<4x32x128xf32>
      %83 = arith.mulf %79, %82 : vector<4x32x128xf32>
      %cst_33 = arith.constant dense<0.000000e+00> : vector<4x128xf32>
      %84 = vector.multi_reduction <add>, %83, %cst_33 [1] : vector<4x32x128xf32> to vector<4x128xf32>
      %85 = arith.mulf %80, %84 : vector<4x128xf32>
      %86 = vector.broadcast %70 : vector<1x128xf32> to vector<4x128xf32>
      %87 = arith.subf %85, %86 : vector<4x128xf32>
      %88 = math.exp %87 : vector<4x128xf32>
      %cst_34 = arith.constant dense<0.000000e+00> : vector<128xf32>
      %89 = vector.multi_reduction <add>, %88, %cst_34 [0] : vector<4x128xf32> to vector<128xf32>
      %90 = vector.shape_cast %89 : vector<128xf32> to vector<1x128xf32>
      %91 = arith.addf %71, %90 : vector<1x128xf32>
      %92 = vector.extract_strided_slice %64 {offsets = [0, 0], sizes = [4, 128], strides = [1, 1]} : vector<19x128xf32> to vector<4x128xf32>
      %93 = arith.mulf %88, %92 : vector<4x128xf32>
      %94 = vector.shape_cast %93 : vector<4x128xf32> to vector<4x1x128xf32>
      %95 = vector.broadcast %94 : vector<4x1x128xf32> to vector<4x32x128xf32>
      %96 = arith.mulf %95, %79 : vector<4x32x128xf32>
      %cst_35 = arith.constant dense<0.000000e+00> : vector<32x128xf32>
      %97 = vector.multi_reduction <add>, %96, %cst_35 [0] : vector<4x32x128xf32> to vector<32x128xf32>
      %98 = arith.addf %72, %97 : vector<32x128xf32>
      %99 = vector.shape_cast %62 : vector<32x128xf32> to vector<1x32x128xf32>
      %100 = vector.extract_strided_slice %5 {offsets = [4, 0], sizes = [4, 32], strides = [1, 1]} : vector<19x32xf32> to vector<4x32xf32>
      %101 = vector.shape_cast %100 : vector<4x32xf32> to vector<4x32x1xf32>
      %102 = vector.broadcast %99 : vector<1x32x128xf32> to vector<4x32x128xf32>
      %103 = vector.broadcast %101 : vector<4x32x1xf32> to vector<4x32x128xf32>
      %104 = arith.addf %102, %103 : vector<4x32x128xf32>
      %105 = math.tanh %104 : vector<4x32x128xf32>
      %106 = vector.extract_strided_slice %64 {offsets = [4, 0], sizes = [4, 128], strides = [1, 1]} : vector<19x128xf32> to vector<4x128xf32>
      %107 = vector.shape_cast %63 : vector<32x128xf32> to vector<1x32x128xf32>
      %108 = vector.broadcast %107 : vector<1x32x128xf32> to vector<4x32x128xf32>
      %109 = arith.mulf %105, %108 : vector<4x32x128xf32>
      %cst_36 = arith.constant dense<0.000000e+00> : vector<4x128xf32>
      %110 = vector.multi_reduction <add>, %109, %cst_36 [1] : vector<4x32x128xf32> to vector<4x128xf32>
      %111 = arith.mulf %106, %110 : vector<4x128xf32>
      %112 = vector.broadcast %70 : vector<1x128xf32> to vector<4x128xf32>
      %113 = arith.subf %111, %112 : vector<4x128xf32>
      %114 = math.exp %113 : vector<4x128xf32>
      %cst_37 = arith.constant dense<0.000000e+00> : vector<128xf32>
      %115 = vector.multi_reduction <add>, %114, %cst_37 [0] : vector<4x128xf32> to vector<128xf32>
      %116 = vector.shape_cast %115 : vector<128xf32> to vector<1x128xf32>
      %117 = arith.addf %91, %116 : vector<1x128xf32>
      %118 = vector.extract_strided_slice %64 {offsets = [4, 0], sizes = [4, 128], strides = [1, 1]} : vector<19x128xf32> to vector<4x128xf32>
      %119 = arith.mulf %114, %118 : vector<4x128xf32>
      %120 = vector.shape_cast %119 : vector<4x128xf32> to vector<4x1x128xf32>
      %121 = vector.broadcast %120 : vector<4x1x128xf32> to vector<4x32x128xf32>
      %122 = arith.mulf %121, %105 : vector<4x32x128xf32>
      %cst_38 = arith.constant dense<0.000000e+00> : vector<32x128xf32>
      %123 = vector.multi_reduction <add>, %122, %cst_38 [0] : vector<4x32x128xf32> to vector<32x128xf32>
      %124 = arith.addf %98, %123 : vector<32x128xf32>
      %125 = vector.shape_cast %62 : vector<32x128xf32> to vector<1x32x128xf32>
      %126 = vector.extract_strided_slice %5 {offsets = [8, 0], sizes = [4, 32], strides = [1, 1]} : vector<19x32xf32> to vector<4x32xf32>
      %127 = vector.shape_cast %126 : vector<4x32xf32> to vector<4x32x1xf32>
      %128 = vector.broadcast %125 : vector<1x32x128xf32> to vector<4x32x128xf32>
      %129 = vector.broadcast %127 : vector<4x32x1xf32> to vector<4x32x128xf32>
      %130 = arith.addf %128, %129 : vector<4x32x128xf32>
      %131 = math.tanh %130 : vector<4x32x128xf32>
      %132 = vector.extract_strided_slice %64 {offsets = [8, 0], sizes = [4, 128], strides = [1, 1]} : vector<19x128xf32> to vector<4x128xf32>
      %133 = vector.shape_cast %63 : vector<32x128xf32> to vector<1x32x128xf32>
      %134 = vector.broadcast %133 : vector<1x32x128xf32> to vector<4x32x128xf32>
      %135 = arith.mulf %131, %134 : vector<4x32x128xf32>
      %cst_39 = arith.constant dense<0.000000e+00> : vector<4x128xf32>
      %136 = vector.multi_reduction <add>, %135, %cst_39 [1] : vector<4x32x128xf32> to vector<4x128xf32>
      %137 = arith.mulf %132, %136 : vector<4x128xf32>
      %138 = vector.broadcast %70 : vector<1x128xf32> to vector<4x128xf32>
      %139 = arith.subf %137, %138 : vector<4x128xf32>
      %140 = math.exp %139 : vector<4x128xf32>
      %cst_40 = arith.constant dense<0.000000e+00> : vector<128xf32>
      %141 = vector.multi_reduction <add>, %140, %cst_40 [0] : vector<4x128xf32> to vector<128xf32>
      %142 = vector.shape_cast %141 : vector<128xf32> to vector<1x128xf32>
      %143 = arith.addf %117, %142 : vector<1x128xf32>
      %144 = vector.extract_strided_slice %64 {offsets = [8, 0], sizes = [4, 128], strides = [1, 1]} : vector<19x128xf32> to vector<4x128xf32>
      %145 = arith.mulf %140, %144 : vector<4x128xf32>
      %146 = vector.shape_cast %145 : vector<4x128xf32> to vector<4x1x128xf32>
      %147 = vector.broadcast %146 : vector<4x1x128xf32> to vector<4x32x128xf32>
      %148 = arith.mulf %147, %131 : vector<4x32x128xf32>
      %cst_41 = arith.constant dense<0.000000e+00> : vector<32x128xf32>
      %149 = vector.multi_reduction <add>, %148, %cst_41 [0] : vector<4x32x128xf32> to vector<32x128xf32>
      %150 = arith.addf %124, %149 : vector<32x128xf32>
      %151 = vector.shape_cast %62 : vector<32x128xf32> to vector<1x32x128xf32>
      %152 = vector.extract_strided_slice %5 {offsets = [12, 0], sizes = [4, 32], strides = [1, 1]} : vector<19x32xf32> to vector<4x32xf32>
      %153 = vector.shape_cast %152 : vector<4x32xf32> to vector<4x32x1xf32>
      %154 = vector.broadcast %151 : vector<1x32x128xf32> to vector<4x32x128xf32>
      %155 = vector.broadcast %153 : vector<4x32x1xf32> to vector<4x32x128xf32>
      %156 = arith.addf %154, %155 : vector<4x32x128xf32>
      %157 = math.tanh %156 : vector<4x32x128xf32>
      %158 = vector.extract_strided_slice %64 {offsets = [12, 0], sizes = [4, 128], strides = [1, 1]} : vector<19x128xf32> to vector<4x128xf32>
      %159 = vector.shape_cast %63 : vector<32x128xf32> to vector<1x32x128xf32>
      %160 = vector.broadcast %159 : vector<1x32x128xf32> to vector<4x32x128xf32>
      %161 = arith.mulf %157, %160 : vector<4x32x128xf32>
      %cst_42 = arith.constant dense<0.000000e+00> : vector<4x128xf32>
      %162 = vector.multi_reduction <add>, %161, %cst_42 [1] : vector<4x32x128xf32> to vector<4x128xf32>
      %163 = arith.mulf %158, %162 : vector<4x128xf32>
      %164 = vector.broadcast %70 : vector<1x128xf32> to vector<4x128xf32>
      %165 = arith.subf %163, %164 : vector<4x128xf32>
      %166 = math.exp %165 : vector<4x128xf32>
      %cst_43 = arith.constant dense<0.000000e+00> : vector<128xf32>
      %167 = vector.multi_reduction <add>, %166, %cst_43 [0] : vector<4x128xf32> to vector<128xf32>
      %168 = vector.shape_cast %167 : vector<128xf32> to vector<1x128xf32>
      %169 = arith.addf %143, %168 : vector<1x128xf32>
      %170 = vector.extract_strided_slice %64 {offsets = [12, 0], sizes = [4, 128], strides = [1, 1]} : vector<19x128xf32> to vector<4x128xf32>
      %171 = arith.mulf %166, %170 : vector<4x128xf32>
      %172 = vector.shape_cast %171 : vector<4x128xf32> to vector<4x1x128xf32>
      %173 = vector.broadcast %172 : vector<4x1x128xf32> to vector<4x32x128xf32>
      %174 = arith.mulf %173, %157 : vector<4x32x128xf32>
      %cst_44 = arith.constant dense<0.000000e+00> : vector<32x128xf32>
      %175 = vector.multi_reduction <add>, %174, %cst_44 [0] : vector<4x32x128xf32> to vector<32x128xf32>
      %176 = arith.addf %150, %175 : vector<32x128xf32>
      %177 = vector.shape_cast %62 : vector<32x128xf32> to vector<1x32x128xf32>
      %178 = vector.extract_strided_slice %5 {offsets = [16, 0], sizes = [3, 32], strides = [1, 1]} : vector<19x32xf32> to vector<3x32xf32>
      %179 = vector.shape_cast %178 : vector<3x32xf32> to vector<3x32x1xf32>
      %180 = vector.broadcast %177 : vector<1x32x128xf32> to vector<3x32x128xf32>
      %181 = vector.broadcast %179 : vector<3x32x1xf32> to vector<3x32x128xf32>
      %182 = arith.addf %180, %181 : vector<3x32x128xf32>
      %183 = math.tanh %182 : vector<3x32x128xf32>
      %184 = vector.extract_strided_slice %64 {offsets = [16, 0], sizes = [3, 128], strides = [1, 1]} : vector<19x128xf32> to vector<3x128xf32>
      %185 = vector.shape_cast %63 : vector<32x128xf32> to vector<1x32x128xf32>
      %186 = vector.broadcast %185 : vector<1x32x128xf32> to vector<3x32x128xf32>
      %187 = arith.mulf %183, %186 : vector<3x32x128xf32>
      %cst_45 = arith.constant dense<0.000000e+00> : vector<3x128xf32>
      %188 = vector.multi_reduction <add>, %187, %cst_45 [1] : vector<3x32x128xf32> to vector<3x128xf32>
      %189 = arith.mulf %184, %188 : vector<3x128xf32>
      %190 = vector.broadcast %70 : vector<1x128xf32> to vector<3x128xf32>
      %191 = arith.subf %189, %190 : vector<3x128xf32>
      %192 = math.exp %191 : vector<3x128xf32>
      %cst_46 = arith.constant dense<0.000000e+00> : vector<128xf32>
      %193 = vector.multi_reduction <add>, %192, %cst_46 [0] : vector<3x128xf32> to vector<128xf32>
      %194 = vector.shape_cast %193 : vector<128xf32> to vector<1x128xf32>
      %195 = arith.addf %169, %194 : vector<1x128xf32>
      %196 = vector.extract_strided_slice %64 {offsets = [16, 0], sizes = [3, 128], strides = [1, 1]} : vector<19x128xf32> to vector<3x128xf32>
      %197 = arith.mulf %192, %196 : vector<3x128xf32>
      %198 = vector.shape_cast %197 : vector<3x128xf32> to vector<3x1x128xf32>
      %199 = vector.broadcast %198 : vector<3x1x128xf32> to vector<3x32x128xf32>
      %200 = arith.mulf %199, %183 : vector<3x32x128xf32>
      %cst_47 = arith.constant dense<0.000000e+00> : vector<32x128xf32>
      %201 = vector.multi_reduction <add>, %200, %cst_47 [0] : vector<3x32x128xf32> to vector<32x128xf32>
      %202 = arith.addf %176, %201 : vector<32x128xf32>
      %203 = tpu.reciprocal %195 : vector<1x128xf32> -> vector<1x128xf32>
      %204 = vector.broadcast %203 : vector<1x128xf32> to vector<32x128xf32>
      %205 = arith.mulf %202, %204 : vector<32x128xf32>
      %206 = vector.extract_strided_slice %18 {offsets = [0, 128], sizes = [32, 128], strides = [1, 1]} : vector<32x512xf32> to vector<32x128xf32>
      %207 = vector.extract_strided_slice %17 {offsets = [0, 128], sizes = [32, 128], strides = [1, 1]} : vector<32x512xf32> to vector<32x128xf32>
      %208 = vector.extract_strided_slice %48 {offsets = [0, 128], sizes = [19, 128], strides = [1, 1]} : vector<19x512xf32> to vector<19x128xf32>
      %209 = math.absf %207 : vector<32x128xf32>
      %cst_48 = arith.constant dense<0.000000e+00> : vector<128xf32>
      %210 = vector.multi_reduction <add>, %209, %cst_48 [0] : vector<32x128xf32> to vector<128xf32>
      %211 = vector.shape_cast %210 : vector<128xf32> to vector<1x128xf32>
      %cst_49 = arith.constant dense<0xFF800000> : vector<128xf32>
      %212 = vector.multi_reduction <maximumf>, %208, %cst_49 [0] : vector<19x128xf32> to vector<128xf32>
      %213 = vector.shape_cast %212 : vector<128xf32> to vector<1x128xf32>
      %214 = arith.mulf %211, %213 : vector<1x128xf32>
      %cst_50 = arith.constant 0.000000e+00 : f32
      %215 = vector.broadcast %cst_50 : f32 to vector<1x128xf32>
      %cst_51 = arith.constant 0.000000e+00 : f32
      %216 = vector.broadcast %cst_51 : f32 to vector<32x128xf32>
      %217 = vector.shape_cast %206 : vector<32x128xf32> to vector<1x32x128xf32>
      %218 = vector.extract_strided_slice %5 {offsets = [0, 0], sizes = [4, 32], strides = [1, 1]} : vector<19x32xf32> to vector<4x32xf32>
      %219 = vector.shape_cast %218 : vector<4x32xf32> to vector<4x32x1xf32>
      %220 = vector.broadcast %217 : vector<1x32x128xf32> to vector<4x32x128xf32>
      %221 = vector.broadcast %219 : vector<4x32x1xf32> to vector<4x32x128xf32>
      %222 = arith.addf %220, %221 : vector<4x32x128xf32>
      %223 = math.tanh %222 : vector<4x32x128xf32>
      %224 = vector.extract_strided_slice %208 {offsets = [0, 0], sizes = [4, 128], strides = [1, 1]} : vector<19x128xf32> to vector<4x128xf32>
      %225 = vector.shape_cast %207 : vector<32x128xf32> to vector<1x32x128xf32>
      %226 = vector.broadcast %225 : vector<1x32x128xf32> to vector<4x32x128xf32>
      %227 = arith.mulf %223, %226 : vector<4x32x128xf32>
      %cst_52 = arith.constant dense<0.000000e+00> : vector<4x128xf32>
      %228 = vector.multi_reduction <add>, %227, %cst_52 [1] : vector<4x32x128xf32> to vector<4x128xf32>
      %229 = arith.mulf %224, %228 : vector<4x128xf32>
      %230 = vector.broadcast %214 : vector<1x128xf32> to vector<4x128xf32>
      %231 = arith.subf %229, %230 : vector<4x128xf32>
      %232 = math.exp %231 : vector<4x128xf32>
      %cst_53 = arith.constant dense<0.000000e+00> : vector<128xf32>
      %233 = vector.multi_reduction <add>, %232, %cst_53 [0] : vector<4x128xf32> to vector<128xf32>
      %234 = vector.shape_cast %233 : vector<128xf32> to vector<1x128xf32>
      %235 = arith.addf %215, %234 : vector<1x128xf32>
      %236 = vector.extract_strided_slice %208 {offsets = [0, 0], sizes = [4, 128], strides = [1, 1]} : vector<19x128xf32> to vector<4x128xf32>
      %237 = arith.mulf %232, %236 : vector<4x128xf32>
      %238 = vector.shape_cast %237 : vector<4x128xf32> to vector<4x1x128xf32>
      %239 = vector.broadcast %238 : vector<4x1x128xf32> to vector<4x32x128xf32>
      %240 = arith.mulf %239, %223 : vector<4x32x128xf32>
      %cst_54 = arith.constant dense<0.000000e+00> : vector<32x128xf32>
      %241 = vector.multi_reduction <add>, %240, %cst_54 [0] : vector<4x32x128xf32> to vector<32x128xf32>
      %242 = arith.addf %216, %241 : vector<32x128xf32>
      %243 = vector.shape_cast %206 : vector<32x128xf32> to vector<1x32x128xf32>
      %244 = vector.extract_strided_slice %5 {offsets = [4, 0], sizes = [4, 32], strides = [1, 1]} : vector<19x32xf32> to vector<4x32xf32>
      %245 = vector.shape_cast %244 : vector<4x32xf32> to vector<4x32x1xf32>
      %246 = vector.broadcast %243 : vector<1x32x128xf32> to vector<4x32x128xf32>
      %247 = vector.broadcast %245 : vector<4x32x1xf32> to vector<4x32x128xf32>
      %248 = arith.addf %246, %247 : vector<4x32x128xf32>
      %249 = math.tanh %248 : vector<4x32x128xf32>
      %250 = vector.extract_strided_slice %208 {offsets = [4, 0], sizes = [4, 128], strides = [1, 1]} : vector<19x128xf32> to vector<4x128xf32>
      %251 = vector.shape_cast %207 : vector<32x128xf32> to vector<1x32x128xf32>
      %252 = vector.broadcast %251 : vector<1x32x128xf32> to vector<4x32x128xf32>
      %253 = arith.mulf %249, %252 : vector<4x32x128xf32>
      %cst_55 = arith.constant dense<0.000000e+00> : vector<4x128xf32>
      %254 = vector.multi_reduction <add>, %253, %cst_55 [1] : vector<4x32x128xf32> to vector<4x128xf32>
      %255 = arith.mulf %250, %254 : vector<4x128xf32>
      %256 = vector.broadcast %214 : vector<1x128xf32> to vector<4x128xf32>
      %257 = arith.subf %255, %256 : vector<4x128xf32>
      %258 = math.exp %257 : vector<4x128xf32>
      %cst_56 = arith.constant dense<0.000000e+00> : vector<128xf32>
      %259 = vector.multi_reduction <add>, %258, %cst_56 [0] : vector<4x128xf32> to vector<128xf32>
      %260 = vector.shape_cast %259 : vector<128xf32> to vector<1x128xf32>
      %261 = arith.addf %235, %260 : vector<1x128xf32>
      %262 = vector.extract_strided_slice %208 {offsets = [4, 0], sizes = [4, 128], strides = [1, 1]} : vector<19x128xf32> to vector<4x128xf32>
      %263 = arith.mulf %258, %262 : vector<4x128xf32>
      %264 = vector.shape_cast %263 : vector<4x128xf32> to vector<4x1x128xf32>
      %265 = vector.broadcast %264 : vector<4x1x128xf32> to vector<4x32x128xf32>
      %266 = arith.mulf %265, %249 : vector<4x32x128xf32>
      %cst_57 = arith.constant dense<0.000000e+00> : vector<32x128xf32>
      %267 = vector.multi_reduction <add>, %266, %cst_57 [0] : vector<4x32x128xf32> to vector<32x128xf32>
      %268 = arith.addf %242, %267 : vector<32x128xf32>
      %269 = vector.shape_cast %206 : vector<32x128xf32> to vector<1x32x128xf32>
      %270 = vector.extract_strided_slice %5 {offsets = [8, 0], sizes = [4, 32], strides = [1, 1]} : vector<19x32xf32> to vector<4x32xf32>
      %271 = vector.shape_cast %270 : vector<4x32xf32> to vector<4x32x1xf32>
      %272 = vector.broadcast %269 : vector<1x32x128xf32> to vector<4x32x128xf32>
      %273 = vector.broadcast %271 : vector<4x32x1xf32> to vector<4x32x128xf32>
      %274 = arith.addf %272, %273 : vector<4x32x128xf32>
      %275 = math.tanh %274 : vector<4x32x128xf32>
      %276 = vector.extract_strided_slice %208 {offsets = [8, 0], sizes = [4, 128], strides = [1, 1]} : vector<19x128xf32> to vector<4x128xf32>
      %277 = vector.shape_cast %207 : vector<32x128xf32> to vector<1x32x128xf32>
      %278 = vector.broadcast %277 : vector<1x32x128xf32> to vector<4x32x128xf32>
      %279 = arith.mulf %275, %278 : vector<4x32x128xf32>
      %cst_58 = arith.constant dense<0.000000e+00> : vector<4x128xf32>
      %280 = vector.multi_reduction <add>, %279, %cst_58 [1] : vector<4x32x128xf32> to vector<4x128xf32>
      %281 = arith.mulf %276, %280 : vector<4x128xf32>
      %282 = vector.broadcast %214 : vector<1x128xf32> to vector<4x128xf32>
      %283 = arith.subf %281, %282 : vector<4x128xf32>
      %284 = math.exp %283 : vector<4x128xf32>
      %cst_59 = arith.constant dense<0.000000e+00> : vector<128xf32>
      %285 = vector.multi_reduction <add>, %284, %cst_59 [0] : vector<4x128xf32> to vector<128xf32>
      %286 = vector.shape_cast %285 : vector<128xf32> to vector<1x128xf32>
      %287 = arith.addf %261, %286 : vector<1x128xf32>
      %288 = vector.extract_strided_slice %208 {offsets = [8, 0], sizes = [4, 128], strides = [1, 1]} : vector<19x128xf32> to vector<4x128xf32>
      %289 = arith.mulf %284, %288 : vector<4x128xf32>
      %290 = vector.shape_cast %289 : vector<4x128xf32> to vector<4x1x128xf32>
      %291 = vector.broadcast %290 : vector<4x1x128xf32> to vector<4x32x128xf32>
      %292 = arith.mulf %291, %275 : vector<4x32x128xf32>
      %cst_60 = arith.constant dense<0.000000e+00> : vector<32x128xf32>
      %293 = vector.multi_reduction <add>, %292, %cst_60 [0] : vector<4x32x128xf32> to vector<32x128xf32>
      %294 = arith.addf %268, %293 : vector<32x128xf32>
      %295 = vector.shape_cast %206 : vector<32x128xf32> to vector<1x32x128xf32>
      %296 = vector.extract_strided_slice %5 {offsets = [12, 0], sizes = [4, 32], strides = [1, 1]} : vector<19x32xf32> to vector<4x32xf32>
      %297 = vector.shape_cast %296 : vector<4x32xf32> to vector<4x32x1xf32>
      %298 = vector.broadcast %295 : vector<1x32x128xf32> to vector<4x32x128xf32>
      %299 = vector.broadcast %297 : vector<4x32x1xf32> to vector<4x32x128xf32>
      %300 = arith.addf %298, %299 : vector<4x32x128xf32>
      %301 = math.tanh %300 : vector<4x32x128xf32>
      %302 = vector.extract_strided_slice %208 {offsets = [12, 0], sizes = [4, 128], strides = [1, 1]} : vector<19x128xf32> to vector<4x128xf32>
      %303 = vector.shape_cast %207 : vector<32x128xf32> to vector<1x32x128xf32>
      %304 = vector.broadcast %303 : vector<1x32x128xf32> to vector<4x32x128xf32>
      %305 = arith.mulf %301, %304 : vector<4x32x128xf32>
      %cst_61 = arith.constant dense<0.000000e+00> : vector<4x128xf32>
      %306 = vector.multi_reduction <add>, %305, %cst_61 [1] : vector<4x32x128xf32> to vector<4x128xf32>
      %307 = arith.mulf %302, %306 : vector<4x128xf32>
      %308 = vector.broadcast %214 : vector<1x128xf32> to vector<4x128xf32>
      %309 = arith.subf %307, %308 : vector<4x128xf32>
      %310 = math.exp %309 : vector<4x128xf32>
      %cst_62 = arith.constant dense<0.000000e+00> : vector<128xf32>
      %311 = vector.multi_reduction <add>, %310, %cst_62 [0] : vector<4x128xf32> to vector<128xf32>
      %312 = vector.shape_cast %311 : vector<128xf32> to vector<1x128xf32>
      %313 = arith.addf %287, %312 : vector<1x128xf32>
      %314 = vector.extract_strided_slice %208 {offsets = [12, 0], sizes = [4, 128], strides = [1, 1]} : vector<19x128xf32> to vector<4x128xf32>
      %315 = arith.mulf %310, %314 : vector<4x128xf32>
      %316 = vector.shape_cast %315 : vector<4x128xf32> to vector<4x1x128xf32>
      %317 = vector.broadcast %316 : vector<4x1x128xf32> to vector<4x32x128xf32>
      %318 = arith.mulf %317, %301 : vector<4x32x128xf32>
      %cst_63 = arith.constant dense<0.000000e+00> : vector<32x128xf32>
      %319 = vector.multi_reduction <add>, %318, %cst_63 [0] : vector<4x32x128xf32> to vector<32x128xf32>
      %320 = arith.addf %294, %319 : vector<32x128xf32>
      %321 = vector.shape_cast %206 : vector<32x128xf32> to vector<1x32x128xf32>
      %322 = vector.extract_strided_slice %5 {offsets = [16, 0], sizes = [3, 32], strides = [1, 1]} : vector<19x32xf32> to vector<3x32xf32>
      %323 = vector.shape_cast %322 : vector<3x32xf32> to vector<3x32x1xf32>
      %324 = vector.broadcast %321 : vector<1x32x128xf32> to vector<3x32x128xf32>
      %325 = vector.broadcast %323 : vector<3x32x1xf32> to vector<3x32x128xf32>
      %326 = arith.addf %324, %325 : vector<3x32x128xf32>
      %327 = math.tanh %326 : vector<3x32x128xf32>
      %328 = vector.extract_strided_slice %208 {offsets = [16, 0], sizes = [3, 128], strides = [1, 1]} : vector<19x128xf32> to vector<3x128xf32>
      %329 = vector.shape_cast %207 : vector<32x128xf32> to vector<1x32x128xf32>
      %330 = vector.broadcast %329 : vector<1x32x128xf32> to vector<3x32x128xf32>
      %331 = arith.mulf %327, %330 : vector<3x32x128xf32>
      %cst_64 = arith.constant dense<0.000000e+00> : vector<3x128xf32>
      %332 = vector.multi_reduction <add>, %331, %cst_64 [1] : vector<3x32x128xf32> to vector<3x128xf32>
      %333 = arith.mulf %328, %332 : vector<3x128xf32>
      %334 = vector.broadcast %214 : vector<1x128xf32> to vector<3x128xf32>
      %335 = arith.subf %333, %334 : vector<3x128xf32>
      %336 = math.exp %335 : vector<3x128xf32>
      %cst_65 = arith.constant dense<0.000000e+00> : vector<128xf32>
      %337 = vector.multi_reduction <add>, %336, %cst_65 [0] : vector<3x128xf32> to vector<128xf32>
      %338 = vector.shape_cast %337 : vector<128xf32> to vector<1x128xf32>
      %339 = arith.addf %313, %338 : vector<1x128xf32>
      %340 = vector.extract_strided_slice %208 {offsets = [16, 0], sizes = [3, 128], strides = [1, 1]} : vector<19x128xf32> to vector<3x128xf32>
      %341 = arith.mulf %336, %340 : vector<3x128xf32>
      %342 = vector.shape_cast %341 : vector<3x128xf32> to vector<3x1x128xf32>
      %343 = vector.broadcast %342 : vector<3x1x128xf32> to vector<3x32x128xf32>
      %344 = arith.mulf %343, %327 : vector<3x32x128xf32>
      %cst_66 = arith.constant dense<0.000000e+00> : vector<32x128xf32>
      %345 = vector.multi_reduction <add>, %344, %cst_66 [0] : vector<3x32x128xf32> to vector<32x128xf32>
      %346 = arith.addf %320, %345 : vector<32x128xf32>
      %347 = tpu.reciprocal %339 : vector<1x128xf32> -> vector<1x128xf32>
      %348 = vector.broadcast %347 : vector<1x128xf32> to vector<32x128xf32>
      %349 = arith.mulf %346, %348 : vector<32x128xf32>
      %350 = vector.extract_strided_slice %18 {offsets = [0, 256], sizes = [32, 128], strides = [1, 1]} : vector<32x512xf32> to vector<32x128xf32>
      %351 = vector.extract_strided_slice %17 {offsets = [0, 256], sizes = [32, 128], strides = [1, 1]} : vector<32x512xf32> to vector<32x128xf32>
      %352 = vector.extract_strided_slice %48 {offsets = [0, 256], sizes = [19, 128], strides = [1, 1]} : vector<19x512xf32> to vector<19x128xf32>
      %353 = math.absf %351 : vector<32x128xf32>
      %cst_67 = arith.constant dense<0.000000e+00> : vector<128xf32>
      %354 = vector.multi_reduction <add>, %353, %cst_67 [0] : vector<32x128xf32> to vector<128xf32>
      %355 = vector.shape_cast %354 : vector<128xf32> to vector<1x128xf32>
      %cst_68 = arith.constant dense<0xFF800000> : vector<128xf32>
      %356 = vector.multi_reduction <maximumf>, %352, %cst_68 [0] : vector<19x128xf32> to vector<128xf32>
      %357 = vector.shape_cast %356 : vector<128xf32> to vector<1x128xf32>
      %358 = arith.mulf %355, %357 : vector<1x128xf32>
      %cst_69 = arith.constant 0.000000e+00 : f32
      %359 = vector.broadcast %cst_69 : f32 to vector<1x128xf32>
      %cst_70 = arith.constant 0.000000e+00 : f32
      %360 = vector.broadcast %cst_70 : f32 to vector<32x128xf32>
      %361 = vector.shape_cast %350 : vector<32x128xf32> to vector<1x32x128xf32>
      %362 = vector.extract_strided_slice %5 {offsets = [0, 0], sizes = [4, 32], strides = [1, 1]} : vector<19x32xf32> to vector<4x32xf32>
      %363 = vector.shape_cast %362 : vector<4x32xf32> to vector<4x32x1xf32>
      %364 = vector.broadcast %361 : vector<1x32x128xf32> to vector<4x32x128xf32>
      %365 = vector.broadcast %363 : vector<4x32x1xf32> to vector<4x32x128xf32>
      %366 = arith.addf %364, %365 : vector<4x32x128xf32>
      %367 = math.tanh %366 : vector<4x32x128xf32>
      %368 = vector.extract_strided_slice %352 {offsets = [0, 0], sizes = [4, 128], strides = [1, 1]} : vector<19x128xf32> to vector<4x128xf32>
      %369 = vector.shape_cast %351 : vector<32x128xf32> to vector<1x32x128xf32>
      %370 = vector.broadcast %369 : vector<1x32x128xf32> to vector<4x32x128xf32>
      %371 = arith.mulf %367, %370 : vector<4x32x128xf32>
      %cst_71 = arith.constant dense<0.000000e+00> : vector<4x128xf32>
      %372 = vector.multi_reduction <add>, %371, %cst_71 [1] : vector<4x32x128xf32> to vector<4x128xf32>
      %373 = arith.mulf %368, %372 : vector<4x128xf32>
      %374 = vector.broadcast %358 : vector<1x128xf32> to vector<4x128xf32>
      %375 = arith.subf %373, %374 : vector<4x128xf32>
      %376 = math.exp %375 : vector<4x128xf32>
      %cst_72 = arith.constant dense<0.000000e+00> : vector<128xf32>
      %377 = vector.multi_reduction <add>, %376, %cst_72 [0] : vector<4x128xf32> to vector<128xf32>
      %378 = vector.shape_cast %377 : vector<128xf32> to vector<1x128xf32>
      %379 = arith.addf %359, %378 : vector<1x128xf32>
      %380 = vector.extract_strided_slice %352 {offsets = [0, 0], sizes = [4, 128], strides = [1, 1]} : vector<19x128xf32> to vector<4x128xf32>
      %381 = arith.mulf %376, %380 : vector<4x128xf32>
      %382 = vector.shape_cast %381 : vector<4x128xf32> to vector<4x1x128xf32>
      %383 = vector.broadcast %382 : vector<4x1x128xf32> to vector<4x32x128xf32>
      %384 = arith.mulf %383, %367 : vector<4x32x128xf32>
      %cst_73 = arith.constant dense<0.000000e+00> : vector<32x128xf32>
      %385 = vector.multi_reduction <add>, %384, %cst_73 [0] : vector<4x32x128xf32> to vector<32x128xf32>
      %386 = arith.addf %360, %385 : vector<32x128xf32>
      %387 = vector.shape_cast %350 : vector<32x128xf32> to vector<1x32x128xf32>
      %388 = vector.extract_strided_slice %5 {offsets = [4, 0], sizes = [4, 32], strides = [1, 1]} : vector<19x32xf32> to vector<4x32xf32>
      %389 = vector.shape_cast %388 : vector<4x32xf32> to vector<4x32x1xf32>
      %390 = vector.broadcast %387 : vector<1x32x128xf32> to vector<4x32x128xf32>
      %391 = vector.broadcast %389 : vector<4x32x1xf32> to vector<4x32x128xf32>
      %392 = arith.addf %390, %391 : vector<4x32x128xf32>
      %393 = math.tanh %392 : vector<4x32x128xf32>
      %394 = vector.extract_strided_slice %352 {offsets = [4, 0], sizes = [4, 128], strides = [1, 1]} : vector<19x128xf32> to vector<4x128xf32>
      %395 = vector.shape_cast %351 : vector<32x128xf32> to vector<1x32x128xf32>
      %396 = vector.broadcast %395 : vector<1x32x128xf32> to vector<4x32x128xf32>
      %397 = arith.mulf %393, %396 : vector<4x32x128xf32>
      %cst_74 = arith.constant dense<0.000000e+00> : vector<4x128xf32>
      %398 = vector.multi_reduction <add>, %397, %cst_74 [1] : vector<4x32x128xf32> to vector<4x128xf32>
      %399 = arith.mulf %394, %398 : vector<4x128xf32>
      %400 = vector.broadcast %358 : vector<1x128xf32> to vector<4x128xf32>
      %401 = arith.subf %399, %400 : vector<4x128xf32>
      %402 = math.exp %401 : vector<4x128xf32>
      %cst_75 = arith.constant dense<0.000000e+00> : vector<128xf32>
      %403 = vector.multi_reduction <add>, %402, %cst_75 [0] : vector<4x128xf32> to vector<128xf32>
      %404 = vector.shape_cast %403 : vector<128xf32> to vector<1x128xf32>
      %405 = arith.addf %379, %404 : vector<1x128xf32>
      %406 = vector.extract_strided_slice %352 {offsets = [4, 0], sizes = [4, 128], strides = [1, 1]} : vector<19x128xf32> to vector<4x128xf32>
      %407 = arith.mulf %402, %406 : vector<4x128xf32>
      %408 = vector.shape_cast %407 : vector<4x128xf32> to vector<4x1x128xf32>
      %409 = vector.broadcast %408 : vector<4x1x128xf32> to vector<4x32x128xf32>
      %410 = arith.mulf %409, %393 : vector<4x32x128xf32>
      %cst_76 = arith.constant dense<0.000000e+00> : vector<32x128xf32>
      %411 = vector.multi_reduction <add>, %410, %cst_76 [0] : vector<4x32x128xf32> to vector<32x128xf32>
      %412 = arith.addf %386, %411 : vector<32x128xf32>
      %413 = vector.shape_cast %350 : vector<32x128xf32> to vector<1x32x128xf32>
      %414 = vector.extract_strided_slice %5 {offsets = [8, 0], sizes = [4, 32], strides = [1, 1]} : vector<19x32xf32> to vector<4x32xf32>
      %415 = vector.shape_cast %414 : vector<4x32xf32> to vector<4x32x1xf32>
      %416 = vector.broadcast %413 : vector<1x32x128xf32> to vector<4x32x128xf32>
      %417 = vector.broadcast %415 : vector<4x32x1xf32> to vector<4x32x128xf32>
      %418 = arith.addf %416, %417 : vector<4x32x128xf32>
      %419 = math.tanh %418 : vector<4x32x128xf32>
      %420 = vector.extract_strided_slice %352 {offsets = [8, 0], sizes = [4, 128], strides = [1, 1]} : vector<19x128xf32> to vector<4x128xf32>
      %421 = vector.shape_cast %351 : vector<32x128xf32> to vector<1x32x128xf32>
      %422 = vector.broadcast %421 : vector<1x32x128xf32> to vector<4x32x128xf32>
      %423 = arith.mulf %419, %422 : vector<4x32x128xf32>
      %cst_77 = arith.constant dense<0.000000e+00> : vector<4x128xf32>
      %424 = vector.multi_reduction <add>, %423, %cst_77 [1] : vector<4x32x128xf32> to vector<4x128xf32>
      %425 = arith.mulf %420, %424 : vector<4x128xf32>
      %426 = vector.broadcast %358 : vector<1x128xf32> to vector<4x128xf32>
      %427 = arith.subf %425, %426 : vector<4x128xf32>
      %428 = math.exp %427 : vector<4x128xf32>
      %cst_78 = arith.constant dense<0.000000e+00> : vector<128xf32>
      %429 = vector.multi_reduction <add>, %428, %cst_78 [0] : vector<4x128xf32> to vector<128xf32>
      %430 = vector.shape_cast %429 : vector<128xf32> to vector<1x128xf32>
      %431 = arith.addf %405, %430 : vector<1x128xf32>
      %432 = vector.extract_strided_slice %352 {offsets = [8, 0], sizes = [4, 128], strides = [1, 1]} : vector<19x128xf32> to vector<4x128xf32>
      %433 = arith.mulf %428, %432 : vector<4x128xf32>
      %434 = vector.shape_cast %433 : vector<4x128xf32> to vector<4x1x128xf32>
      %435 = vector.broadcast %434 : vector<4x1x128xf32> to vector<4x32x128xf32>
      %436 = arith.mulf %435, %419 : vector<4x32x128xf32>
      %cst_79 = arith.constant dense<0.000000e+00> : vector<32x128xf32>
      %437 = vector.multi_reduction <add>, %436, %cst_79 [0] : vector<4x32x128xf32> to vector<32x128xf32>
      %438 = arith.addf %412, %437 : vector<32x128xf32>
      %439 = vector.shape_cast %350 : vector<32x128xf32> to vector<1x32x128xf32>
      %440 = vector.extract_strided_slice %5 {offsets = [12, 0], sizes = [4, 32], strides = [1, 1]} : vector<19x32xf32> to vector<4x32xf32>
      %441 = vector.shape_cast %440 : vector<4x32xf32> to vector<4x32x1xf32>
      %442 = vector.broadcast %439 : vector<1x32x128xf32> to vector<4x32x128xf32>
      %443 = vector.broadcast %441 : vector<4x32x1xf32> to vector<4x32x128xf32>
      %444 = arith.addf %442, %443 : vector<4x32x128xf32>
      %445 = math.tanh %444 : vector<4x32x128xf32>
      %446 = vector.extract_strided_slice %352 {offsets = [12, 0], sizes = [4, 128], strides = [1, 1]} : vector<19x128xf32> to vector<4x128xf32>
      %447 = vector.shape_cast %351 : vector<32x128xf32> to vector<1x32x128xf32>
      %448 = vector.broadcast %447 : vector<1x32x128xf32> to vector<4x32x128xf32>
      %449 = arith.mulf %445, %448 : vector<4x32x128xf32>
      %cst_80 = arith.constant dense<0.000000e+00> : vector<4x128xf32>
      %450 = vector.multi_reduction <add>, %449, %cst_80 [1] : vector<4x32x128xf32> to vector<4x128xf32>
      %451 = arith.mulf %446, %450 : vector<4x128xf32>
      %452 = vector.broadcast %358 : vector<1x128xf32> to vector<4x128xf32>
      %453 = arith.subf %451, %452 : vector<4x128xf32>
      %454 = math.exp %453 : vector<4x128xf32>
      %cst_81 = arith.constant dense<0.000000e+00> : vector<128xf32>
      %455 = vector.multi_reduction <add>, %454, %cst_81 [0] : vector<4x128xf32> to vector<128xf32>
      %456 = vector.shape_cast %455 : vector<128xf32> to vector<1x128xf32>
      %457 = arith.addf %431, %456 : vector<1x128xf32>
      %458 = vector.extract_strided_slice %352 {offsets = [12, 0], sizes = [4, 128], strides = [1, 1]} : vector<19x128xf32> to vector<4x128xf32>
      %459 = arith.mulf %454, %458 : vector<4x128xf32>
      %460 = vector.shape_cast %459 : vector<4x128xf32> to vector<4x1x128xf32>
      %461 = vector.broadcast %460 : vector<4x1x128xf32> to vector<4x32x128xf32>
      %462 = arith.mulf %461, %445 : vector<4x32x128xf32>
      %cst_82 = arith.constant dense<0.000000e+00> : vector<32x128xf32>
      %463 = vector.multi_reduction <add>, %462, %cst_82 [0] : vector<4x32x128xf32> to vector<32x128xf32>
      %464 = arith.addf %438, %463 : vector<32x128xf32>
      %465 = vector.shape_cast %350 : vector<32x128xf32> to vector<1x32x128xf32>
      %466 = vector.extract_strided_slice %5 {offsets = [16, 0], sizes = [3, 32], strides = [1, 1]} : vector<19x32xf32> to vector<3x32xf32>
      %467 = vector.shape_cast %466 : vector<3x32xf32> to vector<3x32x1xf32>
      %468 = vector.broadcast %465 : vector<1x32x128xf32> to vector<3x32x128xf32>
      %469 = vector.broadcast %467 : vector<3x32x1xf32> to vector<3x32x128xf32>
      %470 = arith.addf %468, %469 : vector<3x32x128xf32>
      %471 = math.tanh %470 : vector<3x32x128xf32>
      %472 = vector.extract_strided_slice %352 {offsets = [16, 0], sizes = [3, 128], strides = [1, 1]} : vector<19x128xf32> to vector<3x128xf32>
      %473 = vector.shape_cast %351 : vector<32x128xf32> to vector<1x32x128xf32>
      %474 = vector.broadcast %473 : vector<1x32x128xf32> to vector<3x32x128xf32>
      %475 = arith.mulf %471, %474 : vector<3x32x128xf32>
      %cst_83 = arith.constant dense<0.000000e+00> : vector<3x128xf32>
      %476 = vector.multi_reduction <add>, %475, %cst_83 [1] : vector<3x32x128xf32> to vector<3x128xf32>
      %477 = arith.mulf %472, %476 : vector<3x128xf32>
      %478 = vector.broadcast %358 : vector<1x128xf32> to vector<3x128xf32>
      %479 = arith.subf %477, %478 : vector<3x128xf32>
      %480 = math.exp %479 : vector<3x128xf32>
      %cst_84 = arith.constant dense<0.000000e+00> : vector<128xf32>
      %481 = vector.multi_reduction <add>, %480, %cst_84 [0] : vector<3x128xf32> to vector<128xf32>
      %482 = vector.shape_cast %481 : vector<128xf32> to vector<1x128xf32>
      %483 = arith.addf %457, %482 : vector<1x128xf32>
      %484 = vector.extract_strided_slice %352 {offsets = [16, 0], sizes = [3, 128], strides = [1, 1]} : vector<19x128xf32> to vector<3x128xf32>
      %485 = arith.mulf %480, %484 : vector<3x128xf32>
      %486 = vector.shape_cast %485 : vector<3x128xf32> to vector<3x1x128xf32>
      %487 = vector.broadcast %486 : vector<3x1x128xf32> to vector<3x32x128xf32>
      %488 = arith.mulf %487, %471 : vector<3x32x128xf32>
      %cst_85 = arith.constant dense<0.000000e+00> : vector<32x128xf32>
      %489 = vector.multi_reduction <add>, %488, %cst_85 [0] : vector<3x32x128xf32> to vector<32x128xf32>
      %490 = arith.addf %464, %489 : vector<32x128xf32>
      %491 = tpu.reciprocal %483 : vector<1x128xf32> -> vector<1x128xf32>
      %492 = vector.broadcast %491 : vector<1x128xf32> to vector<32x128xf32>
      %493 = arith.mulf %490, %492 : vector<32x128xf32>
      %494 = vector.extract_strided_slice %18 {offsets = [0, 384], sizes = [32, 128], strides = [1, 1]} : vector<32x512xf32> to vector<32x128xf32>
      %495 = vector.extract_strided_slice %17 {offsets = [0, 384], sizes = [32, 128], strides = [1, 1]} : vector<32x512xf32> to vector<32x128xf32>
      %496 = vector.extract_strided_slice %48 {offsets = [0, 384], sizes = [19, 128], strides = [1, 1]} : vector<19x512xf32> to vector<19x128xf32>
      %497 = math.absf %495 : vector<32x128xf32>
      %cst_86 = arith.constant dense<0.000000e+00> : vector<128xf32>
      %498 = vector.multi_reduction <add>, %497, %cst_86 [0] : vector<32x128xf32> to vector<128xf32>
      %499 = vector.shape_cast %498 : vector<128xf32> to vector<1x128xf32>
      %cst_87 = arith.constant dense<0xFF800000> : vector<128xf32>
      %500 = vector.multi_reduction <maximumf>, %496, %cst_87 [0] : vector<19x128xf32> to vector<128xf32>
      %501 = vector.shape_cast %500 : vector<128xf32> to vector<1x128xf32>
      %502 = arith.mulf %499, %501 : vector<1x128xf32>
      %cst_88 = arith.constant 0.000000e+00 : f32
      %503 = vector.broadcast %cst_88 : f32 to vector<1x128xf32>
      %cst_89 = arith.constant 0.000000e+00 : f32
      %504 = vector.broadcast %cst_89 : f32 to vector<32x128xf32>
      %505 = vector.shape_cast %494 : vector<32x128xf32> to vector<1x32x128xf32>
      %506 = vector.extract_strided_slice %5 {offsets = [0, 0], sizes = [4, 32], strides = [1, 1]} : vector<19x32xf32> to vector<4x32xf32>
      %507 = vector.shape_cast %506 : vector<4x32xf32> to vector<4x32x1xf32>
      %508 = vector.broadcast %505 : vector<1x32x128xf32> to vector<4x32x128xf32>
      %509 = vector.broadcast %507 : vector<4x32x1xf32> to vector<4x32x128xf32>
      %510 = arith.addf %508, %509 : vector<4x32x128xf32>
      %511 = math.tanh %510 : vector<4x32x128xf32>
      %512 = vector.extract_strided_slice %496 {offsets = [0, 0], sizes = [4, 128], strides = [1, 1]} : vector<19x128xf32> to vector<4x128xf32>
      %513 = vector.shape_cast %495 : vector<32x128xf32> to vector<1x32x128xf32>
      %514 = vector.broadcast %513 : vector<1x32x128xf32> to vector<4x32x128xf32>
      %515 = arith.mulf %511, %514 : vector<4x32x128xf32>
      %cst_90 = arith.constant dense<0.000000e+00> : vector<4x128xf32>
      %516 = vector.multi_reduction <add>, %515, %cst_90 [1] : vector<4x32x128xf32> to vector<4x128xf32>
      %517 = arith.mulf %512, %516 : vector<4x128xf32>
      %518 = vector.broadcast %502 : vector<1x128xf32> to vector<4x128xf32>
      %519 = arith.subf %517, %518 : vector<4x128xf32>
      %520 = math.exp %519 : vector<4x128xf32>
      %cst_91 = arith.constant dense<0.000000e+00> : vector<128xf32>
      %521 = vector.multi_reduction <add>, %520, %cst_91 [0] : vector<4x128xf32> to vector<128xf32>
      %522 = vector.shape_cast %521 : vector<128xf32> to vector<1x128xf32>
      %523 = arith.addf %503, %522 : vector<1x128xf32>
      %524 = vector.extract_strided_slice %496 {offsets = [0, 0], sizes = [4, 128], strides = [1, 1]} : vector<19x128xf32> to vector<4x128xf32>
      %525 = arith.mulf %520, %524 : vector<4x128xf32>
      %526 = vector.shape_cast %525 : vector<4x128xf32> to vector<4x1x128xf32>
      %527 = vector.broadcast %526 : vector<4x1x128xf32> to vector<4x32x128xf32>
      %528 = arith.mulf %527, %511 : vector<4x32x128xf32>
      %cst_92 = arith.constant dense<0.000000e+00> : vector<32x128xf32>
      %529 = vector.multi_reduction <add>, %528, %cst_92 [0] : vector<4x32x128xf32> to vector<32x128xf32>
      %530 = arith.addf %504, %529 : vector<32x128xf32>
      %531 = vector.shape_cast %494 : vector<32x128xf32> to vector<1x32x128xf32>
      %532 = vector.extract_strided_slice %5 {offsets = [4, 0], sizes = [4, 32], strides = [1, 1]} : vector<19x32xf32> to vector<4x32xf32>
      %533 = vector.shape_cast %532 : vector<4x32xf32> to vector<4x32x1xf32>
      %534 = vector.broadcast %531 : vector<1x32x128xf32> to vector<4x32x128xf32>
      %535 = vector.broadcast %533 : vector<4x32x1xf32> to vector<4x32x128xf32>
      %536 = arith.addf %534, %535 : vector<4x32x128xf32>
      %537 = math.tanh %536 : vector<4x32x128xf32>
      %538 = vector.extract_strided_slice %496 {offsets = [4, 0], sizes = [4, 128], strides = [1, 1]} : vector<19x128xf32> to vector<4x128xf32>
      %539 = vector.shape_cast %495 : vector<32x128xf32> to vector<1x32x128xf32>
      %540 = vector.broadcast %539 : vector<1x32x128xf32> to vector<4x32x128xf32>
      %541 = arith.mulf %537, %540 : vector<4x32x128xf32>
      %cst_93 = arith.constant dense<0.000000e+00> : vector<4x128xf32>
      %542 = vector.multi_reduction <add>, %541, %cst_93 [1] : vector<4x32x128xf32> to vector<4x128xf32>
      %543 = arith.mulf %538, %542 : vector<4x128xf32>
      %544 = vector.broadcast %502 : vector<1x128xf32> to vector<4x128xf32>
      %545 = arith.subf %543, %544 : vector<4x128xf32>
      %546 = math.exp %545 : vector<4x128xf32>
      %cst_94 = arith.constant dense<0.000000e+00> : vector<128xf32>
      %547 = vector.multi_reduction <add>, %546, %cst_94 [0] : vector<4x128xf32> to vector<128xf32>
      %548 = vector.shape_cast %547 : vector<128xf32> to vector<1x128xf32>
      %549 = arith.addf %523, %548 : vector<1x128xf32>
      %550 = vector.extract_strided_slice %496 {offsets = [4, 0], sizes = [4, 128], strides = [1, 1]} : vector<19x128xf32> to vector<4x128xf32>
      %551 = arith.mulf %546, %550 : vector<4x128xf32>
      %552 = vector.shape_cast %551 : vector<4x128xf32> to vector<4x1x128xf32>
      %553 = vector.broadcast %552 : vector<4x1x128xf32> to vector<4x32x128xf32>
      %554 = arith.mulf %553, %537 : vector<4x32x128xf32>
      %cst_95 = arith.constant dense<0.000000e+00> : vector<32x128xf32>
      %555 = vector.multi_reduction <add>, %554, %cst_95 [0] : vector<4x32x128xf32> to vector<32x128xf32>
      %556 = arith.addf %530, %555 : vector<32x128xf32>
      %557 = vector.shape_cast %494 : vector<32x128xf32> to vector<1x32x128xf32>
      %558 = vector.extract_strided_slice %5 {offsets = [8, 0], sizes = [4, 32], strides = [1, 1]} : vector<19x32xf32> to vector<4x32xf32>
      %559 = vector.shape_cast %558 : vector<4x32xf32> to vector<4x32x1xf32>
      %560 = vector.broadcast %557 : vector<1x32x128xf32> to vector<4x32x128xf32>
      %561 = vector.broadcast %559 : vector<4x32x1xf32> to vector<4x32x128xf32>
      %562 = arith.addf %560, %561 : vector<4x32x128xf32>
      %563 = math.tanh %562 : vector<4x32x128xf32>
      %564 = vector.extract_strided_slice %496 {offsets = [8, 0], sizes = [4, 128], strides = [1, 1]} : vector<19x128xf32> to vector<4x128xf32>
      %565 = vector.shape_cast %495 : vector<32x128xf32> to vector<1x32x128xf32>
      %566 = vector.broadcast %565 : vector<1x32x128xf32> to vector<4x32x128xf32>
      %567 = arith.mulf %563, %566 : vector<4x32x128xf32>
      %cst_96 = arith.constant dense<0.000000e+00> : vector<4x128xf32>
      %568 = vector.multi_reduction <add>, %567, %cst_96 [1] : vector<4x32x128xf32> to vector<4x128xf32>
      %569 = arith.mulf %564, %568 : vector<4x128xf32>
      %570 = vector.broadcast %502 : vector<1x128xf32> to vector<4x128xf32>
      %571 = arith.subf %569, %570 : vector<4x128xf32>
      %572 = math.exp %571 : vector<4x128xf32>
      %cst_97 = arith.constant dense<0.000000e+00> : vector<128xf32>
      %573 = vector.multi_reduction <add>, %572, %cst_97 [0] : vector<4x128xf32> to vector<128xf32>
      %574 = vector.shape_cast %573 : vector<128xf32> to vector<1x128xf32>
      %575 = arith.addf %549, %574 : vector<1x128xf32>
      %576 = vector.extract_strided_slice %496 {offsets = [8, 0], sizes = [4, 128], strides = [1, 1]} : vector<19x128xf32> to vector<4x128xf32>
      %577 = arith.mulf %572, %576 : vector<4x128xf32>
      %578 = vector.shape_cast %577 : vector<4x128xf32> to vector<4x1x128xf32>
      %579 = vector.broadcast %578 : vector<4x1x128xf32> to vector<4x32x128xf32>
      %580 = arith.mulf %579, %563 : vector<4x32x128xf32>
      %cst_98 = arith.constant dense<0.000000e+00> : vector<32x128xf32>
      %581 = vector.multi_reduction <add>, %580, %cst_98 [0] : vector<4x32x128xf32> to vector<32x128xf32>
      %582 = arith.addf %556, %581 : vector<32x128xf32>
      %583 = vector.shape_cast %494 : vector<32x128xf32> to vector<1x32x128xf32>
      %584 = vector.extract_strided_slice %5 {offsets = [12, 0], sizes = [4, 32], strides = [1, 1]} : vector<19x32xf32> to vector<4x32xf32>
      %585 = vector.shape_cast %584 : vector<4x32xf32> to vector<4x32x1xf32>
      %586 = vector.broadcast %583 : vector<1x32x128xf32> to vector<4x32x128xf32>
      %587 = vector.broadcast %585 : vector<4x32x1xf32> to vector<4x32x128xf32>
      %588 = arith.addf %586, %587 : vector<4x32x128xf32>
      %589 = math.tanh %588 : vector<4x32x128xf32>
      %590 = vector.extract_strided_slice %496 {offsets = [12, 0], sizes = [4, 128], strides = [1, 1]} : vector<19x128xf32> to vector<4x128xf32>
      %591 = vector.shape_cast %495 : vector<32x128xf32> to vector<1x32x128xf32>
      %592 = vector.broadcast %591 : vector<1x32x128xf32> to vector<4x32x128xf32>
      %593 = arith.mulf %589, %592 : vector<4x32x128xf32>
      %cst_99 = arith.constant dense<0.000000e+00> : vector<4x128xf32>
      %594 = vector.multi_reduction <add>, %593, %cst_99 [1] : vector<4x32x128xf32> to vector<4x128xf32>
      %595 = arith.mulf %590, %594 : vector<4x128xf32>
      %596 = vector.broadcast %502 : vector<1x128xf32> to vector<4x128xf32>
      %597 = arith.subf %595, %596 : vector<4x128xf32>
      %598 = math.exp %597 : vector<4x128xf32>
      %cst_100 = arith.constant dense<0.000000e+00> : vector<128xf32>
      %599 = vector.multi_reduction <add>, %598, %cst_100 [0] : vector<4x128xf32> to vector<128xf32>
      %600 = vector.shape_cast %599 : vector<128xf32> to vector<1x128xf32>
      %601 = arith.addf %575, %600 : vector<1x128xf32>
      %602 = vector.extract_strided_slice %496 {offsets = [12, 0], sizes = [4, 128], strides = [1, 1]} : vector<19x128xf32> to vector<4x128xf32>
      %603 = arith.mulf %598, %602 : vector<4x128xf32>
      %604 = vector.shape_cast %603 : vector<4x128xf32> to vector<4x1x128xf32>
      %605 = vector.broadcast %604 : vector<4x1x128xf32> to vector<4x32x128xf32>
      %606 = arith.mulf %605, %589 : vector<4x32x128xf32>
      %cst_101 = arith.constant dense<0.000000e+00> : vector<32x128xf32>
      %607 = vector.multi_reduction <add>, %606, %cst_101 [0] : vector<4x32x128xf32> to vector<32x128xf32>
      %608 = arith.addf %582, %607 : vector<32x128xf32>
      %609 = vector.shape_cast %494 : vector<32x128xf32> to vector<1x32x128xf32>
      %610 = vector.extract_strided_slice %5 {offsets = [16, 0], sizes = [3, 32], strides = [1, 1]} : vector<19x32xf32> to vector<3x32xf32>
      %611 = vector.shape_cast %610 : vector<3x32xf32> to vector<3x32x1xf32>
      %612 = vector.broadcast %609 : vector<1x32x128xf32> to vector<3x32x128xf32>
      %613 = vector.broadcast %611 : vector<3x32x1xf32> to vector<3x32x128xf32>
      %614 = arith.addf %612, %613 : vector<3x32x128xf32>
      %615 = math.tanh %614 : vector<3x32x128xf32>
      %616 = vector.extract_strided_slice %496 {offsets = [16, 0], sizes = [3, 128], strides = [1, 1]} : vector<19x128xf32> to vector<3x128xf32>
      %617 = vector.shape_cast %495 : vector<32x128xf32> to vector<1x32x128xf32>
      %618 = vector.broadcast %617 : vector<1x32x128xf32> to vector<3x32x128xf32>
      %619 = arith.mulf %615, %618 : vector<3x32x128xf32>
      %cst_102 = arith.constant dense<0.000000e+00> : vector<3x128xf32>
      %620 = vector.multi_reduction <add>, %619, %cst_102 [1] : vector<3x32x128xf32> to vector<3x128xf32>
      %621 = arith.mulf %616, %620 : vector<3x128xf32>
      %622 = vector.broadcast %502 : vector<1x128xf32> to vector<3x128xf32>
      %623 = arith.subf %621, %622 : vector<3x128xf32>
      %624 = math.exp %623 : vector<3x128xf32>
      %cst_103 = arith.constant dense<0.000000e+00> : vector<128xf32>
      %625 = vector.multi_reduction <add>, %624, %cst_103 [0] : vector<3x128xf32> to vector<128xf32>
      %626 = vector.shape_cast %625 : vector<128xf32> to vector<1x128xf32>
      %627 = arith.addf %601, %626 : vector<1x128xf32>
      %628 = vector.extract_strided_slice %496 {offsets = [16, 0], sizes = [3, 128], strides = [1, 1]} : vector<19x128xf32> to vector<3x128xf32>
      %629 = arith.mulf %624, %628 : vector<3x128xf32>
      %630 = vector.shape_cast %629 : vector<3x128xf32> to vector<3x1x128xf32>
      %631 = vector.broadcast %630 : vector<3x1x128xf32> to vector<3x32x128xf32>
      %632 = arith.mulf %631, %615 : vector<3x32x128xf32>
      %cst_104 = arith.constant dense<0.000000e+00> : vector<32x128xf32>
      %633 = vector.multi_reduction <add>, %632, %cst_104 [0] : vector<3x32x128xf32> to vector<32x128xf32>
      %634 = arith.addf %608, %633 : vector<32x128xf32>
      %635 = tpu.reciprocal %627 : vector<1x128xf32> -> vector<1x128xf32>
      %636 = vector.broadcast %635 : vector<1x128xf32> to vector<32x128xf32>
      %637 = arith.mulf %634, %636 : vector<32x128xf32>
      %638 = tpu.concatenate %205, %349, %493, %637 in 1 : vector<32x128xf32>, vector<32x128xf32>, vector<32x128xf32>, vector<32x128xf32> -> vector<32x512xf32>
      %cst_105 = arith.constant dense<0.000000e+00> : vector<19x512xf32>
      %639 = tpu.matmul %7, %638, %cst_105 {dimension_numbers = #tpu.dot_dimension_numbers<[1], [0], [0], [1], [0, 0, 1, 1], [], []>} : vector<19x32xf32>, vector<32x512xf32>, vector<19x512xf32> -> vector<19x512xf32>
      %640 = vector.broadcast %9 : vector<19x1xf32> to vector<19x512xf32>
      %641 = arith.addf %639, %640 : vector<19x512xf32>
      %cst_106 = arith.constant 0.000000e+00 : f32
      %642 = vector.shape_cast %38 : vector<1x512xi1> to vector<1x512xi1>
      %643 = vector.broadcast %642 : vector<1x512xi1> to vector<19x512xi1>
      %644 = vector.broadcast %cst_106 : f32 to vector<19x512xf32>
      %645 = arith.select %643, %641, %644 : vector<19x512xi1>, vector<19x512xf32>
      %646 = arith.addf %19, %645 : vector<19x512xf32>
      %c0_107 = arith.constant 0 : index
      %c0_108 = arith.constant 0 : index
      %647 = vector.load %arg9[%c0_107, %c0_108] : memref<19x512xf32, #tpu.memory_space<vmem>>, vector<19x512xf32>
      tpu.vector_store %arg9[%c0_107, %c0_108], %646 {strides = array<i32>} : memref<19x512xf32, #tpu.memory_space<vmem>>, vector<19x512xf32>,
    } else {
    }
    return
  }
  func.func @transform_0(%arg0: i32) -> (i32, i32) {
    %c0_i32 = arith.constant 0 : i32
    %c0_i32_0 = arith.constant 0 : i32
    return %c0_i32, %arg0 : i32, i32
  }
  func.func @transform_1(%arg0: i32) -> (i32, i32) {
    %c0_i32 = arith.constant 0 : i32
    %c0_i32_0 = arith.constant 0 : i32
    return %c0_i32, %arg0 : i32, i32
  }
  func.func @transform_2(%arg0: i32) -> (i32, i32) {
    %c0_i32 = arith.constant 0 : i32
    %c0_i32_0 = arith.constant 0 : i32
    %c0_i32_1 = arith.constant 0 : i32
    return %c0_i32, %c0_i32_0 : i32, i32
  }
  func.func @transform_3(%arg0: i32) -> (i32, i32) {
    %c0_i32 = arith.constant 0 : i32
    %c0_i32_0 = arith.constant 0 : i32
    %c0_i32_1 = arith.constant 0 : i32
    return %c0_i32, %c0_i32_0 : i32, i32
  }
  func.func @transform_4(%arg0: i32) -> (i32, i32, i32) {
    %c0_i32 = arith.constant 0 : i32
    %c0_i32_0 = arith.constant 0 : i32
    %c0_i32_1 = arith.constant 0 : i32
    %c0_i32_2 = arith.constant 0 : i32
    return %c0_i32, %c0_i32_0, %c0_i32_1 : i32, i32, i32
  }
  func.func @transform_5(%arg0: i32) -> (i32, i32) {
    %c0_i32 = arith.constant 0 : i32
    %c0_i32_0 = arith.constant 0 : i32
    %c0_i32_1 = arith.constant 0 : i32
    return %c0_i32, %c0_i32_0 : i32, i32
  }
  func.func @transform_6(%arg0: i32) -> (i32, i32) {
    %c0_i32 = arith.constant 0 : i32
    %c0_i32_0 = arith.constant 0 : i32
    %c0_i32_1 = arith.constant 0 : i32
    return %c0_i32, %c0_i32_0 : i32, i32
  }
  func.func @transform_7(%arg0: i32) -> i32 {
    %c0_i32 = arith.constant 0 : i32
    %c0_i32_0 = arith.constant 0 : i32
    return %c0_i32 : i32
  }
  func.func @transform_8(%arg0: i32) -> (i32, i32) {
    %c0_i32 = arith.constant 0 : i32
    %c0_i32_0 = arith.constant 0 : i32
    return %c0_i32, %arg0 : i32, i32
  }
}

</mosaic_0001>

<llo_original>
// kernel: tpu_custom_call.1
$region0: #{tpu_custom_call.1}
  #allocation0 [shape = 'u32[]', space=smem, size = 0x4, offset = 0x4, fixed_abs, tag = 'smem constant byte address 0x4 - core index']
  #allocation1 [shape = 'u32[144,128]{1,0:T(1,128)}', space=vmem, size = 0x12000, scoped, tag = 'internal scratch']
  #allocation2 [shape = 'f32[1]{0:T(128)S(6)}', space=smem, size = 0x200, scoped, tag = 'scoped memory for tpu_custom_call.1']
  %s0 = inlined_call_operand.vmem [shape: f32[35,1024], index: 0, kind: input, shape index: {}]
  %s1 = inlined_call_operand.hbm [shape: f32[19,1024], index: 1, kind: input, shape index: {}]
  %s2 = inlined_call_operand.vmem [shape: f32[115,35], index: 2, kind: input, shape index: {}]
  %s3 = inlined_call_operand.vmem [shape: f32[115,1], index: 3, kind: input, shape index: {}]
  %s4 = inlined_call_operand.vmem [shape: f32[2,19,32], index: 4, kind: input, shape index: {}]
  %s5 = inlined_call_operand.vmem [shape: f32[32,1], index: 5, kind: input, shape index: {}]
  %s6 = inlined_call_operand.vmem [shape: f32[19,1], index: 6, kind: input, shape index: {}]
  %s7 = inlined_call_operand.<no memory space> [shape: f32[1], index: 7, kind: input, shape index: {}]
  %s8 = inlined_call_operand.hbm [shape: f32[19,1024], index: 8, kind: output, shape index: {}]
  %s9 = sld [smem:[#allocation0]]
  $region100: #{tpu_custom_call.1} parent=0
    _
  %s11 = ssub.s32 1, %s9
  %s12 = scalar_select 0, %s11, %s9
  %13 = sst [smem:[#allocation2]] %s7
  $region1: #{tpu_custom_call.1} parent=0
    #allocation3 [shape = 'u8[163840]{0}', space=vmem, size = 0x28000, scoped, tag = 'input window, operand 0']
    #allocation4 [shape = 'u8[98304]{0}', space=vmem, size = 0x18000, scoped, tag = 'input window, operand 1']
    #allocation5 [shape = 's32[2]{0}', space=sflag, size = 0x8, scoped, tag = 'scoped memory for tpu_custom_call.1']
    #allocation6 [shape = 's32[2]{0}', space=sflag, size = 0x8, scoped, tag = 'scoped memory for tpu_custom_call.1']
    #allocation7 [shape = 'u8[98304]{0}', space=vmem, size = 0x18000, scoped, tag = 'output window, operand 0']
    %14 = vsyncpa [#allocation5], 0
    %s15 = scalar_lea.sflag [#allocation5], 1
    %16 = vsyncpa %s15, 0
    %17 = vsyncpa [#allocation6], 0
    %s18 = scalar_lea.sflag [#allocation6], 1
    %19 = vsyncpa %s18, 0
    loop: start=0, step=1, limit=4
    $region2: #{tpu_custom_call.1} parent=1 // loop_pre_header
      _
    $region3: #{tpu_custom_call.1} parent=1 // loop_header
      %s21 = sphi 0, %s25
      %p22 = scmp.ge.s32.totalorder %s21, 4
      %s31 = sphi 0, %s33
      %s34 = sphi 0, %s31
      %s35 = sphi 0, %s34
      %s51 = sphi 0, %s35
      %s57 = sphi 0, %s59
      %s60 = sphi 0, %s57
      %s61 = sphi 0, %s60
      %s77 = sphi 0, %s61
      %s81 = sphi 0, %s81
      %s83 = sphi 0, %s81
      %s84 = sphi 0, %s83
      %s98 = sphi 0, %s84
      %s102 = sphi 0, %s102
      %s104 = sphi 0, %s102
      %s105 = sphi 0, %s104
      %s119 = sphi 0, %s105
      %s123 = sphi 0, %s123
      %s125 = sphi 0, %s123
      %s126 = sphi 0, %s125
      %s140 = sphi 0, %s126
      %s144 = sphi 0, %s144
      %s146 = sphi 0, %s144
      %s147 = sphi 0, %s146
      %s161 = sphi 0, %s147
      %s165 = sphi 0, %s165
      %s167 = sphi 0, %s165
      %s168 = sphi 0, %s167
      %s182 = sphi 0, %s168
      %s186 = sphi 0, %s186
      %s188 = sphi 0, %s186
      %s189 = sphi 0, %s188
      %s203 = sphi 0, %s189
      %s209 = sphi 0, %s211
      %s212 = sphi 0, %s209
      %s213 = sphi 0, %s212
      %s229 = sphi 0, %s213
    $region4: #{tpu_custom_call.1} parent=1 // loop_header_branch
      %24 = sbr.rel (%p22) target = $region8
    $region5: #{tpu_custom_call.1} parent=1 // loop_body
      %s26 = ssub.s32 %s21, 1
      %s27 = ssub.s32 %s21, 2
      %s28 = sadd.s32 %s21, 1
      %s29 = ssub.s32 %s21, %s28
      %p30 = scmp.eq.s32.totalorder %s29, 0
      %s32 = sadd.s32 %s31, 1
      %s33 = scalar_select %p30, %s31, %s32
      %p36 = pneg %p30
      %p37 = scmp.eq.s32.totalorder %s21, 1
      %p38 = por %p36, %p37
      %p39 = scmp.ne.s32.totalorder %s31, %s34
      %p40 = scmp.eq.s32.totalorder %s21, 0
      %p41 = por %p39, %p40
      %p42 = scmp.ne.s32.totalorder %s31, %s34
      %p43 = scmp.eq.s32.totalorder %s26, 1
      %p44 = por %p42, %p43
      %p45 = scmp.ne.s32.totalorder %s34, %s35
      %p46 = scmp.eq.s32.totalorder %s26, 0
      %p47 = por %p45, %p46
      %p48 = scmp.ne.s32.totalorder %s34, %s35
      %p49 = scmp.eq.s32.totalorder %s27, 1
      %p50 = por %p48, %p49
      %p52 = scmp.ne.s32.totalorder %s35, %s51
      %p53 = scmp.eq.s32.totalorder %s27, 0
      %p54 = por %p52, %p53
      %s55 = ssub.s32 %s21, %s28
      %p56 = scmp.eq.s32.totalorder %s55, 0
      %s58 = sadd.s32 %s57, 1
      %s59 = scalar_select %p56, %s57, %s58
      %p62 = pneg %p56
      %p63 = scmp.eq.s32.totalorder %s21, 1
      %p64 = por %p62, %p63
      %p65 = scmp.ne.s32.totalorder %s57, %s60
      %p66 = scmp.eq.s32.totalorder %s21, 0
      %p67 = por %p65, %p66
      %p68 = scmp.ne.s32.totalorder %s57, %s60
      %p69 = scmp.eq.s32.totalorder %s26, 1
      %p70 = por %p68, %p69
      %p71 = scmp.ne.s32.totalorder %s60, %s61
      %p72 = scmp.eq.s32.totalorder %s26, 0
      %p73 = por %p71, %p72
      %p74 = scmp.ne.s32.totalorder %s60, %s61
      %p75 = scmp.eq.s32.totalorder %s27, 1
      %p76 = por %p74, %p75
      %p78 = scmp.ne.s32.totalorder %s61, %s77
      %p79 = scmp.eq.s32.totalorder %s27, 0
      %p80 = por %p78, %p79
      %s82 = sadd.s32 %s81, 1
      %p85 = scmp.eq.s32.totalorder %s21, 1
      %p86 = scmp.ne.s32.totalorder %s81, %s83
      %p87 = scmp.eq.s32.totalorder %s21, 0
      %p88 = por %p86, %p87
      %p89 = scmp.ne.s32.totalorder %s81, %s83
      %p90 = scmp.eq.s32.totalorder %s26, 1
      %p91 = por %p89, %p90
      %p92 = scmp.ne.s32.totalorder %s83, %s84
      %p93 = scmp.eq.s32.totalorder %s26, 0
      %p94 = por %p92, %p93
      %p95 = scmp.ne.s32.totalorder %s83, %s84
      %p96 = scmp.eq.s32.totalorder %s27, 1
      %p97 = por %p95, %p96
      %p99 = scmp.ne.s32.totalorder %s84, %s98
      %p100 = scmp.eq.s32.totalorder %s27, 0
      %p101 = por %p99, %p100
      %s103 = sadd.s32 %s102, 1
      %p106 = scmp.eq.s32.totalorder %s21, 1
      %p107 = scmp.ne.s32.totalorder %s102, %s104
      %p108 = scmp.eq.s32.totalorder %s21, 0
      %p109 = por %p107, %p108
      %p110 = scmp.ne.s32.totalorder %s102, %s104
      %p111 = scmp.eq.s32.totalorder %s26, 1
      %p112 = por %p110, %p111
      %p113 = scmp.ne.s32.totalorder %s104, %s105
      %p114 = scmp.eq.s32.totalorder %s26, 0
      %p115 = por %p113, %p114
      %p116 = scmp.ne.s32.totalorder %s104, %s105
      %p117 = scmp.eq.s32.totalorder %s27, 1
      %p118 = por %p116, %p117
      %p120 = scmp.ne.s32.totalorder %s105, %s119
      %p121 = scmp.eq.s32.totalorder %s27, 0
      %p122 = por %p120, %p121
      %s124 = sadd.s32 %s123, 1
      %p127 = scmp.eq.s32.totalorder %s21, 1
      %p128 = scmp.ne.s32.totalorder %s123, %s125
      %p129 = scmp.eq.s32.totalorder %s21, 0
      %p130 = por %p128, %p129
      %p131 = scmp.ne.s32.totalorder %s123, %s125
      %p132 = scmp.eq.s32.totalorder %s26, 1
      %p133 = por %p131, %p132
      %p134 = scmp.ne.s32.totalorder %s125, %s126
      %p135 = scmp.eq.s32.totalorder %s26, 0
      %p136 = por %p134, %p135
      %p137 = scmp.ne.s32.totalorder %s125, %s126
      %p138 = scmp.eq.s32.totalorder %s27, 1
      %p139 = por %p137, %p138
      %p141 = scmp.ne.s32.totalorder %s126, %s140
      %p142 = scmp.eq.s32.totalorder %s27, 0
      %p143 = por %p141, %p142
      %s145 = sadd.s32 %s144, 1
      %p148 = scmp.eq.s32.totalorder %s21, 1
      %p149 = scmp.ne.s32.totalorder %s144, %s146
      %p150 = scmp.eq.s32.totalorder %s21, 0
      %p151 = por %p149, %p150
      %p152 = scmp.ne.s32.totalorder %s144, %s146
      %p153 = scmp.eq.s32.totalorder %s26, 1
      %p154 = por %p152, %p153
      %p155 = scmp.ne.s32.totalorder %s146, %s147
      %p156 = scmp.eq.s32.totalorder %s26, 0
      %p157 = por %p155, %p156
      %p158 = scmp.ne.s32.totalorder %s146, %s147
      %p159 = scmp.eq.s32.totalorder %s27, 1
      %p160 = por %p158, %p159
      %p162 = scmp.ne.s32.totalorder %s147, %s161
      %p163 = scmp.eq.s32.totalorder %s27, 0
      %p164 = por %p162, %p163
      %s166 = sadd.s32 %s165, 1
      %p169 = scmp.eq.s32.totalorder %s21, 1
      %p170 = scmp.ne.s32.totalorder %s165, %s167
      %p171 = scmp.eq.s32.totalorder %s21, 0
      %p172 = por %p170, %p171
      %p173 = scmp.ne.s32.totalorder %s165, %s167
      %p174 = scmp.eq.s32.totalorder %s26, 1
      %p175 = por %p173, %p174
      %p176 = scmp.ne.s32.totalorder %s167, %s168
      %p177 = scmp.eq.s32.totalorder %s26, 0
      %p178 = por %p176, %p177
      %p179 = scmp.ne.s32.totalorder %s167, %s168
      %p180 = scmp.eq.s32.totalorder %s27, 1
      %p181 = por %p179, %p180
      %p183 = scmp.ne.s32.totalorder %s168, %s182
      %p184 = scmp.eq.s32.totalorder %s27, 0
      %p185 = por %p183, %p184
      %s187 = sadd.s32 %s186, 1
      %p190 = scmp.eq.s32.totalorder %s21, 1
      %p191 = scmp.ne.s32.totalorder %s186, %s188
      %p192 = scmp.eq.s32.totalorder %s21, 0
      %p193 = por %p191, %p192
      %p194 = scmp.ne.s32.totalorder %s186, %s188
      %p195 = scmp.eq.s32.totalorder %s26, 1
      %p196 = por %p194, %p195
      %p197 = scmp.ne.s32.totalorder %s188, %s189
      %p198 = scmp.eq.s32.totalorder %s26, 0
      %p199 = por %p197, %p198
      %p200 = scmp.ne.s32.totalorder %s188, %s189
      %p201 = scmp.eq.s32.totalorder %s27, 1
      %p202 = por %p200, %p201
      %p204 = scmp.ne.s32.totalorder %s189, %s203
      %p205 = scmp.eq.s32.totalorder %s27, 0
      %p206 = por %p204, %p205
      %s207 = ssub.s32 %s21, %s28
      %p208 = scmp.eq.s32.totalorder %s207, 0
      %s210 = sadd.s32 %s209, 1
      %s211 = scalar_select %p208, %s209, %s210
      %p214 = pneg %p208
      %p215 = scmp.eq.s32.totalorder %s21, 1
      %p216 = por %p214, %p215
      %p217 = scmp.ne.s32.totalorder %s209, %s212
      %p218 = scmp.eq.s32.totalorder %s21, 0
      %p219 = por %p217, %p218
      %p220 = scmp.ne.s32.totalorder %s209, %s212
      %p221 = scmp.eq.s32.totalorder %s26, 1
      %p222 = por %p220, %p221
      %p223 = scmp.ne.s32.totalorder %s212, %s213
      %p224 = scmp.eq.s32.totalorder %s26, 0
      %p225 = por %p223, %p224
      %p226 = scmp.ne.s32.totalorder %s212, %s213
      %p227 = scmp.eq.s32.totalorder %s27, 1
      %p228 = por %p226, %p227
      %p230 = scmp.ne.s32.totalorder %s213, %s229
      %p231 = scmp.eq.s32.totalorder %s27, 0
      %p232 = por %p230, %p231
      %p233 = scmp.le.s32.totalorder 1, %s21
      %p234 = scmp.lt.s32.totalorder %s21, 3
      %p235 = pnand %p233, %p234
      %p236 = pneg %p235
      // Predicated region
      $region9: #{tpu_custom_call.1} parent=5 // pred_check
        _
      $region10: #{tpu_custom_call.1} parent=5 // pred_check_branch
        %238 = sbr.rel (%p235) target = $region12
      $region11: #{tpu_custom_call.1} parent=5 // pred_region
        %s239 = ssub.s32 %s21, 1
        // Predicated region
        $region13: #{tpu_custom_call.1} parent=11 // pred_check
          %p240 = pneg %p94
        $region14: #{tpu_custom_call.1} parent=11 // pred_check_branch
          %242 = sbr.rel (%p240) target = $region16
        $region15: #{tpu_custom_call.1} parent=11 // pred_region
          _
        $region16: #{tpu_custom_call.1} parent=11 // pred_fallthru
          _
        // Predicated region
        $region17: #{tpu_custom_call.1} parent=11 // pred_check
          %p243 = pneg %p115
        $region18: #{tpu_custom_call.1} parent=11 // pred_check_branch
          %245 = sbr.rel (%p243) target = $region20
        $region19: #{tpu_custom_call.1} parent=11 // pred_region
          _
        $region20: #{tpu_custom_call.1} parent=11 // pred_fallthru
          _
        // Predicated region
        $region21: #{tpu_custom_call.1} parent=11 // pred_check
          %p246 = pneg %p136
        $region22: #{tpu_custom_call.1} parent=11 // pred_check_branch
          %248 = sbr.rel (%p246) target = $region24
        $region23: #{tpu_custom_call.1} parent=11 // pred_region
          _
        $region24: #{tpu_custom_call.1} parent=11 // pred_fallthru
          _
        // Predicated region
        $region25: #{tpu_custom_call.1} parent=11 // pred_check
          %p249 = pneg %p157
        $region26: #{tpu_custom_call.1} parent=11 // pred_check_branch
          %251 = sbr.rel (%p249) target = $region28
        $region27: #{tpu_custom_call.1} parent=11 // pred_region
          _
        $region28: #{tpu_custom_call.1} parent=11 // pred_fallthru
          _
        // Predicated region
        $region29: #{tpu_custom_call.1} parent=11 // pred_check
          %p252 = pneg %p178
        $region30: #{tpu_custom_call.1} parent=11 // pred_check_branch
          %254 = sbr.rel (%p252) target = $region32
        $region31: #{tpu_custom_call.1} parent=11 // pred_region
          _
        $region32: #{tpu_custom_call.1} parent=11 // pred_fallthru
          _
        // Predicated region
        $region33: #{tpu_custom_call.1} parent=11 // pred_check
          %p255 = pneg %p199
        $region34: #{tpu_custom_call.1} parent=11 // pred_check_branch
          %257 = sbr.rel (%p255) target = $region36
        $region35: #{tpu_custom_call.1} parent=11 // pred_region
          _
        $region36: #{tpu_custom_call.1} parent=11 // pred_fallthru
          _
      $region12: #{tpu_custom_call.1} parent=5 // pred_fallthru
        _
      %p258 = scmp.lt.s32.totalorder %s21, 2
      // Predicated region
      $region37: #{tpu_custom_call.1} parent=5 // pred_check
        %p259 = pneg %p258
      $region38: #{tpu_custom_call.1} parent=5 // pred_check_branch
        %261 = sbr.rel (%p259) target = $region40
      $region39: #{tpu_custom_call.1} parent=5 // pred_region
        // Predicated region
        $region41: #{tpu_custom_call.1} parent=39 // pred_check
          %p262 = pneg %p41
        $region42: #{tpu_custom_call.1} parent=39 // pred_check_branch
          %264 = sbr.rel (%p262) target = $region44
        $region43: #{tpu_custom_call.1} parent=39 // pred_region
          %s265 = sand.u32 %s31, 1
          %s266 = sand.u32 %s31, 1
          %s267 = smul.addr %s266, 160
          %s268 = scalar_lea.vmem [#allocation3], %s267
          %s269 = smul.u32 4, %s21
          %s270 = smul.addr %s269, 8
          %s271 = scalar_lea.vmem %s0, %s270
          // Predicated region
          $region45: #{tpu_custom_call.1} parent=43 // pred_check
            _
          $region46: #{tpu_custom_call.1} parent=43 // pred_check_branch
            %273 = sbr.rel (0) target = $region48
          $region47: #{tpu_custom_call.1} parent=43 // pred_region
            // Predicated region
            $region49: #{tpu_custom_call.1} parent=47 // pred_check
              _
            $region50: #{tpu_custom_call.1} parent=47 // pred_check_branch
              %275 = sbr.rel (0) target = $region52
            $region51: #{tpu_custom_call.1} parent=47 // pred_region
              loop: start=0, step=1, limit=1
              $region53: #{tpu_custom_call.1} parent=51 // loop_pre_header
                _
              $region54: #{tpu_custom_call.1} parent=51 // loop_header
                %s277 = sphi 0, %s281
                %p278 = scmp.ge.s32.totalorder %s277, 1
                %s282 = sphi %s271, %s271
                %s283 = sphi %s268, %s268
              $region55: #{tpu_custom_call.1} parent=51 // loop_header_branch
                %280 = sbr.rel (%p278) target = $region59
              $region56: #{tpu_custom_call.1} parent=51 // loop_body
                %v284 = vld [vmem:[%s282] sm:$0xff]
                %285 = vst [vmem:[%s283] sm:$0xff] %v284
                %v286 = vld [vmem:[%s282 + $0x8] sm:$0xff]
                %287 = vst [vmem:[%s283 + $0x8] sm:$0xff] %v286
                %v288 = vld [vmem:[%s282 + $0x10] sm:$0xff]
                %289 = vst [vmem:[%s283 + $0x10] sm:$0xff] %v288
                %v290 = vld [vmem:[%s282 + $0x18] sm:$0xff]
                %291 = vst [vmem:[%s283 + $0x18] sm:$0xff] %v290
                %v292 = vld [vmem:[%s282 + $0x40] sm:$0xff]
                %293 = vst [vmem:[%s283 + $0x20] sm:$0xff] %v292
                %v294 = vld [vmem:[%s282 + $0x48] sm:$0xff]
                %295 = vst [vmem:[%s283 + $0x28] sm:$0xff] %v294
                %v296 = vld [vmem:[%s282 + $0x50] sm:$0xff]
                %297 = vst [vmem:[%s283 + $0x30] sm:$0xff] %v296
                %v298 = vld [vmem:[%s282 + $0x58] sm:$0xff]
                %299 = vst [vmem:[%s283 + $0x38] sm:$0xff] %v298
                %v300 = vld [vmem:[%s282 + $0x80] sm:$0xff]
                %301 = vst [vmem:[%s283 + $0x40] sm:$0xff] %v300
                %v302 = vld [vmem:[%s282 + $0x88] sm:$0xff]
                %303 = vst [vmem:[%s283 + $0x48] sm:$0xff] %v302
                %v304 = vld [vmem:[%s282 + $0x90] sm:$0xff]
                %305 = vst [vmem:[%s283 + $0x50] sm:$0xff] %v304
                %v306 = vld [vmem:[%s282 + $0x98] sm:$0xff]
                %307 = vst [vmem:[%s283 + $0x58] sm:$0xff] %v306
                %v308 = vld [vmem:[%s282 + $0xc0] sm:$0xff]
                %309 = vst [vmem:[%s283 + $0x60] sm:$0xff] %v308
                %v310 = vld [vmem:[%s282 + $0xc8] sm:$0xff]
                %311 = vst [vmem:[%s283 + $0x68] sm:$0xff] %v310
                %v312 = vld [vmem:[%s282 + $0xd0] sm:$0xff]
                %313 = vst [vmem:[%s283 + $0x70] sm:$0xff] %v312
                %v314 = vld [vmem:[%s282 + $0xd8] sm:$0xff]
                %315 = vst [vmem:[%s283 + $0x78] sm:$0xff] %v314
                %v316 = vld [vmem:[%s282 + $0x100] sm:$0xff]
                %317 = vst [vmem:[%s283 + $0x80] sm:$0xff] %v316
                %v318 = vld [vmem:[%s282 + $0x108] sm:$0xff]
                %319 = vst [vmem:[%s283 + $0x88] sm:$0xff] %v318
                %v320 = vld [vmem:[%s282 + $0x110] sm:$0xff]
                %321 = vst [vmem:[%s283 + $0x90] sm:$0xff] %v320
                %v322 = vld [vmem:[%s282 + $0x118] sm:$0xff]
                %323 = vst [vmem:[%s283 + $0x98] sm:$0xff] %v322
              $region57: #{tpu_custom_call.1} parent=51 // loop_footer
                %s281 = sadd.s32 1, %s277
              $region58: #{tpu_custom_call.1} parent=51 // loop_footer_branch
                %276 = sbr.rel target = $region54
              $region59: #{tpu_custom_call.1} parent=51 // loop_exit
                _
            $region52: #{tpu_custom_call.1} parent=47 // pred_fallthru
              _
            // Predicated region
            $region60: #{tpu_custom_call.1} parent=47 // pred_check
              _
            $region61: #{tpu_custom_call.1} parent=47 // pred_check_branch
              %325 = sbr.rel target = $region63
            $region62: #{tpu_custom_call.1} parent=47 // pred_region
              _
            $region63: #{tpu_custom_call.1} parent=47 // pred_fallthru
              _
          $region48: #{tpu_custom_call.1} parent=43 // pred_fallthru
            _
          %326 = vnop
        $region44: #{tpu_custom_call.1} parent=39 // pred_fallthru
          _
        // Predicated region
        $region64: #{tpu_custom_call.1} parent=39 // pred_check
          %p327 = pneg %p67
        $region65: #{tpu_custom_call.1} parent=39 // pred_check_branch
          %329 = sbr.rel (%p327) target = $region67
        $region66: #{tpu_custom_call.1} parent=39 // pred_region
          %s330 = sand.u32 %s57, 1
          %s331 = scalar_lea.sflag [#allocation5], %s330
          %s332 = sand.u32 %s57, 1
          %s333 = smul.addr %s332, 96
          %s334 = scalar_lea.vmem [#allocation4], %s333
          %s335 = smul.u32 4, %s21
          %s337 = ssub.s32 1536, 1536
          %338 = vsyncadd %s331, %s337
          %s339 = smul.addr %s335, 128
          %s340 = scalar_lea.hbm %s1, %s339
          %s341 = sshll.u32 %s334, 4
          %s342 = int_to_ptr.vmem [resolvable:$true] %s341
          %347 = dma.hbm_to_vmem [thread:$0]  %s340, 1536, %s342, %s331, 1024, 512, 32
        $region67: #{tpu_custom_call.1} parent=39 // pred_fallthru
          _
      $region40: #{tpu_custom_call.1} parent=5 // pred_fallthru
        _
      %p348 = scmp.le.s32.totalorder 1, %s21
      %p349 = scmp.lt.s32.totalorder %s21, 3
      %p350 = pnand %p348, %p349
      %p351 = pneg %p350
      // Predicated region
      $region68: #{tpu_custom_call.1} parent=5 // pred_check
        _
      $region69: #{tpu_custom_call.1} parent=5 // pred_check_branch
        %353 = sbr.rel (%p350) target = $region71
      $region70: #{tpu_custom_call.1} parent=5 // pred_region
        %s354 = ssub.s32 %s21, 1
        %s355 = sand.u32 %s34, 1
        %s356 = sand.u32 %s34, 1
        %s357 = smul.addr %s356, 160
        %s358 = scalar_lea.vmem [#allocation3], %s357
        // Predicated region
        $region72: #{tpu_custom_call.1} parent=70 // pred_check
          %p359 = pneg %p47
        $region73: #{tpu_custom_call.1} parent=70 // pred_check_branch
          %361 = sbr.rel (%p359) target = $region75
        $region74: #{tpu_custom_call.1} parent=70 // pred_region
          _
        $region75: #{tpu_custom_call.1} parent=70 // pred_fallthru
          _
        %s362 = sand.u32 %s60, 1
        %s363 = scalar_lea.sflag [#allocation5], %s362
        %s364 = sand.u32 %s60, 1
        %s365 = smul.addr %s364, 96
        %s366 = scalar_lea.vmem [#allocation4], %s365
        // Predicated region
        $region76: #{tpu_custom_call.1} parent=70 // pred_check
          %p367 = pneg %p73
        $region77: #{tpu_custom_call.1} parent=70 // pred_check_branch
          %369 = sbr.rel (%p367) target = $region79
        $region78: #{tpu_custom_call.1} parent=70 // pred_region
          %370 = dma.done %s363, 1536
        $region79: #{tpu_custom_call.1} parent=70 // pred_fallthru
          _
        %s371 = sand.u32 %s34, 1
        %s372 = sand.u32 %s34, 1
        %s373 = smul.addr %s372, 160
        %s374 = scalar_lea.vmem [#allocation3], %s373
        %p375 = pneg %p47
        %p376 = pneg %p44
        %s377 = sand.u32 %s60, 1
        %s378 = scalar_lea.sflag [#allocation5], %s377
        %s379 = sand.u32 %s60, 1
        %s380 = smul.addr %s379, 96
        %s381 = scalar_lea.vmem [#allocation4], %s380
        %p382 = pneg %p73
        %p383 = pneg %p70
        %p384 = pneg %p94
        %p385 = pneg %p91
        %p386 = pneg %p115
        %p387 = pneg %p112
        %p388 = pneg %p136
        %p389 = pneg %p133
        %p390 = pneg %p157
        %p391 = pneg %p154
        %p392 = pneg %p178
        %p393 = pneg %p175
        %p394 = pneg %p199
        %p395 = pneg %p196
        %p396 = pneg %p225
        %p397 = pneg %p222
        %s398 = sand.u32 %s212, 1
        %s399 = scalar_lea.sflag [#allocation6], %s398
        %s400 = sand.u32 %s212, 1
        %s401 = smul.addr %s400, 96
        %s402 = scalar_lea.vmem [#allocation7], %s401
        %s403 = smul.u32 4, %s26
        %s404 = smul.u32 4, %s26
        %s405 = smul.u32 4, %s26
        %v406 = vld [vmem:[%s358] sm:$0xff]
        %v407 = vld [vmem:[%s358 + $0x8] sm:$0xff]
        %v408 = vld [vmem:[%s358 + $0x10] sm:$0xff]
        %v409 = vld [vmem:[%s358 + $0x18] sm:$0xff]
        %v410 = vld [vmem:[%s358 + $0x20] sm:$0xff]
        %v411 = vld [vmem:[%s358 + $0x28] sm:$0xff]
        %v412 = vld [vmem:[%s358 + $0x30] sm:$0xff]
        %v413 = vld [vmem:[%s358 + $0x38] sm:$0xff]
        %v414 = vld [vmem:[%s358 + $0x40] sm:$0xff]
        %v415 = vld [vmem:[%s358 + $0x48] sm:$0xff]
        %v416 = vld [vmem:[%s358 + $0x50] sm:$0xff]
        %v417 = vld [vmem:[%s358 + $0x58] sm:$0xff]
        %v418 = vld [vmem:[%s358 + $0x60] sm:$0xff]
        %v419 = vld [vmem:[%s358 + $0x68] sm:$0xff]
        %v420 = vld [vmem:[%s358 + $0x70] sm:$0xff]
        %v421 = vld [vmem:[%s358 + $0x78] sm:$0xff]
        %v422 = vld [vmem:[%s358 + $0x80] sm:$0x7]
        %v423 = vld [vmem:[%s358 + $0x88] sm:$0x7]
        %v424 = vld [vmem:[%s358 + $0x90] sm:$0x7]
        %v425 = vld [vmem:[%s358 + $0x98] sm:$0x7]
        %v426 = vld [vmem:[%s366] sm:$0xff]
        %v427 = vld [vmem:[%s366 + $0x8] sm:$0xff]
        %v428 = vld [vmem:[%s366 + $0x10] sm:$0xff]
        %v429 = vld [vmem:[%s366 + $0x18] sm:$0xff]
        %v430 = vld [vmem:[%s366 + $0x20] sm:$0xff]
        %v431 = vld [vmem:[%s366 + $0x28] sm:$0xff]
        %v432 = vld [vmem:[%s366 + $0x30] sm:$0xff]
        %v433 = vld [vmem:[%s366 + $0x38] sm:$0xff]
        %v434 = vld [vmem:[%s366 + $0x40] sm:$0x7]
        %v435 = vld [vmem:[%s366 + $0x48] sm:$0x7]
        %v436 = vld [vmem:[%s366 + $0x50] sm:$0x7]
        %v437 = vld [vmem:[%s366 + $0x58] sm:$0x7]
        %v438 = vld [vmem:[%s2] sm:$0xff]
        %v439 = vld [vmem:[%s2 + $0x8] sm:$0xff]
        %v440 = vld [vmem:[%s2 + $0x10] sm:$0xff]
        %v441 = vld [vmem:[%s2 + $0x18] sm:$0xff]
        %v442 = vld [vmem:[%s2 + $0x20] sm:$0xff]
        %v443 = vld [vmem:[%s2 + $0x28] sm:$0xff]
        %v444 = vld [vmem:[%s2 + $0x30] sm:$0xff]
        %v445 = vld [vmem:[%s2 + $0x38] sm:$0xff]
        %v446 = vld [vmem:[%s2 + $0x40] sm:$0xff]
        %v447 = vld [vmem:[%s2 + $0x48] sm:$0xff]
        %v448 = vld [vmem:[%s2 + $0x50] sm:$0xff]
        %v449 = vld [vmem:[%s2 + $0x58] sm:$0xff]
        %v450 = vld [vmem:[%s2 + $0x60] sm:$0xff]
        %v451 = vld [vmem:[%s2 + $0x68] sm:$0xff]
        %v452 = vld [vmem:[%s2 + $0x70] sm:$0x7]
        %v453 = vld [vmem:[%s3] sm:$0xff]
        %v454 = vld [vmem:[%s3 + $0x8] sm:$0xff]
        %v455 = vld [vmem:[%s3 + $0x10] sm:$0xff]
        %v456 = vld [vmem:[%s3 + $0x18] sm:$0xff]
        %v457 = vld [vmem:[%s3 + $0x20] sm:$0xff]
        %v458 = vld [vmem:[%s3 + $0x28] sm:$0xff]
        %v459 = vld [vmem:[%s3 + $0x30] sm:$0xff]
        %v460 = vld [vmem:[%s3 + $0x38] sm:$0xff]
        %v461 = vld [vmem:[%s3 + $0x40] sm:$0xff]
        %v462 = vld [vmem:[%s3 + $0x48] sm:$0xff]
        %v463 = vld [vmem:[%s3 + $0x50] sm:$0xff]
        %v464 = vld [vmem:[%s3 + $0x58] sm:$0xff]
        %v465 = vld [vmem:[%s3 + $0x60] sm:$0xff]
        %v466 = vld [vmem:[%s3 + $0x68] sm:$0xff]
        %v467 = vld [vmem:[%s3 + $0x70] sm:$0x7]
        %v468 = vld [vmem:[%s4] sm:$0xff]
        %v469 = vld [vmem:[%s4 + $0x8] sm:$0xff]
        %v470 = vld [vmem:[%s4 + $0x10] sm:$0x7]
        %s471 = scalar_lea.vmem %s4, 24
        %v472 = vld [vmem:[%s471] sm:$0xff]
        %v473 = vld [vmem:[%s471 + $0x8] sm:$0xff]
        %v474 = vld [vmem:[%s471 + $0x10] sm:$0x7]
        %v475 = vld [vmem:[%s5] sm:$0xff]
        %v476 = vld [vmem:[%s5 + $0x8] sm:$0xff]
        %v477 = vld [vmem:[%s5 + $0x10] sm:$0xff]
        %v478 = vld [vmem:[%s5 + $0x18] sm:$0xff]
        %v479 = vld [vmem:[%s6] sm:$0xff]
        %v480 = vld [vmem:[%s6 + $0x8] sm:$0xff]
        %v481 = vld [vmem:[%s6 + $0x10] sm:$0x7]
        %s482 = sld [smem:[#allocation2]]
        %484 = vset.pattern.permute.xlu0 0
        %485 = vperm.xlu0 %484, %v453
        %v486 = vpop.permute.xlu0 %485
        %489 = vset.pattern.permute.xlu0 0
        %490 = vperm.xlu0 %489, %v454
        %v491 = vpop.permute.xlu0 %490
        %494 = vset.pattern.permute.xlu0 0
        %495 = vperm.xlu0 %494, %v455
        %v496 = vpop.permute.xlu0 %495
        %499 = vset.pattern.permute.xlu0 0
        %500 = vperm.xlu0 %499, %v456
        %v501 = vpop.permute.xlu0 %500
        %504 = vset.pattern.permute.xlu0 0
        %505 = vperm.xlu0 %504, %v457
        %v506 = vpop.permute.xlu0 %505
        %509 = vset.pattern.permute.xlu0 0
        %510 = vperm.xlu0 %509, %v458
        %v511 = vpop.permute.xlu0 %510
        %514 = vset.pattern.permute.xlu0 0
        %515 = vperm.xlu0 %514, %v459
        %v516 = vpop.permute.xlu0 %515
        %519 = vset.pattern.permute.xlu0 0
        %520 = vperm.xlu0 %519, %v460
        %v521 = vpop.permute.xlu0 %520
        %524 = vset.pattern.permute.xlu0 0
        %525 = vperm.xlu0 %524, %v461
        %v526 = vpop.permute.xlu0 %525
        %529 = vset.pattern.permute.xlu0 0
        %530 = vperm.xlu0 %529, %v462
        %v531 = vpop.permute.xlu0 %530
        %534 = vset.pattern.permute.xlu0 0
        %535 = vperm.xlu0 %534, %v463
        %v536 = vpop.permute.xlu0 %535
        %539 = vset.pattern.permute.xlu0 0
        %540 = vperm.xlu0 %539, %v464
        %v541 = vpop.permute.xlu0 %540
        %544 = vset.pattern.permute.xlu0 0
        %545 = vperm.xlu0 %544, %v465
        %v546 = vpop.permute.xlu0 %545
        %549 = vset.pattern.permute.xlu0 0
        %550 = vperm.xlu0 %549, %v466
        %v551 = vpop.permute.xlu0 %550
        %554 = vset.pattern.permute.xlu0 0
        %555 = vperm.xlu0 %554, %v467
        %v556 = vpop.permute.xlu0 %555
        %vm558 = vcmask 285696
        %v560 = vsel %vm558, %v438, 0
        %v563 = vsel %vm558, %v439, 0
        %v566 = vsel %vm558, %v440, 0
        %v569 = vsel %vm558, %v441, 0
        %v572 = vsel %vm558, %v442, 0
        %v575 = vsel %vm558, %v443, 0
        %v578 = vsel %vm558, %v444, 0
        %v581 = vsel %vm558, %v445, 0
        %v584 = vsel %vm558, %v446, 0
        %v587 = vsel %vm558, %v447, 0
        %v590 = vsel %vm558, %v448, 0
        %v593 = vsel %vm558, %v449, 0
        %v596 = vsel %vm558, %v450, 0
        %v599 = vsel %vm558, %v451, 0
        %v602 = vsel %vm558, %v452, 0
        %vm604 = vcmask 1042432
        %v606 = vsel %vm604, %v422, 0
        %v609 = vsel %vm604, %v423, 0
        %v612 = vsel %vm604, %v424, 0
        %v615 = vsel %vm604, %v425, 0
        %617 = vmatprep.subr.mxu0 %v407
        %618 = vmatpush1.msra.mxu0 %v406
        %619 = vmatprep.subr.mxu0 %v411
        %620 = vmatpush1.msra.mxu0 %v410
        %621 = vmatprep.subr.mxu0 %v415
        %622 = vmatpush1.msra.mxu0 %v414
        %623 = vmatprep.subr.mxu0 %v419
        %624 = vmatpush1.msra.mxu0 %v418
        %625 = vmatprep.subr.mxu0 %v609
        %626 = vmatpush1.msra.mxu0 %v606
        %627 = vmatprep.subr.mxu0 0.0
        %628 = vmatpush1.msra.mxu0 0.0
        %629 = vmatprep.subr.mxu0 0.0
        %630 = vmatpush1.msra.mxu0 0.0
        %631 = vmatprep.subr.mxu0 0.0
        %632 = vmatpush1.msra.mxu0 0.0
        %633 = vmatprep.subr.mxu0 0.0
        %634 = vmatpush1.msra.mxu0 0.0
        %635 = vmatprep.subr.mxu0 0.0
        %636 = vmatpush1.msra.mxu0 0.0
        %637 = vmatprep.subr.mxu0 0.0
        %638 = vmatpush1.msra.mxu0 0.0
        %639 = vmatprep.subr.mxu0 0.0
        %640 = vmatpush1.msra.mxu0 0.0
        %641 = vmatprep.subr.mxu0 0.0
        %642 = vmatpush1.msra.mxu0 0.0
        %643 = vmatprep.subr.mxu0 0.0
        %644 = vmatpush1.msra.mxu0 0.0
        %645 = vmatprep.subr.mxu0 0.0
        %646 = vmatpush1.msra.mxu0 0.0
        %647 = vmatprep.subr.mxu0 0.0
        %648 = vmatpush1.msra.mxu0 0.0
        %649 = vmatprep.subr.mxu0 0.0
        %650 = vmatpush1.msra.mxu0 0.0
        %651 = vmatprep.subr.mxu0 0.0
        %652 = vmatpush1.msra.mxu0 0.0
        %653 = vmatprep.subr.mxu0 0.0
        %654 = vmatpush1.msra.mxu0 0.0
        %655 = vmatprep.subr.mxu0 0.0
        %656 = vmatpush1.msra.mxu0 0.0
        %657 = vmatprep.subr.mxu0 0.0
        %658 = vmatpush1.msra.mxu0 0.0
        %659 = vmatprep.subr.mxu0 0.0
        %660 = vmatpush1.msra.mxu0 0.0
        %661 = vmatprep.subr.mxu0 0.0
        %662 = vmatpush1.msra.mxu0 0.0
        %663 = vmatprep.subr.mxu0 0.0
        %664 = vmatpush1.msra.mxu0 0.0
        %665 = vmatprep.subr.mxu0 0.0
        %666 = vmatpush1.msra.mxu0 0.0
        %667 = vmatprep.subr.mxu0 0.0
        %668 = vmatpush1.msra.mxu0 0.0
        %669 = vmatprep.subr.mxu0 0.0
        %670 = vmatpush1.msra.mxu0 0.0
        %671 = vmatprep.subr.mxu0 0.0
        %672 = vmatpush1.msra.mxu0 0.0
        %673 = vmatprep.subr.mxu0 0.0
        %674 = vmatpush1.msra.mxu0 0.0
        %675 = vmatprep.subr.mxu0 0.0
        %676 = vmatpush1.msra.mxu0 0.0
        %677 = vmatprep.subr.mxu0 0.0
        %678 = vmatpush1.msra.mxu0 0.0
        %679 = vmatprep.subr.mxu0 0.0
        %680 = vmatpush1.msra.mxu0 0.0
        %681 = vmatprep.mubr.f32.mxu0 0.0
        %682 = vmatmul.mubr.f32.gmra.mrb[0].mxu0 %v560
        %v683 = vpop.f32.mrb[0].mxu0
        %v684 = vadd.f32 %v486, %v683
        %v685 = vpop.f32.mrb[0].mxu0
        %v686 = vadd.f32 %v486, %v685
        %687 = vmatprep.mubr.f32.mxu0 0.0
        %688 = vmatmul.mubr.f32.gmra.mrb[0].mxu0 %v563
        %v689 = vpop.f32.mrb[0].mxu0
        %v690 = vadd.f32 %v491, %v689
        %v691 = vpop.f32.mrb[0].mxu0
        %v692 = vadd.f32 %v491, %v691
        %693 = vmatprep.mubr.f32.mxu0 0.0
        %694 = vmatmul.mubr.f32.gmra.mrb[0].mxu0 %v566
        %v695 = vpop.f32.mrb[0].mxu0
        %v696 = vadd.f32 %v496, %v695
        %v697 = vpop.f32.mrb[0].mxu0
        %v698 = vadd.f32 %v496, %v697
        %699 = vmatprep.mubr.f32.mxu0 0.0
        %700 = vmatmul.mubr.f32.gmra.mrb[0].mxu0 %v569
        %v701 = vpop.f32.mrb[0].mxu0
        %v702 = vadd.f32 %v501, %v701
        %v703 = vpop.f32.mrb[0].mxu0
        %v704 = vadd.f32 %v501, %v703
        %705 = vmatprep.mubr.f32.mxu0 0.0
        %706 = vmatmul.mubr.f32.gmra.mrb[0].mxu0 %v572
        %v707 = vpop.f32.mrb[0].mxu0
        %v708 = vadd.f32 %v506, %v707
        %v709 = vpop.f32.mrb[0].mxu0
        %v710 = vadd.f32 %v506, %v709
        %711 = vmatprep.mubr.f32.mxu0 0.0
        %712 = vmatmul.mubr.f32.gmra.mrb[0].mxu0 %v575
        %v713 = vpop.f32.mrb[0].mxu0
        %v714 = vadd.f32 %v511, %v713
        %v715 = vpop.f32.mrb[0].mxu0
        %v716 = vadd.f32 %v511, %v715
        %717 = vmatprep.mubr.f32.mxu0 0.0
        %718 = vmatmul.mubr.f32.gmra.mrb[0].mxu0 %v578
        %v719 = vpop.f32.mrb[0].mxu0
        %v720 = vadd.f32 %v516, %v719
        %v721 = vpop.f32.mrb[0].mxu0
        %v722 = vadd.f32 %v516, %v721
        %723 = vmatprep.mubr.f32.mxu0 0.0
        %724 = vmatmul.mubr.f32.gmra.mrb[0].mxu0 %v581
        %v725 = vpop.f32.mrb[0].mxu0
        %v726 = vadd.f32 %v521, %v725
        %v727 = vpop.f32.mrb[0].mxu0
        %v728 = vadd.f32 %v521, %v727
        %729 = vmatprep.mubr.f32.mxu0 0.0
        %730 = vmatmul.mubr.f32.gmra.mrb[0].mxu0 %v584
        %v731 = vpop.f32.mrb[0].mxu0
        %v732 = vadd.f32 %v526, %v731
        %v733 = vpop.f32.mrb[0].mxu0
        %v734 = vadd.f32 %v526, %v733
        %735 = vmatprep.mubr.f32.mxu0 0.0
        %736 = vmatmul.mubr.f32.gmra.mrb[0].mxu0 %v587
        %v737 = vpop.f32.mrb[0].mxu0
        %v738 = vadd.f32 %v531, %v737
        %v739 = vpop.f32.mrb[0].mxu0
        %v740 = vadd.f32 %v531, %v739
        %741 = vmatprep.mubr.f32.mxu0 0.0
        %742 = vmatmul.mubr.f32.gmra.mrb[0].mxu0 %v590
        %v743 = vpop.f32.mrb[0].mxu0
        %v744 = vadd.f32 %v536, %v743
        %v745 = vpop.f32.mrb[0].mxu0
        %v746 = vadd.f32 %v536, %v745
        %747 = vmatprep.mubr.f32.mxu0 0.0
        %748 = vmatmul.mubr.f32.gmra.mrb[0].mxu0 %v593
        %v749 = vpop.f32.mrb[0].mxu0
        %v750 = vadd.f32 %v541, %v749
        %v751 = vpop.f32.mrb[0].mxu0
        %v752 = vadd.f32 %v541, %v751
        %753 = vmatprep.mubr.f32.mxu0 0.0
        %754 = vmatmul.mubr.f32.gmra.mrb[0].mxu0 %v596
        %v755 = vpop.f32.mrb[0].mxu0
        %v756 = vadd.f32 %v546, %v755
        %v757 = vpop.f32.mrb[0].mxu0
        %v758 = vadd.f32 %v546, %v757
        %759 = vmatprep.mubr.f32.mxu0 0.0
        %760 = vmatmul.mubr.f32.gmra.mrb[0].mxu0 %v599
        %v761 = vpop.f32.mrb[0].mxu0
        %v762 = vadd.f32 %v551, %v761
        %v763 = vpop.f32.mrb[0].mxu0
        %v764 = vadd.f32 %v551, %v763
        %765 = vmatprep.mubr.f32.mxu0 0.0
        %766 = vmatmul.mubr.f32.gmra.mrb[0].mxu0 %v602
        %v767 = vpop.f32.mrb[0].mxu0
        %v768 = vadd.f32 %v556, %v767
        %v769 = vpop.f32.mrb[0].mxu0
        %v770 = vadd.f32 %v556, %v769
        %771 = vdwg.mxu0
        %772 = vmatprep.subr.mxu0 %v409
        %773 = vmatpush1.msra.mxu0 %v408
        %774 = vmatprep.subr.mxu0 %v413
        %775 = vmatpush1.msra.mxu0 %v412
        %776 = vmatprep.subr.mxu0 %v417
        %777 = vmatpush1.msra.mxu0 %v416
        %778 = vmatprep.subr.mxu0 %v421
        %779 = vmatpush1.msra.mxu0 %v420
        %780 = vmatprep.subr.mxu0 %v615
        %781 = vmatpush1.msra.mxu0 %v612
        %782 = vmatprep.subr.mxu0 0.0
        %783 = vmatpush1.msra.mxu0 0.0
        %784 = vmatprep.subr.mxu0 0.0
        %785 = vmatpush1.msra.mxu0 0.0
        %786 = vmatprep.subr.mxu0 0.0
        %787 = vmatpush1.msra.mxu0 0.0
        %788 = vmatprep.subr.mxu0 0.0
        %789 = vmatpush1.msra.mxu0 0.0
        %790 = vmatprep.subr.mxu0 0.0
        %791 = vmatpush1.msra.mxu0 0.0
        %792 = vmatprep.subr.mxu0 0.0
        %793 = vmatpush1.msra.mxu0 0.0
        %794 = vmatprep.subr.mxu0 0.0
        %795 = vmatpush1.msra.mxu0 0.0
        %796 = vmatprep.subr.mxu0 0.0
        %797 = vmatpush1.msra.mxu0 0.0
        %798 = vmatprep.subr.mxu0 0.0
        %799 = vmatpush1.msra.mxu0 0.0
        %800 = vmatprep.subr.mxu0 0.0
        %801 = vmatpush1.msra.mxu0 0.0
        %802 = vmatprep.subr.mxu0 0.0
        %803 = vmatpush1.msra.mxu0 0.0
        %804 = vmatprep.subr.mxu0 0.0
        %805 = vmatpush1.msra.mxu0 0.0
        %806 = vmatprep.subr.mxu0 0.0
        %807 = vmatpush1.msra.mxu0 0.0
        %808 = vmatprep.subr.mxu0 0.0
        %809 = vmatpush1.msra.mxu0 0.0
        %810 = vmatprep.subr.mxu0 0.0
        %811 = vmatpush1.msra.mxu0 0.0
        %812 = vmatprep.subr.mxu0 0.0
        %813 = vmatpush1.msra.mxu0 0.0
        %814 = vmatprep.subr.mxu0 0.0
        %815 = vmatpush1.msra.mxu0 0.0
        %816 = vmatprep.subr.mxu0 0.0
        %817 = vmatpush1.msra.mxu0 0.0
        %818 = vmatprep.subr.mxu0 0.0
        %819 = vmatpush1.msra.mxu0 0.0
        %820 = vmatprep.subr.mxu0 0.0
        %821 = vmatpush1.msra.mxu0 0.0
        %822 = vmatprep.subr.mxu0 0.0
        %823 = vmatpush1.msra.mxu0 0.0
        %824 = vmatprep.subr.mxu0 0.0
        %825 = vmatpush1.msra.mxu0 0.0
        %826 = vmatprep.subr.mxu0 0.0
        %827 = vmatpush1.msra.mxu0 0.0
        %828 = vmatprep.subr.mxu0 0.0
        %829 = vmatpush1.msra.mxu0 0.0
        %830 = vmatprep.subr.mxu0 0.0
        %831 = vmatpush1.msra.mxu0 0.0
        %832 = vmatprep.subr.mxu0 0.0
        %833 = vmatpush1.msra.mxu0 0.0
        %834 = vmatprep.subr.mxu0 0.0
        %835 = vmatpush1.msra.mxu0 0.0
        %836 = vmatprep.mubr.f32.mxu0 0.0
        %837 = vmatmul.mubr.f32.gmra.mrb[0].mxu0 %v560
        %v838 = vpop.f32.mrb[0].mxu0
        %v839 = vadd.f32 %v486, %v838
        %v840 = vpop.f32.mrb[0].mxu0
        %v841 = vadd.f32 %v486, %v840
        %842 = vmatprep.mubr.f32.mxu0 0.0
        %843 = vmatmul.mubr.f32.gmra.mrb[0].mxu0 %v563
        %v844 = vpop.f32.mrb[0].mxu0
        %v845 = vadd.f32 %v491, %v844
        %v846 = vpop.f32.mrb[0].mxu0
        %v847 = vadd.f32 %v491, %v846
        %848 = vmatprep.mubr.f32.mxu0 0.0
        %849 = vmatmul.mubr.f32.gmra.mrb[0].mxu0 %v566
        %v850 = vpop.f32.mrb[0].mxu0
        %v851 = vadd.f32 %v496, %v850
        %v852 = vpop.f32.mrb[0].mxu0
        %v853 = vadd.f32 %v496, %v852
        %854 = vmatprep.mubr.f32.mxu0 0.0
        %855 = vmatmul.mubr.f32.gmra.mrb[0].mxu0 %v569
        %v856 = vpop.f32.mrb[0].mxu0
        %v857 = vadd.f32 %v501, %v856
        %v858 = vpop.f32.mrb[0].mxu0
        %v859 = vadd.f32 %v501, %v858
        %860 = vmatprep.mubr.f32.mxu0 0.0
        %861 = vmatmul.mubr.f32.gmra.mrb[0].mxu0 %v572
        %v862 = vpop.f32.mrb[0].mxu0
        %v863 = vadd.f32 %v506, %v862
        %v864 = vpop.f32.mrb[0].mxu0
        %v865 = vadd.f32 %v506, %v864
        %866 = vmatprep.mubr.f32.mxu0 0.0
        %867 = vmatmul.mubr.f32.gmra.mrb[0].mxu0 %v575
        %v868 = vpop.f32.mrb[0].mxu0
        %v869 = vadd.f32 %v511, %v868
        %v870 = vpop.f32.mrb[0].mxu0
        %v871 = vadd.f32 %v511, %v870
        %872 = vmatprep.mubr.f32.mxu0 0.0
        %873 = vmatmul.mubr.f32.gmra.mrb[0].mxu0 %v578
        %v874 = vpop.f32.mrb[0].mxu0
        %v875 = vadd.f32 %v516, %v874
        %v876 = vpop.f32.mrb[0].mxu0
        %v877 = vadd.f32 %v516, %v876
        %878 = vmatprep.mubr.f32.mxu0 0.0
        %879 = vmatmul.mubr.f32.gmra.mrb[0].mxu0 %v581
        %v880 = vpop.f32.mrb[0].mxu0
        %v881 = vadd.f32 %v521, %v880
        %v882 = vpop.f32.mrb[0].mxu0
        %v883 = vadd.f32 %v521, %v882
        %884 = vmatprep.mubr.f32.mxu0 0.0
        %885 = vmatmul.mubr.f32.gmra.mrb[0].mxu0 %v584
        %v886 = vpop.f32.mrb[0].mxu0
        %v887 = vadd.f32 %v526, %v886
        %v888 = vpop.f32.mrb[0].mxu0
        %v889 = vadd.f32 %v526, %v888
        %890 = vmatprep.mubr.f32.mxu0 0.0
        %891 = vmatmul.mubr.f32.gmra.mrb[0].mxu0 %v587
        %v892 = vpop.f32.mrb[0].mxu0
        %v893 = vadd.f32 %v531, %v892
        %v894 = vpop.f32.mrb[0].mxu0
        %v895 = vadd.f32 %v531, %v894
        %896 = vmatprep.mubr.f32.mxu0 0.0
        %897 = vmatmul.mubr.f32.gmra.mrb[0].mxu0 %v590
        %v898 = vpop.f32.mrb[0].mxu0
        %v899 = vadd.f32 %v536, %v898
        %v900 = vpop.f32.mrb[0].mxu0
        %v901 = vadd.f32 %v536, %v900
        %902 = vmatprep.mubr.f32.mxu0 0.0
        %903 = vmatmul.mubr.f32.gmra.mrb[0].mxu0 %v593
        %v904 = vpop.f32.mrb[0].mxu0
        %v905 = vadd.f32 %v541, %v904
        %v906 = vpop.f32.mrb[0].mxu0
        %v907 = vadd.f32 %v541, %v906
        %908 = vmatprep.mubr.f32.mxu0 0.0
        %909 = vmatmul.mubr.f32.gmra.mrb[0].mxu0 %v596
        %v910 = vpop.f32.mrb[0].mxu0
        %v911 = vadd.f32 %v546, %v910
        %v912 = vpop.f32.mrb[0].mxu0
        %v913 = vadd.f32 %v546, %v912
        %914 = vmatprep.mubr.f32.mxu0 0.0
        %915 = vmatmul.mubr.f32.gmra.mrb[0].mxu0 %v599
        %v916 = vpop.f32.mrb[0].mxu0
        %v917 = vadd.f32 %v551, %v916
        %v918 = vpop.f32.mrb[0].mxu0
        %v919 = vadd.f32 %v551, %v918
        %920 = vmatprep.mubr.f32.mxu0 0.0
        %921 = vmatmul.mubr.f32.gmra.mrb[0].mxu0 %v602
        %v922 = vpop.f32.mrb[0].mxu0
        %v923 = vadd.f32 %v556, %v922
        %v924 = vpop.f32.mrb[0].mxu0
        %v925 = vadd.f32 %v556, %v924
        %926 = vdwg.mxu0
        %v927 = vmax.f32 %v684, 0.0
        %v928 = vmax.f32 %v686, 0.0
        %v929 = vmax.f32 %v839, 0.0
        %v930 = vmax.f32 %v841, 0.0
        %v931 = vmax.f32 %v690, 0.0
        %v932 = vmax.f32 %v692, 0.0
        %v933 = vmax.f32 %v845, 0.0
        %v934 = vmax.f32 %v847, 0.0
        %v935 = vmax.f32 %v696, 0.0
        %v936 = vmax.f32 %v698, 0.0
        %v937 = vmax.f32 %v851, 0.0
        %v938 = vmax.f32 %v853, 0.0
        %v939 = vmax.f32 %v702, 0.0
        %v940 = vmax.f32 %v704, 0.0
        %v941 = vmax.f32 %v857, 0.0
        %v942 = vmax.f32 %v859, 0.0
        %vm943 = vcmp.ne.f32.partialorder %v422, 0.0
        %vm944 = vcmp.ne.f32.partialorder %v423, 0.0
        %vm945 = vcmp.ne.f32.partialorder %v424, 0.0
        %vm946 = vcmp.ne.f32.partialorder %v425, 0.0
        %v947 = vsel %vm943, 1, 0
        %v948 = vsel %vm944, 1, 0
        %v949 = vsel %vm945, 1, 0
        %v950 = vsel %vm946, 1, 0
        %v951 = vrot.slane %v947, 1
        %v952 = vrot.slane %v948, 1
        %v953 = vrot.slane %v949, 1
        %v954 = vrot.slane %v950, 1
        %vm955 = vcmp.ne.s32.totalorder %v951, 0
        %vm956 = vcmp.ne.s32.totalorder %v952, 0
        %vm957 = vcmp.ne.s32.totalorder %v953, 0
        %vm958 = vcmp.ne.s32.totalorder %v954, 0
        %vm959 = vmor %vm943, %vm955
        %vm960 = vmor %vm944, %vm956
        %vm961 = vmor %vm945, %vm957
        %vm962 = vmor %vm946, %vm958
        %v963 = vrot.slane %v947, 2
        %v964 = vrot.slane %v948, 2
        %v965 = vrot.slane %v949, 2
        %v966 = vrot.slane %v950, 2
        %vm967 = vcmp.ne.s32.totalorder %v963, 0
        %vm968 = vcmp.ne.s32.totalorder %v964, 0
        %vm969 = vcmp.ne.s32.totalorder %v965, 0
        %vm970 = vcmp.ne.s32.totalorder %v966, 0
        %vm971 = vmor %vm959, %vm967
        %vm972 = vmor %vm960, %vm968
        %vm973 = vmor %vm961, %vm969
        %vm974 = vmor %vm962, %vm970
        %976 = vset.pattern.permute.xlu0 0
        %977 = vperm.xlu0 %976, %v475
        %v978 = vpop.permute.xlu0 %977
        %981 = vset.pattern.permute.xlu0 0
        %982 = vperm.xlu0 %981, %v476
        %v983 = vpop.permute.xlu0 %982
        %986 = vset.pattern.permute.xlu0 0
        %987 = vperm.xlu0 %986, %v477
        %v988 = vpop.permute.xlu0 %987
        %991 = vset.pattern.permute.xlu0 0
        %992 = vperm.xlu0 %991, %v478
        %v993 = vpop.permute.xlu0 %992
        %v995 = vmul.f32 %v927, %v978
        %v996 = vmul.f32 %v928, %v978
        %v997 = vmul.f32 %v929, %v978
        %v998 = vmul.f32 %v930, %v978
        %v999 = vmul.f32 %v931, %v983
        %v1000 = vmul.f32 %v932, %v983
        %v1001 = vmul.f32 %v933, %v983
        %v1002 = vmul.f32 %v934, %v983
        %v1003 = vmul.f32 %v935, %v988
        %v1004 = vmul.f32 %v936, %v988
        %v1005 = vmul.f32 %v937, %v988
        %v1006 = vmul.f32 %v938, %v988
        %v1007 = vmul.f32 %v939, %v993
        %v1008 = vmul.f32 %v940, %v993
        %v1009 = vmul.f32 %v941, %v993
        %v1010 = vmul.f32 %v942, %v993
        %v1011 = vadd.f32 %v995, %v999
        %v1012 = vadd.f32 %v1011, %v1003
        %v1013 = vadd.f32 %v1012, %v1007
        %v1014 = vrot.slane %v1013, 4
        %v1015 = vadd.f32 %v1013, %v1014
        %v1016 = vrot.slane %v1015, 2
        %v1017 = vadd.f32 %v1015, %v1016
        %v1018 = vrot.slane %v1017, 1
        %v1019 = vadd.f32 %v1017, %v1018
        %v1020 = vadd.f32 %v996, %v1000
        %v1021 = vadd.f32 %v1020, %v1004
        %v1022 = vadd.f32 %v1021, %v1008
        %v1023 = vrot.slane %v1022, 4
        %v1024 = vadd.f32 %v1022, %v1023
        %v1025 = vrot.slane %v1024, 2
        %v1026 = vadd.f32 %v1024, %v1025
        %v1027 = vrot.slane %v1026, 1
        %v1028 = vadd.f32 %v1026, %v1027
        %v1029 = vadd.f32 %v997, %v1001
        %v1030 = vadd.f32 %v1029, %v1005
        %v1031 = vadd.f32 %v1030, %v1009
        %v1032 = vrot.slane %v1031, 4
        %v1033 = vadd.f32 %v1031, %v1032
        %v1034 = vrot.slane %v1033, 2
        %v1035 = vadd.f32 %v1033, %v1034
        %v1036 = vrot.slane %v1035, 1
        %v1037 = vadd.f32 %v1035, %v1036
        %v1038 = vadd.f32 %v998, %v1002
        %v1039 = vadd.f32 %v1038, %v1006
        %v1040 = vadd.f32 %v1039, %v1010
        %v1041 = vrot.slane %v1040, 4
        %v1042 = vadd.f32 %v1040, %v1041
        %v1043 = vrot.slane %v1042, 2
        %v1044 = vadd.f32 %v1042, %v1043
        %v1045 = vrot.slane %v1044, 1
        %v1046 = vadd.f32 %v1044, %v1045
        %v1047 = vstv %s482
        %vm1048 = vcmp.lt.f32.partialorder %v1019, %v1047
        %vm1049 = vcmp.lt.f32.partialorder %v1028, %v1047
        %vm1050 = vcmp.lt.f32.partialorder %v1037, %v1047
        %vm1051 = vcmp.lt.f32.partialorder %v1046, %v1047
        %vm1052 = vmand %vm1048, %vm971
        %vm1053 = vmand %vm1049, %vm972
        %vm1054 = vmand %vm1050, %vm973
        %vm1055 = vmand %vm1051, %vm974
        %v1056 = vmax.f32 %v426, %v430
        %v1057 = vsel %vm604, %v434, -inf
        %v1058 = vmax.f32 %v1056, %v1057
        %v1059 = vrot.slane %v1058, 4
        %v1060 = vmax.f32 %v1058, %v1059
        %v1061 = vrot.slane %v1060, 2
        %v1062 = vmax.f32 %v1060, %v1061
        %v1063 = vrot.slane %v1062, 1
        %v1064 = vmax.f32 %v1062, %v1063
        %v1065 = vmax.f32 %v427, %v431
        %v1066 = vsel %vm604, %v435, -inf
        %v1067 = vmax.f32 %v1065, %v1066
        %v1068 = vrot.slane %v1067, 4
        %v1069 = vmax.f32 %v1067, %v1068
        %v1070 = vrot.slane %v1069, 2
        %v1071 = vmax.f32 %v1069, %v1070
        %v1072 = vrot.slane %v1071, 1
        %v1073 = vmax.f32 %v1071, %v1072
        %v1074 = vmax.f32 %v428, %v432
        %v1075 = vsel %vm604, %v436, -inf
        %v1076 = vmax.f32 %v1074, %v1075
        %v1077 = vrot.slane %v1076, 4
        %v1078 = vmax.f32 %v1076, %v1077
        %v1079 = vrot.slane %v1078, 2
        %v1080 = vmax.f32 %v1078, %v1079
        %v1081 = vrot.slane %v1080, 1
        %v1082 = vmax.f32 %v1080, %v1081
        %v1083 = vmax.f32 %v429, %v433
        %v1084 = vsel %vm604, %v437, -inf
        %v1085 = vmax.f32 %v1083, %v1084
        %v1086 = vrot.slane %v1085, 4
        %v1087 = vmax.f32 %v1085, %v1086
        %v1088 = vrot.slane %v1087, 2
        %v1089 = vmax.f32 %v1087, %v1088
        %v1090 = vrot.slane %v1089, 1
        %v1091 = vmax.f32 %v1089, %v1090
        %v1092 = vsub.f32 %v426, %v1064
        %v1093 = vsub.f32 %v427, %v1073
        %v1094 = vsub.f32 %v428, %v1082
        %v1095 = vsub.f32 %v429, %v1091
        %v1096 = vsub.f32 %v430, %v1064
        %v1097 = vsub.f32 %v431, %v1073
        %v1098 = vsub.f32 %v432, %v1082
        %v1099 = vsub.f32 %v433, %v1091
        %v1100 = vsub.f32 %v434, %v1064
        %v1101 = vsub.f32 %v435, %v1073
        %v1102 = vsub.f32 %v436, %v1082
        %v1103 = vsub.f32 %v437, %v1091
        %v1104 = vmul.f32 %v1092, 1.442695
        %v1105 = vpow.pop %v1104
        %v1106 = vmul.f32 %v1093, 1.442695
        %v1107 = vpow.pop %v1106
        %v1108 = vmul.f32 %v1094, 1.442695
        %v1109 = vpow.pop %v1108
        %v1110 = vmul.f32 %v1095, 1.442695
        %v1111 = vpow.pop %v1110
        %v1112 = vmul.f32 %v1096, 1.442695
        %v1113 = vpow.pop %v1112
        %v1114 = vmul.f32 %v1097, 1.442695
        %v1115 = vpow.pop %v1114
        %v1116 = vmul.f32 %v1098, 1.442695
        %v1117 = vpow.pop %v1116
        %v1118 = vmul.f32 %v1099, 1.442695
        %v1119 = vpow.pop %v1118
        %v1120 = vmul.f32 %v1100, 1.442695
        %v1121 = vpow.pop %v1120
        %v1122 = vmul.f32 %v1101, 1.442695
        %v1123 = vpow.pop %v1122
        %v1124 = vmul.f32 %v1102, 1.442695
        %v1125 = vpow.pop %v1124
        %v1126 = vmul.f32 %v1103, 1.442695
        %v1127 = vpow.pop %v1126
        %v1128 = vadd.f32 %v1105, %v1113
        %v1129 = vsel %vm604, %v1121, 0.0
        %v1130 = vadd.f32 %v1128, %v1129
        %v1131 = vrot.slane %v1130, 4
        %v1132 = vadd.f32 %v1130, %v1131
        %v1133 = vrot.slane %v1132, 2
        %v1134 = vadd.f32 %v1132, %v1133
        %v1135 = vrot.slane %v1134, 1
        %v1136 = vadd.f32 %v1134, %v1135
        %v1137 = vadd.f32 %v1107, %v1115
        %v1138 = vsel %vm604, %v1123, 0.0
        %v1139 = vadd.f32 %v1137, %v1138
        %v1140 = vrot.slane %v1139, 4
        %v1141 = vadd.f32 %v1139, %v1140
        %v1142 = vrot.slane %v1141, 2
        %v1143 = vadd.f32 %v1141, %v1142
        %v1144 = vrot.slane %v1143, 1
        %v1145 = vadd.f32 %v1143, %v1144
        %v1146 = vadd.f32 %v1109, %v1117
        %v1147 = vsel %vm604, %v1125, 0.0
        %v1148 = vadd.f32 %v1146, %v1147
        %v1149 = vrot.slane %v1148, 4
        %v1150 = vadd.f32 %v1148, %v1149
        %v1151 = vrot.slane %v1150, 2
        %v1152 = vadd.f32 %v1150, %v1151
        %v1153 = vrot.slane %v1152, 1
        %v1154 = vadd.f32 %v1152, %v1153
        %v1155 = vadd.f32 %v1111, %v1119
        %v1156 = vsel %vm604, %v1127, 0.0
        %v1157 = vadd.f32 %v1155, %v1156
        %v1158 = vrot.slane %v1157, 4
        %v1159 = vadd.f32 %v1157, %v1158
        %v1160 = vrot.slane %v1159, 2
        %v1161 = vadd.f32 %v1159, %v1160
        %v1162 = vrot.slane %v1161, 1
        %v1163 = vadd.f32 %v1161, %v1162
        %v1164 = vrcp.pop %v1136
        %v1165 = vrcp.pop %v1145
        %v1166 = vrcp.pop %v1154
        %v1167 = vrcp.pop %v1163
        %v1168 = vmul.f32 %v1105, %v1164
        %v1169 = vmul.f32 %v1107, %v1165
        %v1170 = vmul.f32 %v1109, %v1166
        %v1171 = vmul.f32 %v1111, %v1167
        %v1172 = vmul.f32 %v1113, %v1164
        %v1173 = vmul.f32 %v1115, %v1165
        %v1174 = vmul.f32 %v1117, %v1166
        %v1175 = vmul.f32 %v1119, %v1167
        %v1176 = vmul.f32 %v1121, %v1164
        %v1177 = vmul.f32 %v1123, %v1165
        %v1178 = vmul.f32 %v1125, %v1166
        %v1179 = vmul.f32 %v1127, %v1167
        %v1180 = vsel %vm1052, 1.0, 0.0
        %v1181 = vsel %vm1053, 1.0, 0.0
        %v1182 = vsel %vm1054, 1.0, 0.0
        %v1183 = vsel %vm1055, 1.0, 0.0
        %vm1184 = vcmask 1040384
        %v1185 = vsel %vm1184, %v1180, 0.0
        %v1186 = vsel %vm1184, %v1181, 0.0
        %v1187 = vadd.f32 %v1185, %v1186
        %v1188 = vsel %vm1184, %v1182, 0.0
        %v1189 = vadd.f32 %v1187, %v1188
        %v1190 = vsel %vm1184, %v1183, 0.0
        %v1191 = vadd.f32 %v1189, %v1190
        %1192 = vadd.xlane.f32.xlu0 %v1191
        %v1193 = vpop.xlane.xlu0 %1192
        %v1194 = vrot.slane %v1193, 4
        %v1195 = vadd.f32 %v1193, %v1194
        %v1196 = vrot.slane %v1195, 2
        %v1197 = vadd.f32 %v1195, %v1196
        %v1198 = vrot.slane %v1197, 1
        %v1199 = vadd.f32 %v1197, %v1198
        %s1200 = vtos %v1199
        %p1201 = scmp.gt.f32.partialorder %s1200, 0.0
        // Predicated region
        $region80: #{tpu_custom_call.1} parent=70 // pred_check
          %p1202 = pneg %p1201
        $region81: #{tpu_custom_call.1} parent=70 // pred_check_branch
          %1204 = sbr.rel (%p1202) target = $region83
        $region82: #{tpu_custom_call.1} parent=70 // pred_region
          %v1205 = vand.u32 2147483647, %v708
          %v1206 = vand.u32 2147483647, %v714
          %v1207 = vand.u32 2147483647, %v720
          %v1208 = vand.u32 2147483647, %v726
          %v1209 = vadd.f32 %v1205, %v1206
          %v1210 = vadd.f32 %v1209, %v1207
          %v1211 = vadd.f32 %v1210, %v1208
          %v1212 = vrot.slane %v1211, 4
          %v1213 = vadd.f32 %v1211, %v1212
          %v1214 = vrot.slane %v1213, 2
          %v1215 = vadd.f32 %v1213, %v1214
          %v1216 = vrot.slane %v1215, 1
          %v1217 = vadd.f32 %v1215, %v1216
          %v1218 = vsel %vm604, %v1176, -inf
          %v1219 = vmax.f32 %v1168, %v1172
          %v1220 = vmax.f32 %v1219, %v1218
          %v1221 = vrot.slane %v1220, 4
          %v1222 = vmax.f32 %v1220, %v1221
          %v1223 = vrot.slane %v1222, 2
          %v1224 = vmax.f32 %v1222, %v1223
          %v1225 = vrot.slane %v1224, 1
          %v1226 = vmax.f32 %v1224, %v1225
          %v1227 = vmul.f32 %v1217, %v1226
          %v1228 = vlaneseq
          %v1229 = vshrl.u32 %v1228, 7
          %v1230 = vsub.s32 0, %v1229
          %v1231 = vrot.slane %v468, %v1230
          %1233 = vbcast.lane.b32.xlu0 %v1231, 256
          %v1234 = vpop.permute.xlu0 %1233
          %s1236 = sor.u32 256, 8
          %1237 = vbcast.lane.b32.xlu0 %v1231, %s1236
          %v1238 = vpop.permute.xlu0 %1237
          %s1240 = sor.u32 256, 16
          %1241 = vbcast.lane.b32.xlu0 %v1231, %s1240
          %v1242 = vpop.permute.xlu0 %1241
          %s1244 = sor.u32 256, 24
          %1245 = vbcast.lane.b32.xlu0 %v1231, %s1244
          %v1246 = vpop.permute.xlu0 %1245
          %v1247 = vlaneseq
          %v1248 = vshrl.u32 %v1247, 7
          %v1249 = vsub.s32 1, %v1248
          %v1250 = vrot.slane %v468, %v1249
          %1252 = vbcast.lane.b32.xlu0 %v1250, 256
          %v1253 = vpop.permute.xlu0 %1252
          %s1255 = sor.u32 256, 8
          %1256 = vbcast.lane.b32.xlu0 %v1250, %s1255
          %v1257 = vpop.permute.xlu0 %1256
          %s1259 = sor.u32 256, 16
          %1260 = vbcast.lane.b32.xlu0 %v1250, %s1259
          %v1261 = vpop.permute.xlu0 %1260
          %s1263 = sor.u32 256, 24
          %1264 = vbcast.lane.b32.xlu0 %v1250, %s1263
          %v1265 = vpop.permute.xlu0 %1264
          %v1266 = vlaneseq
          %v1267 = vshrl.u32 %v1266, 7
          %v1268 = vsub.s32 2, %v1267
          %v1269 = vrot.slane %v468, %v1268
          %1271 = vbcast.lane.b32.xlu0 %v1269, 256
          %v1272 = vpop.permute.xlu0 %1271
          %s1274 = sor.u32 256, 8
          %1275 = vbcast.lane.b32.xlu0 %v1269, %s1274
          %v1276 = vpop.permute.xlu0 %1275
          %s1278 = sor.u32 256, 16
          %1279 = vbcast.lane.b32.xlu0 %v1269, %s1278
          %v1280 = vpop.permute.xlu0 %1279
          %s1282 = sor.u32 256, 24
          %1283 = vbcast.lane.b32.xlu0 %v1269, %s1282
          %v1284 = vpop.permute.xlu0 %1283
          %v1285 = vlaneseq
          %v1286 = vshrl.u32 %v1285, 7
          %v1287 = vsub.s32 3, %v1286
          %v1288 = vrot.slane %v468, %v1287
          %1290 = vbcast.lane.b32.xlu0 %v1288, 256
          %v1291 = vpop.permute.xlu0 %1290
          %s1293 = sor.u32 256, 8
          %1294 = vbcast.lane.b32.xlu0 %v1288, %s1293
          %v1295 = vpop.permute.xlu0 %1294
          %s1297 = sor.u32 256, 16
          %1298 = vbcast.lane.b32.xlu0 %v1288, %s1297
          %v1299 = vpop.permute.xlu0 %1298
          %s1301 = sor.u32 256, 24
          %1302 = vbcast.lane.b32.xlu0 %v1288, %s1301
          %v1303 = vpop.permute.xlu0 %1302
          %v1304 = vadd.f32 %v732, %v1234
          %v1305 = vadd.f32 %v738, %v1238
          %v1306 = vadd.f32 %v744, %v1242
          %v1307 = vadd.f32 %v750, %v1246
          %v1308 = vadd.f32 %v732, %v1253
          %v1309 = vadd.f32 %v738, %v1257
          %v1310 = vadd.f32 %v744, %v1261
          %v1311 = vadd.f32 %v750, %v1265
          %v1312 = vadd.f32 %v732, %v1272
          %v1313 = vadd.f32 %v738, %v1276
          %v1314 = vadd.f32 %v744, %v1280
          %v1315 = vadd.f32 %v750, %v1284
          %v1316 = vadd.f32 %v732, %v1291
          %v1317 = vadd.f32 %v738, %v1295
          %v1318 = vadd.f32 %v744, %v1299
          %v1319 = vadd.f32 %v750, %v1303
          %v1320 = vtanh.pop %v1304
          %v1321 = vtanh.pop %v1305
          %v1322 = vtanh.pop %v1306
          %v1323 = vtanh.pop %v1307
          %v1324 = vtanh.pop %v1308
          %v1325 = vtanh.pop %v1309
          %v1326 = vtanh.pop %v1310
          %v1327 = vtanh.pop %v1311
          %v1328 = vtanh.pop %v1312
          %v1329 = vtanh.pop %v1313
          %v1330 = vtanh.pop %v1314
          %v1331 = vtanh.pop %v1315
          %v1332 = vtanh.pop %v1316
          %v1333 = vtanh.pop %v1317
          %v1334 = vtanh.pop %v1318
          %v1335 = vtanh.pop %v1319
          %v1336 = vmul.f32 %v1320, %v708
          %v1337 = vmul.f32 %v1321, %v714
          %v1338 = vmul.f32 %v1322, %v720
          %v1339 = vmul.f32 %v1323, %v726
          %v1340 = vmul.f32 %v1324, %v708
          %v1341 = vmul.f32 %v1325, %v714
          %v1342 = vmul.f32 %v1326, %v720
          %v1343 = vmul.f32 %v1327, %v726
          %v1344 = vmul.f32 %v1328, %v708
          %v1345 = vmul.f32 %v1329, %v714
          %v1346 = vmul.f32 %v1330, %v720
          %v1347 = vmul.f32 %v1331, %v726
          %v1348 = vmul.f32 %v1332, %v708
          %v1349 = vmul.f32 %v1333, %v714
          %v1350 = vmul.f32 %v1334, %v720
          %v1351 = vmul.f32 %v1335, %v726
          %v1352 = vadd.f32 %v1336, %v1337
          %v1353 = vadd.f32 %v1352, %v1338
          %v1354 = vadd.f32 %v1353, %v1339
          %v1355 = vrot.slane %v1354, 4
          %v1356 = vadd.f32 %v1354, %v1355
          %v1357 = vrot.slane %v1356, 2
          %v1358 = vadd.f32 %v1356, %v1357
          %v1359 = vrot.slane %v1358, 1
          %v1360 = vadd.f32 %v1358, %v1359
          %v1361 = vadd.f32 %v1340, %v1341
          %v1362 = vadd.f32 %v1361, %v1342
          %v1363 = vadd.f32 %v1362, %v1343
          %v1364 = vrot.slane %v1363, 4
          %v1365 = vadd.f32 %v1363, %v1364
          %v1366 = vrot.slane %v1365, 2
          %v1367 = vadd.f32 %v1365, %v1366
          %v1368 = vrot.slane %v1367, 1
          %v1369 = vadd.f32 %v1367, %v1368
          %v1370 = vadd.f32 %v1344, %v1345
          %v1371 = vadd.f32 %v1370, %v1346
          %v1372 = vadd.f32 %v1371, %v1347
          %v1373 = vrot.slane %v1372, 4
          %v1374 = vadd.f32 %v1372, %v1373
          %v1375 = vrot.slane %v1374, 2
          %v1376 = vadd.f32 %v1374, %v1375
          %v1377 = vrot.slane %v1376, 1
          %v1378 = vadd.f32 %v1376, %v1377
          %v1379 = vadd.f32 %v1348, %v1349
          %v1380 = vadd.f32 %v1379, %v1350
          %v1381 = vadd.f32 %v1380, %v1351
          %v1382 = vrot.slane %v1381, 4
          %v1383 = vadd.f32 %v1381, %v1382
          %v1384 = vrot.slane %v1383, 2
          %v1385 = vadd.f32 %v1383, %v1384
          %v1386 = vrot.slane %v1385, 1
          %v1387 = vadd.f32 %v1385, %v1386
          %vm1392 = vcmask 1041409
          %v1393 = vsel %vm1392, %v1369, %v1360
          %vm1394 = vcmask 1042434
          %v1395 = vsel %vm1394, %v1378, %v1393
          %vm1396 = vcmask 1043459
          %v1397 = vsel %vm1396, %v1387, %v1395
          %v1399 = vmul.f32 %v1168, %v1397
          %v1400 = vsub.f32 %v1399, %v1227
          %v1401 = vmul.f32 %v1400, 1.442695
          %v1402 = vpow.pop %v1401
          %vm1403 = vcmask 1043456
          %v1404 = vsel %vm1403, %v1402, 0.0
          %v1405 = vrot.slane %v1404, 4
          %v1406 = vadd.f32 %v1404, %v1405
          %v1407 = vrot.slane %v1406, 2
          %v1408 = vadd.f32 %v1406, %v1407
          %v1409 = vrot.slane %v1408, 1
          %v1410 = vadd.f32 %v1408, %v1409
          %v1411 = vadd.f32 %v1410, 0.0
          %v1412 = vmul.f32 %v1402, %v1168
          %v1415 = vunpack.c.l.s4 1966171168
          %v1416 = vunpack.c.0.s8 %v1415
          %v1417 = vlaneseq
          %v1418 = vshrl.u32 %v1417, 7
          %v1419 = vsub.s32 %v1416, %v1418
          %v1420 = vrot.slane %v1412, %v1419
          %v1421 = vcombine.high %v1420, %v1420
          %v1423 = vunpack.c.l.s4 1966171168
          %v1424 = vunpack.c.0.s8 %v1423
          %v1425 = vlaneseq
          %v1426 = vshrl.u32 %v1425, 7
          %v1427 = vsub.s32 %v1424, %v1426
          %v1428 = vrot.slane %v1420, %v1427
          %v1430 = vunpack.c.l.s4 1966171168
          %v1431 = vunpack.c.0.s8 %v1430
          %v1432 = vlaneseq
          %v1433 = vshrl.u32 %v1432, 7
          %v1434 = vsub.s32 %v1431, %v1433
          %v1435 = vrot.slane %v1421, %v1434
          %v1436 = vcombine.high %v1428, %v1428
          %v1437 = vcombine.high %v1435, %v1435
          %v1438 = vlaneseq
          %v1439 = vshrl.u32 %v1438, 7
          %v1440 = vsub.s32 0, %v1439
          %v1441 = vrot.slane %v1428, %v1440
          %v1442 = vlaneseq
          %v1443 = vshrl.u32 %v1442, 7
          %v1444 = vsub.s32 0, %v1443
          %v1445 = vrot.slane %v1435, %v1444
          %v1446 = vlaneseq
          %v1447 = vshrl.u32 %v1446, 7
          %v1448 = vsub.s32 0, %v1447
          %v1449 = vrot.slane %v1436, %v1448
          %v1450 = vlaneseq
          %v1451 = vshrl.u32 %v1450, 7
          %v1452 = vsub.s32 0, %v1451
          %v1453 = vrot.slane %v1437, %v1452
          %v1458 = vmul.f32 %v1441, %v1320
          %v1459 = vmul.f32 %v1441, %v1321
          %v1460 = vmul.f32 %v1441, %v1322
          %v1461 = vmul.f32 %v1441, %v1323
          %v1462 = vmul.f32 %v1445, %v1324
          %v1463 = vmul.f32 %v1445, %v1325
          %v1464 = vmul.f32 %v1445, %v1326
          %v1465 = vmul.f32 %v1445, %v1327
          %v1466 = vmul.f32 %v1449, %v1328
          %v1467 = vmul.f32 %v1449, %v1329
          %v1468 = vmul.f32 %v1449, %v1330
          %v1469 = vmul.f32 %v1449, %v1331
          %v1470 = vmul.f32 %v1453, %v1332
          %v1471 = vmul.f32 %v1453, %v1333
          %v1472 = vmul.f32 %v1453, %v1334
          %v1473 = vmul.f32 %v1453, %v1335
          %v1474 = vadd.f32 %v1458, %v1462
          %v1475 = vadd.f32 %v1474, %v1466
          %v1476 = vadd.f32 %v1475, %v1470
          %v1477 = vadd.f32 %v1459, %v1463
          %v1478 = vadd.f32 %v1477, %v1467
          %v1479 = vadd.f32 %v1478, %v1471
          %v1480 = vadd.f32 %v1460, %v1464
          %v1481 = vadd.f32 %v1480, %v1468
          %v1482 = vadd.f32 %v1481, %v1472
          %v1483 = vadd.f32 %v1461, %v1465
          %v1484 = vadd.f32 %v1483, %v1469
          %v1485 = vadd.f32 %v1484, %v1473
          %v1486 = vadd.f32 %v1476, 0.0
          %v1487 = vadd.f32 %v1479, 0.0
          %v1488 = vadd.f32 %v1482, 0.0
          %v1489 = vadd.f32 %v1485, 0.0
          %v1490 = vlaneseq
          %v1491 = vshrl.u32 %v1490, 7
          %v1492 = vsub.s32 4, %v1491
          %v1493 = vrot.slane %v468, %v1492
          %1495 = vbcast.lane.b32.xlu0 %v1493, 256
          %v1496 = vpop.permute.xlu0 %1495
          %s1498 = sor.u32 256, 8
          %1499 = vbcast.lane.b32.xlu0 %v1493, %s1498
          %v1500 = vpop.permute.xlu0 %1499
          %s1502 = sor.u32 256, 16
          %1503 = vbcast.lane.b32.xlu0 %v1493, %s1502
          %v1504 = vpop.permute.xlu0 %1503
          %s1506 = sor.u32 256, 24
          %1507 = vbcast.lane.b32.xlu0 %v1493, %s1506
          %v1508 = vpop.permute.xlu0 %1507
          %v1509 = vlaneseq
          %v1510 = vshrl.u32 %v1509, 7
          %v1511 = vsub.s32 5, %v1510
          %v1512 = vrot.slane %v468, %v1511
          %1514 = vbcast.lane.b32.xlu0 %v1512, 256
          %v1515 = vpop.permute.xlu0 %1514
          %s1517 = sor.u32 256, 8
          %1518 = vbcast.lane.b32.xlu0 %v1512, %s1517
          %v1519 = vpop.permute.xlu0 %1518
          %s1521 = sor.u32 256, 16
          %1522 = vbcast.lane.b32.xlu0 %v1512, %s1521
          %v1523 = vpop.permute.xlu0 %1522
          %s1525 = sor.u32 256, 24
          %1526 = vbcast.lane.b32.xlu0 %v1512, %s1525
          %v1527 = vpop.permute.xlu0 %1526
          %v1528 = vlaneseq
          %v1529 = vshrl.u32 %v1528, 7
          %v1530 = vsub.s32 6, %v1529
          %v1531 = vrot.slane %v468, %v1530
          %1533 = vbcast.lane.b32.xlu0 %v1531, 256
          %v1534 = vpop.permute.xlu0 %1533
          %s1536 = sor.u32 256, 8
          %1537 = vbcast.lane.b32.xlu0 %v1531, %s1536
          %v1538 = vpop.permute.xlu0 %1537
          %s1540 = sor.u32 256, 16
          %1541 = vbcast.lane.b32.xlu0 %v1531, %s1540
          %v1542 = vpop.permute.xlu0 %1541
          %s1544 = sor.u32 256, 24
          %1545 = vbcast.lane.b32.xlu0 %v1531, %s1544
          %v1546 = vpop.permute.xlu0 %1545
          %v1547 = vlaneseq
          %v1548 = vshrl.u32 %v1547, 7
          %v1549 = vsub.s32 7, %v1548
          %v1550 = vrot.slane %v468, %v1549
          %1552 = vbcast.lane.b32.xlu0 %v1550, 256
          %v1553 = vpop.permute.xlu0 %1552
          %s1555 = sor.u32 256, 8
          %1556 = vbcast.lane.b32.xlu0 %v1550, %s1555
          %v1557 = vpop.permute.xlu0 %1556
          %s1559 = sor.u32 256, 16
          %1560 = vbcast.lane.b32.xlu0 %v1550, %s1559
          %v1561 = vpop.permute.xlu0 %1560
          %s1563 = sor.u32 256, 24
          %1564 = vbcast.lane.b32.xlu0 %v1550, %s1563
          %v1565 = vpop.permute.xlu0 %1564
          %v1566 = vadd.f32 %v732, %v1496
          %v1567 = vadd.f32 %v738, %v1500
          %v1568 = vadd.f32 %v744, %v1504
          %v1569 = vadd.f32 %v750, %v1508
          %v1570 = vadd.f32 %v732, %v1515
          %v1571 = vadd.f32 %v738, %v1519
          %v1572 = vadd.f32 %v744, %v1523
          %v1573 = vadd.f32 %v750, %v1527
          %v1574 = vadd.f32 %v732, %v1534
          %v1575 = vadd.f32 %v738, %v1538
          %v1576 = vadd.f32 %v744, %v1542
          %v1577 = vadd.f32 %v750, %v1546
          %v1578 = vadd.f32 %v732, %v1553
          %v1579 = vadd.f32 %v738, %v1557
          %v1580 = vadd.f32 %v744, %v1561
          %v1581 = vadd.f32 %v750, %v1565
          %v1582 = vtanh.pop %v1566
          %v1583 = vtanh.pop %v1567
          %v1584 = vtanh.pop %v1568
          %v1585 = vtanh.pop %v1569
          %v1586 = vtanh.pop %v1570
          %v1587 = vtanh.pop %v1571
          %v1588 = vtanh.pop %v1572
          %v1589 = vtanh.pop %v1573
          %v1590 = vtanh.pop %v1574
          %v1591 = vtanh.pop %v1575
          %v1592 = vtanh.pop %v1576
          %v1593 = vtanh.pop %v1577
          %v1594 = vtanh.pop %v1578
          %v1595 = vtanh.pop %v1579
          %v1596 = vtanh.pop %v1580
          %v1597 = vtanh.pop %v1581
          %v1598 = vmul.f32 %v1582, %v708
          %v1599 = vmul.f32 %v1583, %v714
          %v1600 = vmul.f32 %v1584, %v720
          %v1601 = vmul.f32 %v1585, %v726
          %v1602 = vmul.f32 %v1586, %v708
          %v1603 = vmul.f32 %v1587, %v714
          %v1604 = vmul.f32 %v1588, %v720
          %v1605 = vmul.f32 %v1589, %v726
          %v1606 = vmul.f32 %v1590, %v708
          %v1607 = vmul.f32 %v1591, %v714
          %v1608 = vmul.f32 %v1592, %v720
          %v1609 = vmul.f32 %v1593, %v726
          %v1610 = vmul.f32 %v1594, %v708
          %v1611 = vmul.f32 %v1595, %v714
          %v1612 = vmul.f32 %v1596, %v720
          %v1613 = vmul.f32 %v1597, %v726
          %v1614 = vadd.f32 %v1598, %v1599
          %v1615 = vadd.f32 %v1614, %v1600
          %v1616 = vadd.f32 %v1615, %v1601
          %v1617 = vrot.slane %v1616, 4
          %v1618 = vadd.f32 %v1616, %v1617
          %v1619 = vrot.slane %v1618, 2
          %v1620 = vadd.f32 %v1618, %v1619
          %v1621 = vrot.slane %v1620, 1
          %v1622 = vadd.f32 %v1620, %v1621
          %v1623 = vadd.f32 %v1602, %v1603
          %v1624 = vadd.f32 %v1623, %v1604
          %v1625 = vadd.f32 %v1624, %v1605
          %v1626 = vrot.slane %v1625, 4
          %v1627 = vadd.f32 %v1625, %v1626
          %v1628 = vrot.slane %v1627, 2
          %v1629 = vadd.f32 %v1627, %v1628
          %v1630 = vrot.slane %v1629, 1
          %v1631 = vadd.f32 %v1629, %v1630
          %v1632 = vadd.f32 %v1606, %v1607
          %v1633 = vadd.f32 %v1632, %v1608
          %v1634 = vadd.f32 %v1633, %v1609
          %v1635 = vrot.slane %v1634, 4
          %v1636 = vadd.f32 %v1634, %v1635
          %v1637 = vrot.slane %v1636, 2
          %v1638 = vadd.f32 %v1636, %v1637
          %v1639 = vrot.slane %v1638, 1
          %v1640 = vadd.f32 %v1638, %v1639
          %v1641 = vadd.f32 %v1610, %v1611
          %v1642 = vadd.f32 %v1641, %v1612
          %v1643 = vadd.f32 %v1642, %v1613
          %v1644 = vrot.slane %v1643, 4
          %v1645 = vadd.f32 %v1643, %v1644
          %v1646 = vrot.slane %v1645, 2
          %v1647 = vadd.f32 %v1645, %v1646
          %v1648 = vrot.slane %v1647, 1
          %v1649 = vadd.f32 %v1647, %v1648
          %vm1654 = vcmask 1045509
          %v1655 = vsel %vm1654, %v1631, %v1622
          %vm1656 = vcmask 1046534
          %v1657 = vsel %vm1656, %v1640, %v1655
          %vm1658 = vcmask 1047559
          %v1659 = vsel %vm1658, %v1649, %v1657
          %v1661 = vmul.f32 %v1168, %v1659
          %v1662 = vsub.f32 %v1661, %v1227
          %v1663 = vmul.f32 %v1662, 1.442695
          %v1664 = vpow.pop %v1663
          %v1666 = vrot.slane %v1664, 4
          %v1668 = vsel %vm1403, %v1666, 0.0
          %v1669 = vrot.slane %v1668, 4
          %v1670 = vadd.f32 %v1668, %v1669
          %v1671 = vrot.slane %v1670, 2
          %v1672 = vadd.f32 %v1670, %v1671
          %v1673 = vrot.slane %v1672, 1
          %v1674 = vadd.f32 %v1672, %v1673
          %v1675 = vadd.f32 %v1411, %v1674
          %v1676 = vmul.f32 %v1664, %v1168
          %v1678 = vcombine.high %v1676, %v1676
          %v1680 = vunpack.c.l.s4 1966171168
          %v1681 = vunpack.c.0.s8 %v1680
          %v1682 = vlaneseq
          %v1683 = vshrl.u32 %v1682, 7
          %v1684 = vsub.s32 %v1681, %v1683
          %v1685 = vrot.slane %v1678, %v1684
          %v1686 = vcombine.high %v1685, %v1685
          %v1688 = vunpack.c.l.s4 1966171168
          %v1689 = vunpack.c.0.s8 %v1688
          %v1690 = vlaneseq
          %v1691 = vshrl.u32 %v1690, 7
          %v1692 = vsub.s32 %v1689, %v1691
          %v1693 = vrot.slane %v1685, %v1692
          %v1695 = vunpack.c.l.s4 1966171168
          %v1696 = vunpack.c.0.s8 %v1695
          %v1697 = vlaneseq
          %v1698 = vshrl.u32 %v1697, 7
          %v1699 = vsub.s32 %v1696, %v1698
          %v1700 = vrot.slane %v1686, %v1699
          %v1701 = vcombine.high %v1693, %v1693
          %v1702 = vcombine.high %v1700, %v1700
          %v1703 = vlaneseq
          %v1704 = vshrl.u32 %v1703, 7
          %v1705 = vsub.s32 0, %v1704
          %v1706 = vrot.slane %v1693, %v1705
          %v1707 = vlaneseq
          %v1708 = vshrl.u32 %v1707, 7
          %v1709 = vsub.s32 0, %v1708
          %v1710 = vrot.slane %v1700, %v1709
          %v1711 = vlaneseq
          %v1712 = vshrl.u32 %v1711, 7
          %v1713 = vsub.s32 0, %v1712
          %v1714 = vrot.slane %v1701, %v1713
          %v1715 = vlaneseq
          %v1716 = vshrl.u32 %v1715, 7
          %v1717 = vsub.s32 0, %v1716
          %v1718 = vrot.slane %v1702, %v1717
          %v1723 = vmul.f32 %v1706, %v1582
          %v1724 = vmul.f32 %v1706, %v1583
          %v1725 = vmul.f32 %v1706, %v1584
          %v1726 = vmul.f32 %v1706, %v1585
          %v1727 = vmul.f32 %v1710, %v1586
          %v1728 = vmul.f32 %v1710, %v1587
          %v1729 = vmul.f32 %v1710, %v1588
          %v1730 = vmul.f32 %v1710, %v1589
          %v1731 = vmul.f32 %v1714, %v1590
          %v1732 = vmul.f32 %v1714, %v1591
          %v1733 = vmul.f32 %v1714, %v1592
          %v1734 = vmul.f32 %v1714, %v1593
          %v1735 = vmul.f32 %v1718, %v1594
          %v1736 = vmul.f32 %v1718, %v1595
          %v1737 = vmul.f32 %v1718, %v1596
          %v1738 = vmul.f32 %v1718, %v1597
          %v1739 = vadd.f32 %v1723, %v1727
          %v1740 = vadd.f32 %v1739, %v1731
          %v1741 = vadd.f32 %v1740, %v1735
          %v1742 = vadd.f32 %v1724, %v1728
          %v1743 = vadd.f32 %v1742, %v1732
          %v1744 = vadd.f32 %v1743, %v1736
          %v1745 = vadd.f32 %v1725, %v1729
          %v1746 = vadd.f32 %v1745, %v1733
          %v1747 = vadd.f32 %v1746, %v1737
          %v1748 = vadd.f32 %v1726, %v1730
          %v1749 = vadd.f32 %v1748, %v1734
          %v1750 = vadd.f32 %v1749, %v1738
          %v1751 = vadd.f32 %v1486, %v1741
          %v1752 = vadd.f32 %v1487, %v1744
          %v1753 = vadd.f32 %v1488, %v1747
          %v1754 = vadd.f32 %v1489, %v1750
          %v1755 = vlaneseq
          %v1756 = vshrl.u32 %v1755, 7
          %v1757 = vsub.s32 0, %v1756
          %v1758 = vrot.slane %v469, %v1757
          %1760 = vbcast.lane.b32.xlu0 %v1758, 256
          %v1761 = vpop.permute.xlu0 %1760
          %s1763 = sor.u32 256, 8
          %1764 = vbcast.lane.b32.xlu0 %v1758, %s1763
          %v1765 = vpop.permute.xlu0 %1764
          %s1767 = sor.u32 256, 16
          %1768 = vbcast.lane.b32.xlu0 %v1758, %s1767
          %v1769 = vpop.permute.xlu0 %1768
          %s1771 = sor.u32 256, 24
          %1772 = vbcast.lane.b32.xlu0 %v1758, %s1771
          %v1773 = vpop.permute.xlu0 %1772
          %v1774 = vlaneseq
          %v1775 = vshrl.u32 %v1774, 7
          %v1776 = vsub.s32 1, %v1775
          %v1777 = vrot.slane %v469, %v1776
          %1779 = vbcast.lane.b32.xlu0 %v1777, 256
          %v1780 = vpop.permute.xlu0 %1779
          %s1782 = sor.u32 256, 8
          %1783 = vbcast.lane.b32.xlu0 %v1777, %s1782
          %v1784 = vpop.permute.xlu0 %1783
          %s1786 = sor.u32 256, 16
          %1787 = vbcast.lane.b32.xlu0 %v1777, %s1786
          %v1788 = vpop.permute.xlu0 %1787
          %s1790 = sor.u32 256, 24
          %1791 = vbcast.lane.b32.xlu0 %v1777, %s1790
          %v1792 = vpop.permute.xlu0 %1791
          %v1793 = vlaneseq
          %v1794 = vshrl.u32 %v1793, 7
          %v1795 = vsub.s32 2, %v1794
          %v1796 = vrot.slane %v469, %v1795
          %1798 = vbcast.lane.b32.xlu0 %v1796, 256
          %v1799 = vpop.permute.xlu0 %1798
          %s1801 = sor.u32 256, 8
          %1802 = vbcast.lane.b32.xlu0 %v1796, %s1801
          %v1803 = vpop.permute.xlu0 %1802
          %s1805 = sor.u32 256, 16
          %1806 = vbcast.lane.b32.xlu0 %v1796, %s1805
          %v1807 = vpop.permute.xlu0 %1806
          %s1809 = sor.u32 256, 24
          %1810 = vbcast.lane.b32.xlu0 %v1796, %s1809
          %v1811 = vpop.permute.xlu0 %1810
          %v1812 = vlaneseq
          %v1813 = vshrl.u32 %v1812, 7
          %v1814 = vsub.s32 3, %v1813
          %v1815 = vrot.slane %v469, %v1814
          %1817 = vbcast.lane.b32.xlu0 %v1815, 256
          %v1818 = vpop.permute.xlu0 %1817
          %s1820 = sor.u32 256, 8
          %1821 = vbcast.lane.b32.xlu0 %v1815, %s1820
          %v1822 = vpop.permute.xlu0 %1821
          %s1824 = sor.u32 256, 16
          %1825 = vbcast.lane.b32.xlu0 %v1815, %s1824
          %v1826 = vpop.permute.xlu0 %1825
          %s1828 = sor.u32 256, 24
          %1829 = vbcast.lane.b32.xlu0 %v1815, %s1828
          %v1830 = vpop.permute.xlu0 %1829
          %v1831 = vadd.f32 %v732, %v1761
          %v1832 = vadd.f32 %v738, %v1765
          %v1833 = vadd.f32 %v744, %v1769
          %v1834 = vadd.f32 %v750, %v1773
          %v1835 = vadd.f32 %v732, %v1780
          %v1836 = vadd.f32 %v738, %v1784
          %v1837 = vadd.f32 %v744, %v1788
          %v1838 = vadd.f32 %v750, %v1792
          %v1839 = vadd.f32 %v732, %v1799
          %v1840 = vadd.f32 %v738, %v1803
          %v1841 = vadd.f32 %v744, %v1807
          %v1842 = vadd.f32 %v750, %v1811
          %v1843 = vadd.f32 %v732, %v1818
          %v1844 = vadd.f32 %v738, %v1822
          %v1845 = vadd.f32 %v744, %v1826
          %v1846 = vadd.f32 %v750, %v1830
          %v1847 = vtanh.pop %v1831
          %v1848 = vtanh.pop %v1832
          %v1849 = vtanh.pop %v1833
          %v1850 = vtanh.pop %v1834
          %v1851 = vtanh.pop %v1835
          %v1852 = vtanh.pop %v1836
          %v1853 = vtanh.pop %v1837
          %v1854 = vtanh.pop %v1838
          %v1855 = vtanh.pop %v1839
          %v1856 = vtanh.pop %v1840
          %v1857 = vtanh.pop %v1841
          %v1858 = vtanh.pop %v1842
          %v1859 = vtanh.pop %v1843
          %v1860 = vtanh.pop %v1844
          %v1861 = vtanh.pop %v1845
          %v1862 = vtanh.pop %v1846
          %v1863 = vmul.f32 %v1847, %v708
          %v1864 = vmul.f32 %v1848, %v714
          %v1865 = vmul.f32 %v1849, %v720
          %v1866 = vmul.f32 %v1850, %v726
          %v1867 = vmul.f32 %v1851, %v708
          %v1868 = vmul.f32 %v1852, %v714
          %v1869 = vmul.f32 %v1853, %v720
          %v1870 = vmul.f32 %v1854, %v726
          %v1871 = vmul.f32 %v1855, %v708
          %v1872 = vmul.f32 %v1856, %v714
          %v1873 = vmul.f32 %v1857, %v720
          %v1874 = vmul.f32 %v1858, %v726
          %v1875 = vmul.f32 %v1859, %v708
          %v1876 = vmul.f32 %v1860, %v714
          %v1877 = vmul.f32 %v1861, %v720
          %v1878 = vmul.f32 %v1862, %v726
          %v1879 = vadd.f32 %v1863, %v1864
          %v1880 = vadd.f32 %v1879, %v1865
          %v1881 = vadd.f32 %v1880, %v1866
          %v1882 = vrot.slane %v1881, 4
          %v1883 = vadd.f32 %v1881, %v1882
          %v1884 = vrot.slane %v1883, 2
          %v1885 = vadd.f32 %v1883, %v1884
          %v1886 = vrot.slane %v1885, 1
          %v1887 = vadd.f32 %v1885, %v1886
          %v1888 = vadd.f32 %v1867, %v1868
          %v1889 = vadd.f32 %v1888, %v1869
          %v1890 = vadd.f32 %v1889, %v1870
          %v1891 = vrot.slane %v1890, 4
          %v1892 = vadd.f32 %v1890, %v1891
          %v1893 = vrot.slane %v1892, 2
          %v1894 = vadd.f32 %v1892, %v1893
          %v1895 = vrot.slane %v1894, 1
          %v1896 = vadd.f32 %v1894, %v1895
          %v1897 = vadd.f32 %v1871, %v1872
          %v1898 = vadd.f32 %v1897, %v1873
          %v1899 = vadd.f32 %v1898, %v1874
          %v1900 = vrot.slane %v1899, 4
          %v1901 = vadd.f32 %v1899, %v1900
          %v1902 = vrot.slane %v1901, 2
          %v1903 = vadd.f32 %v1901, %v1902
          %v1904 = vrot.slane %v1903, 1
          %v1905 = vadd.f32 %v1903, %v1904
          %v1906 = vadd.f32 %v1875, %v1876
          %v1907 = vadd.f32 %v1906, %v1877
          %v1908 = vadd.f32 %v1907, %v1878
          %v1909 = vrot.slane %v1908, 4
          %v1910 = vadd.f32 %v1908, %v1909
          %v1911 = vrot.slane %v1910, 2
          %v1912 = vadd.f32 %v1910, %v1911
          %v1913 = vrot.slane %v1912, 1
          %v1914 = vadd.f32 %v1912, %v1913
          %v1919 = vsel %vm1392, %v1896, %v1887
          %v1920 = vsel %vm1394, %v1905, %v1919
          %v1921 = vsel %vm1396, %v1914, %v1920
          %v1923 = vmul.f32 %v1172, %v1921
          %v1924 = vsub.f32 %v1923, %v1227
          %v1925 = vmul.f32 %v1924, 1.442695
          %v1926 = vpow.pop %v1925
          %v1927 = vsel %vm1403, %v1926, 0.0
          %v1928 = vrot.slane %v1927, 4
          %v1929 = vadd.f32 %v1927, %v1928
          %v1930 = vrot.slane %v1929, 2
          %v1931 = vadd.f32 %v1929, %v1930
          %v1932 = vrot.slane %v1931, 1
          %v1933 = vadd.f32 %v1931, %v1932
          %v1934 = vadd.f32 %v1675, %v1933
          %v1935 = vmul.f32 %v1926, %v1172
          %v1938 = vunpack.c.l.s4 1966171168
          %v1939 = vunpack.c.0.s8 %v1938
          %v1940 = vlaneseq
          %v1941 = vshrl.u32 %v1940, 7
          %v1942 = vsub.s32 %v1939, %v1941
          %v1943 = vrot.slane %v1935, %v1942
          %v1944 = vcombine.high %v1943, %v1943
          %v1946 = vunpack.c.l.s4 1966171168
          %v1947 = vunpack.c.0.s8 %v1946
          %v1948 = vlaneseq
          %v1949 = vshrl.u32 %v1948, 7
          %v1950 = vsub.s32 %v1947, %v1949
          %v1951 = vrot.slane %v1943, %v1950
          %v1953 = vunpack.c.l.s4 1966171168
          %v1954 = vunpack.c.0.s8 %v1953
          %v1955 = vlaneseq
          %v1956 = vshrl.u32 %v1955, 7
          %v1957 = vsub.s32 %v1954, %v1956
          %v1958 = vrot.slane %v1944, %v1957
          %v1959 = vcombine.high %v1951, %v1951
          %v1960 = vcombine.high %v1958, %v1958
          %v1961 = vlaneseq
          %v1962 = vshrl.u32 %v1961, 7
          %v1963 = vsub.s32 0, %v1962
          %v1964 = vrot.slane %v1951, %v1963
          %v1965 = vlaneseq
          %v1966 = vshrl.u32 %v1965, 7
          %v1967 = vsub.s32 0, %v1966
          %v1968 = vrot.slane %v1958, %v1967
          %v1969 = vlaneseq
          %v1970 = vshrl.u32 %v1969, 7
          %v1971 = vsub.s32 0, %v1970
          %v1972 = vrot.slane %v1959, %v1971
          %v1973 = vlaneseq
          %v1974 = vshrl.u32 %v1973, 7
          %v1975 = vsub.s32 0, %v1974
          %v1976 = vrot.slane %v1960, %v1975
          %v1981 = vmul.f32 %v1964, %v1847
          %v1982 = vmul.f32 %v1964, %v1848
          %v1983 = vmul.f32 %v1964, %v1849
          %v1984 = vmul.f32 %v1964, %v1850
          %v1985 = vmul.f32 %v1968, %v1851
          %v1986 = vmul.f32 %v1968, %v1852
          %v1987 = vmul.f32 %v1968, %v1853
          %v1988 = vmul.f32 %v1968, %v1854
          %v1989 = vmul.f32 %v1972, %v1855
          %v1990 = vmul.f32 %v1972, %v1856
          %v1991 = vmul.f32 %v1972, %v1857
          %v1992 = vmul.f32 %v1972, %v1858
          %v1993 = vmul.f32 %v1976, %v1859
          %v1994 = vmul.f32 %v1976, %v1860
          %v1995 = vmul.f32 %v1976, %v1861
          %v1996 = vmul.f32 %v1976, %v1862
          %v1997 = vadd.f32 %v1981, %v1985
          %v1998 = vadd.f32 %v1997, %v1989
          %v1999 = vadd.f32 %v1998, %v1993
          %v2000 = vadd.f32 %v1982, %v1986
          %v2001 = vadd.f32 %v2000, %v1990
          %v2002 = vadd.f32 %v2001, %v1994
          %v2003 = vadd.f32 %v1983, %v1987
          %v2004 = vadd.f32 %v2003, %v1991
          %v2005 = vadd.f32 %v2004, %v1995
          %v2006 = vadd.f32 %v1984, %v1988
          %v2007 = vadd.f32 %v2006, %v1992
          %v2008 = vadd.f32 %v2007, %v1996
          %v2009 = vadd.f32 %v1751, %v1999
          %v2010 = vadd.f32 %v1752, %v2002
          %v2011 = vadd.f32 %v1753, %v2005
          %v2012 = vadd.f32 %v1754, %v2008
          %v2013 = vlaneseq
          %v2014 = vshrl.u32 %v2013, 7
          %v2015 = vsub.s32 4, %v2014
          %v2016 = vrot.slane %v469, %v2015
          %2018 = vbcast.lane.b32.xlu0 %v2016, 256
          %v2019 = vpop.permute.xlu0 %2018
          %s2021 = sor.u32 256, 8
          %2022 = vbcast.lane.b32.xlu0 %v2016, %s2021
          %v2023 = vpop.permute.xlu0 %2022
          %s2025 = sor.u32 256, 16
          %2026 = vbcast.lane.b32.xlu0 %v2016, %s2025
          %v2027 = vpop.permute.xlu0 %2026
          %s2029 = sor.u32 256, 24
          %2030 = vbcast.lane.b32.xlu0 %v2016, %s2029
          %v2031 = vpop.permute.xlu0 %2030
          %v2032 = vlaneseq
          %v2033 = vshrl.u32 %v2032, 7
          %v2034 = vsub.s32 5, %v2033
          %v2035 = vrot.slane %v469, %v2034
          %2037 = vbcast.lane.b32.xlu0 %v2035, 256
          %v2038 = vpop.permute.xlu0 %2037
          %s2040 = sor.u32 256, 8
          %2041 = vbcast.lane.b32.xlu0 %v2035, %s2040
          %v2042 = vpop.permute.xlu0 %2041
          %s2044 = sor.u32 256, 16
          %2045 = vbcast.lane.b32.xlu0 %v2035, %s2044
          %v2046 = vpop.permute.xlu0 %2045
          %s2048 = sor.u32 256, 24
          %2049 = vbcast.lane.b32.xlu0 %v2035, %s2048
          %v2050 = vpop.permute.xlu0 %2049
          %v2051 = vlaneseq
          %v2052 = vshrl.u32 %v2051, 7
          %v2053 = vsub.s32 6, %v2052
          %v2054 = vrot.slane %v469, %v2053
          %2056 = vbcast.lane.b32.xlu0 %v2054, 256
          %v2057 = vpop.permute.xlu0 %2056
          %s2059 = sor.u32 256, 8
          %2060 = vbcast.lane.b32.xlu0 %v2054, %s2059
          %v2061 = vpop.permute.xlu0 %2060
          %s2063 = sor.u32 256, 16
          %2064 = vbcast.lane.b32.xlu0 %v2054, %s2063
          %v2065 = vpop.permute.xlu0 %2064
          %s2067 = sor.u32 256, 24
          %2068 = vbcast.lane.b32.xlu0 %v2054, %s2067
          %v2069 = vpop.permute.xlu0 %2068
          %v2070 = vlaneseq
          %v2071 = vshrl.u32 %v2070, 7
          %v2072 = vsub.s32 7, %v2071
          %v2073 = vrot.slane %v469, %v2072
          %2075 = vbcast.lane.b32.xlu0 %v2073, 256
          %v2076 = vpop.permute.xlu0 %2075
          %s2078 = sor.u32 256, 8
          %2079 = vbcast.lane.b32.xlu0 %v2073, %s2078
          %v2080 = vpop.permute.xlu0 %2079
          %s2082 = sor.u32 256, 16
          %2083 = vbcast.lane.b32.xlu0 %v2073, %s2082
          %v2084 = vpop.permute.xlu0 %2083
          %s2086 = sor.u32 256, 24
          %2087 = vbcast.lane.b32.xlu0 %v2073, %s2086
          %v2088 = vpop.permute.xlu0 %2087
          %v2089 = vadd.f32 %v732, %v2019
          %v2090 = vadd.f32 %v738, %v2023
          %v2091 = vadd.f32 %v744, %v2027
          %v2092 = vadd.f32 %v750, %v2031
          %v2093 = vadd.f32 %v732, %v2038
          %v2094 = vadd.f32 %v738, %v2042
          %v2095 = vadd.f32 %v744, %v2046
          %v2096 = vadd.f32 %v750, %v2050
          %v2097 = vadd.f32 %v732, %v2057
          %v2098 = vadd.f32 %v738, %v2061
          %v2099 = vadd.f32 %v744, %v2065
          %v2100 = vadd.f32 %v750, %v2069
          %v2101 = vadd.f32 %v732, %v2076
          %v2102 = vadd.f32 %v738, %v2080
          %v2103 = vadd.f32 %v744, %v2084
          %v2104 = vadd.f32 %v750, %v2088
          %v2105 = vtanh.pop %v2089
          %v2106 = vtanh.pop %v2090
          %v2107 = vtanh.pop %v2091
          %v2108 = vtanh.pop %v2092
          %v2109 = vtanh.pop %v2093
          %v2110 = vtanh.pop %v2094
          %v2111 = vtanh.pop %v2095
          %v2112 = vtanh.pop %v2096
          %v2113 = vtanh.pop %v2097
          %v2114 = vtanh.pop %v2098
          %v2115 = vtanh.pop %v2099
          %v2116 = vtanh.pop %v2100
          %v2117 = vtanh.pop %v2101
          %v2118 = vtanh.pop %v2102
          %v2119 = vtanh.pop %v2103
          %v2120 = vtanh.pop %v2104
          %v2121 = vmul.f32 %v2105, %v708
          %v2122 = vmul.f32 %v2106, %v714
          %v2123 = vmul.f32 %v2107, %v720
          %v2124 = vmul.f32 %v2108, %v726
          %v2125 = vmul.f32 %v2109, %v708
          %v2126 = vmul.f32 %v2110, %v714
          %v2127 = vmul.f32 %v2111, %v720
          %v2128 = vmul.f32 %v2112, %v726
          %v2129 = vmul.f32 %v2113, %v708
          %v2130 = vmul.f32 %v2114, %v714
          %v2131 = vmul.f32 %v2115, %v720
          %v2132 = vmul.f32 %v2116, %v726
          %v2133 = vmul.f32 %v2117, %v708
          %v2134 = vmul.f32 %v2118, %v714
          %v2135 = vmul.f32 %v2119, %v720
          %v2136 = vmul.f32 %v2120, %v726
          %v2137 = vadd.f32 %v2121, %v2122
          %v2138 = vadd.f32 %v2137, %v2123
          %v2139 = vadd.f32 %v2138, %v2124
          %v2140 = vrot.slane %v2139, 4
          %v2141 = vadd.f32 %v2139, %v2140
          %v2142 = vrot.slane %v2141, 2
          %v2143 = vadd.f32 %v2141, %v2142
          %v2144 = vrot.slane %v2143, 1
          %v2145 = vadd.f32 %v2143, %v2144
          %v2146 = vadd.f32 %v2125, %v2126
          %v2147 = vadd.f32 %v2146, %v2127
          %v2148 = vadd.f32 %v2147, %v2128
          %v2149 = vrot.slane %v2148, 4
          %v2150 = vadd.f32 %v2148, %v2149
          %v2151 = vrot.slane %v2150, 2
          %v2152 = vadd.f32 %v2150, %v2151
          %v2153 = vrot.slane %v2152, 1
          %v2154 = vadd.f32 %v2152, %v2153
          %v2155 = vadd.f32 %v2129, %v2130
          %v2156 = vadd.f32 %v2155, %v2131
          %v2157 = vadd.f32 %v2156, %v2132
          %v2158 = vrot.slane %v2157, 4
          %v2159 = vadd.f32 %v2157, %v2158
          %v2160 = vrot.slane %v2159, 2
          %v2161 = vadd.f32 %v2159, %v2160
          %v2162 = vrot.slane %v2161, 1
          %v2163 = vadd.f32 %v2161, %v2162
          %v2164 = vadd.f32 %v2133, %v2134
          %v2165 = vadd.f32 %v2164, %v2135
          %v2166 = vadd.f32 %v2165, %v2136
          %v2167 = vrot.slane %v2166, 4
          %v2168 = vadd.f32 %v2166, %v2167
          %v2169 = vrot.slane %v2168, 2
          %v2170 = vadd.f32 %v2168, %v2169
          %v2171 = vrot.slane %v2170, 1
          %v2172 = vadd.f32 %v2170, %v2171
          %v2177 = vsel %vm1654, %v2154, %v2145
          %v2178 = vsel %vm1656, %v2163, %v2177
          %v2179 = vsel %vm1658, %v2172, %v2178
          %v2181 = vmul.f32 %v1172, %v2179
          %v2182 = vsub.f32 %v2181, %v1227
          %v2183 = vmul.f32 %v2182, 1.442695
          %v2184 = vpow.pop %v2183
          %v2186 = vrot.slane %v2184, 4
          %v2188 = vsel %vm1403, %v2186, 0.0
          %v2189 = vrot.slane %v2188, 4
          %v2190 = vadd.f32 %v2188, %v2189
          %v2191 = vrot.slane %v2190, 2
          %v2192 = vadd.f32 %v2190, %v2191
          %v2193 = vrot.slane %v2192, 1
          %v2194 = vadd.f32 %v2192, %v2193
          %v2195 = vadd.f32 %v1934, %v2194
          %v2196 = vmul.f32 %v2184, %v1172
          %v2198 = vcombine.high %v2196, %v2196
          %v2200 = vunpack.c.l.s4 1966171168
          %v2201 = vunpack.c.0.s8 %v2200
          %v2202 = vlaneseq
          %v2203 = vshrl.u32 %v2202, 7
          %v2204 = vsub.s32 %v2201, %v2203
          %v2205 = vrot.slane %v2198, %v2204
          %v2206 = vcombine.high %v2205, %v2205
          %v2208 = vunpack.c.l.s4 1966171168
          %v2209 = vunpack.c.0.s8 %v2208
          %v2210 = vlaneseq
          %v2211 = vshrl.u32 %v2210, 7
          %v2212 = vsub.s32 %v2209, %v2211
          %v2213 = vrot.slane %v2205, %v2212
          %v2215 = vunpack.c.l.s4 1966171168
          %v2216 = vunpack.c.0.s8 %v2215
          %v2217 = vlaneseq
          %v2218 = vshrl.u32 %v2217, 7
          %v2219 = vsub.s32 %v2216, %v2218
          %v2220 = vrot.slane %v2206, %v2219
          %v2221 = vcombine.high %v2213, %v2213
          %v2222 = vcombine.high %v2220, %v2220
          %v2223 = vlaneseq
          %v2224 = vshrl.u32 %v2223, 7
          %v2225 = vsub.s32 0, %v2224
          %v2226 = vrot.slane %v2213, %v2225
          %v2227 = vlaneseq
          %v2228 = vshrl.u32 %v2227, 7
          %v2229 = vsub.s32 0, %v2228
          %v2230 = vrot.slane %v2220, %v2229
          %v2231 = vlaneseq
          %v2232 = vshrl.u32 %v2231, 7
          %v2233 = vsub.s32 0, %v2232
          %v2234 = vrot.slane %v2221, %v2233
          %v2235 = vlaneseq
          %v2236 = vshrl.u32 %v2235, 7
          %v2237 = vsub.s32 0, %v2236
          %v2238 = vrot.slane %v2222, %v2237
          %v2243 = vmul.f32 %v2226, %v2105
          %v2244 = vmul.f32 %v2226, %v2106
          %v2245 = vmul.f32 %v2226, %v2107
          %v2246 = vmul.f32 %v2226, %v2108
          %v2247 = vmul.f32 %v2230, %v2109
          %v2248 = vmul.f32 %v2230, %v2110
          %v2249 = vmul.f32 %v2230, %v2111
          %v2250 = vmul.f32 %v2230, %v2112
          %v2251 = vmul.f32 %v2234, %v2113
          %v2252 = vmul.f32 %v2234, %v2114
          %v2253 = vmul.f32 %v2234, %v2115
          %v2254 = vmul.f32 %v2234, %v2116
          %v2255 = vmul.f32 %v2238, %v2117
          %v2256 = vmul.f32 %v2238, %v2118
          %v2257 = vmul.f32 %v2238, %v2119
          %v2258 = vmul.f32 %v2238, %v2120
          %v2259 = vadd.f32 %v2243, %v2247
          %v2260 = vadd.f32 %v2259, %v2251
          %v2261 = vadd.f32 %v2260, %v2255
          %v2262 = vadd.f32 %v2244, %v2248
          %v2263 = vadd.f32 %v2262, %v2252
          %v2264 = vadd.f32 %v2263, %v2256
          %v2265 = vadd.f32 %v2245, %v2249
          %v2266 = vadd.f32 %v2265, %v2253
          %v2267 = vadd.f32 %v2266, %v2257
          %v2268 = vadd.f32 %v2246, %v2250
          %v2269 = vadd.f32 %v2268, %v2254
          %v2270 = vadd.f32 %v2269, %v2258
          %v2271 = vadd.f32 %v2009, %v2261
          %v2272 = vadd.f32 %v2010, %v2264
          %v2273 = vadd.f32 %v2011, %v2267
          %v2274 = vadd.f32 %v2012, %v2270
          %v2275 = vlaneseq
          %v2276 = vshrl.u32 %v2275, 7
          %v2277 = vsub.s32 0, %v2276
          %v2278 = vrot.slane %v470, %v2277
          %2280 = vbcast.lane.b32.xlu0 %v2278, 256
          %v2281 = vpop.permute.xlu0 %2280
          %s2283 = sor.u32 256, 8
          %2284 = vbcast.lane.b32.xlu0 %v2278, %s2283
          %v2285 = vpop.permute.xlu0 %2284
          %s2287 = sor.u32 256, 16
          %2288 = vbcast.lane.b32.xlu0 %v2278, %s2287
          %v2289 = vpop.permute.xlu0 %2288
          %s2291 = sor.u32 256, 24
          %2292 = vbcast.lane.b32.xlu0 %v2278, %s2291
          %v2293 = vpop.permute.xlu0 %2292
          %v2294 = vlaneseq
          %v2295 = vshrl.u32 %v2294, 7
          %v2296 = vsub.s32 1, %v2295
          %v2297 = vrot.slane %v470, %v2296
          %2299 = vbcast.lane.b32.xlu0 %v2297, 256
          %v2300 = vpop.permute.xlu0 %2299
          %s2302 = sor.u32 256, 8
          %2303 = vbcast.lane.b32.xlu0 %v2297, %s2302
          %v2304 = vpop.permute.xlu0 %2303
          %s2306 = sor.u32 256, 16
          %2307 = vbcast.lane.b32.xlu0 %v2297, %s2306
          %v2308 = vpop.permute.xlu0 %2307
          %s2310 = sor.u32 256, 24
          %2311 = vbcast.lane.b32.xlu0 %v2297, %s2310
          %v2312 = vpop.permute.xlu0 %2311
          %v2313 = vlaneseq
          %v2314 = vshrl.u32 %v2313, 7
          %v2315 = vsub.s32 2, %v2314
          %v2316 = vrot.slane %v470, %v2315
          %2318 = vbcast.lane.b32.xlu0 %v2316, 256
          %v2319 = vpop.permute.xlu0 %2318
          %s2321 = sor.u32 256, 8
          %2322 = vbcast.lane.b32.xlu0 %v2316, %s2321
          %v2323 = vpop.permute.xlu0 %2322
          %s2325 = sor.u32 256, 16
          %2326 = vbcast.lane.b32.xlu0 %v2316, %s2325
          %v2327 = vpop.permute.xlu0 %2326
          %s2329 = sor.u32 256, 24
          %2330 = vbcast.lane.b32.xlu0 %v2316, %s2329
          %v2331 = vpop.permute.xlu0 %2330
          %v2332 = vadd.f32 %v732, %v2281
          %v2333 = vadd.f32 %v738, %v2285
          %v2334 = vadd.f32 %v744, %v2289
          %v2335 = vadd.f32 %v750, %v2293
          %v2336 = vadd.f32 %v732, %v2300
          %v2337 = vadd.f32 %v738, %v2304
          %v2338 = vadd.f32 %v744, %v2308
          %v2339 = vadd.f32 %v750, %v2312
          %v2340 = vadd.f32 %v732, %v2319
          %v2341 = vadd.f32 %v738, %v2323
          %v2342 = vadd.f32 %v744, %v2327
          %v2343 = vadd.f32 %v750, %v2331
          %v2344 = vtanh.pop %v2332
          %v2345 = vtanh.pop %v2333
          %v2346 = vtanh.pop %v2334
          %v2347 = vtanh.pop %v2335
          %v2348 = vtanh.pop %v2336
          %v2349 = vtanh.pop %v2337
          %v2350 = vtanh.pop %v2338
          %v2351 = vtanh.pop %v2339
          %v2352 = vtanh.pop %v2340
          %v2353 = vtanh.pop %v2341
          %v2354 = vtanh.pop %v2342
          %v2355 = vtanh.pop %v2343
          %v2356 = vmul.f32 %v2344, %v708
          %v2357 = vmul.f32 %v2345, %v714
          %v2358 = vmul.f32 %v2346, %v720
          %v2359 = vmul.f32 %v2347, %v726
          %v2360 = vmul.f32 %v2348, %v708
          %v2361 = vmul.f32 %v2349, %v714
          %v2362 = vmul.f32 %v2350, %v720
          %v2363 = vmul.f32 %v2351, %v726
          %v2364 = vmul.f32 %v2352, %v708
          %v2365 = vmul.f32 %v2353, %v714
          %v2366 = vmul.f32 %v2354, %v720
          %v2367 = vmul.f32 %v2355, %v726
          %v2368 = vadd.f32 %v2356, %v2357
          %v2369 = vadd.f32 %v2368, %v2358
          %v2370 = vadd.f32 %v2369, %v2359
          %v2371 = vrot.slane %v2370, 4
          %v2372 = vadd.f32 %v2370, %v2371
          %v2373 = vrot.slane %v2372, 2
          %v2374 = vadd.f32 %v2372, %v2373
          %v2375 = vrot.slane %v2374, 1
          %v2376 = vadd.f32 %v2374, %v2375
          %v2377 = vadd.f32 %v2360, %v2361
          %v2378 = vadd.f32 %v2377, %v2362
          %v2379 = vadd.f32 %v2378, %v2363
          %v2380 = vrot.slane %v2379, 4
          %v2381 = vadd.f32 %v2379, %v2380
          %v2382 = vrot.slane %v2381, 2
          %v2383 = vadd.f32 %v2381, %v2382
          %v2384 = vrot.slane %v2383, 1
          %v2385 = vadd.f32 %v2383, %v2384
          %v2386 = vadd.f32 %v2364, %v2365
          %v2387 = vadd.f32 %v2386, %v2366
          %v2388 = vadd.f32 %v2387, %v2367
          %v2389 = vrot.slane %v2388, 4
          %v2390 = vadd.f32 %v2388, %v2389
          %v2391 = vrot.slane %v2390, 2
          %v2392 = vadd.f32 %v2390, %v2391
          %v2393 = vrot.slane %v2392, 1
          %v2394 = vadd.f32 %v2392, %v2393
          %v2398 = vsel %vm1392, %v2385, %v2376
          %v2399 = vsel %vm1394, %v2394, %v2398
          %v2401 = vmul.f32 %v1176, %v2399
          %v2402 = vsub.f32 %v2401, %v1227
          %v2403 = vmul.f32 %v2402, 1.442695
          %v2404 = vpow.pop %v2403
          %v2405 = vsel %vm604, %v2404, 0.0
          %v2406 = vrot.slane %v2405, 4
          %v2407 = vadd.f32 %v2405, %v2406
          %v2408 = vrot.slane %v2407, 2
          %v2409 = vadd.f32 %v2407, %v2408
          %v2410 = vrot.slane %v2409, 1
          %v2411 = vadd.f32 %v2409, %v2410
          %v2412 = vadd.f32 %v2195, %v2411
          %v2413 = vmul.f32 %v2404, %v1176
          %v2416 = vunpack.c.l.s4 1966171168
          %v2417 = vunpack.c.0.s8 %v2416
          %v2418 = vlaneseq
          %v2419 = vshrl.u32 %v2418, 7
          %v2420 = vsub.s32 %v2417, %v2419
          %v2421 = vrot.slane %v2413, %v2420
          %v2422 = vcombine.high %v2421, %v2421
          %v2424 = vunpack.c.l.s4 1966171168
          %v2425 = vunpack.c.0.s8 %v2424
          %v2426 = vlaneseq
          %v2427 = vshrl.u32 %v2426, 7
          %v2428 = vsub.s32 %v2425, %v2427
          %v2429 = vrot.slane %v2421, %v2428
          %v2431 = vunpack.c.l.s4 1966171168
          %v2432 = vunpack.c.0.s8 %v2431
          %v2433 = vlaneseq
          %v2434 = vshrl.u32 %v2433, 7
          %v2435 = vsub.s32 %v2432, %v2434
          %v2436 = vrot.slane %v2422, %v2435
          %v2437 = vcombine.high %v2429, %v2429
          %v2438 = vlaneseq
          %v2439 = vshrl.u32 %v2438, 7
          %v2440 = vsub.s32 0, %v2439
          %v2441 = vrot.slane %v2429, %v2440
          %v2442 = vlaneseq
          %v2443 = vshrl.u32 %v2442, 7
          %v2444 = vsub.s32 0, %v2443
          %v2445 = vrot.slane %v2436, %v2444
          %v2446 = vlaneseq
          %v2447 = vshrl.u32 %v2446, 7
          %v2448 = vsub.s32 0, %v2447
          %v2449 = vrot.slane %v2437, %v2448
          %v2453 = vmul.f32 %v2441, %v2344
          %v2454 = vmul.f32 %v2441, %v2345
          %v2455 = vmul.f32 %v2441, %v2346
          %v2456 = vmul.f32 %v2441, %v2347
          %v2457 = vmul.f32 %v2445, %v2348
          %v2458 = vmul.f32 %v2445, %v2349
          %v2459 = vmul.f32 %v2445, %v2350
          %v2460 = vmul.f32 %v2445, %v2351
          %v2461 = vmul.f32 %v2449, %v2352
          %v2462 = vmul.f32 %v2449, %v2353
          %v2463 = vmul.f32 %v2449, %v2354
          %v2464 = vmul.f32 %v2449, %v2355
          %v2465 = vadd.f32 %v2453, %v2457
          %v2466 = vadd.f32 %v2465, %v2461
          %v2467 = vadd.f32 %v2454, %v2458
          %v2468 = vadd.f32 %v2467, %v2462
          %v2469 = vadd.f32 %v2455, %v2459
          %v2470 = vadd.f32 %v2469, %v2463
          %v2471 = vadd.f32 %v2456, %v2460
          %v2472 = vadd.f32 %v2471, %v2464
          %v2473 = vadd.f32 %v2271, %v2466
          %v2474 = vadd.f32 %v2272, %v2468
          %v2475 = vadd.f32 %v2273, %v2470
          %v2476 = vadd.f32 %v2274, %v2472
          %v2477 = vrcp.pop %v2412
          %v2478 = vmul.f32 %v2473, %v2477
          %v2479 = vmul.f32 %v2474, %v2477
          %v2480 = vmul.f32 %v2475, %v2477
          %v2481 = vmul.f32 %v2476, %v2477
          %v2482 = vand.u32 2147483647, %v710
          %v2483 = vand.u32 2147483647, %v716
          %v2484 = vand.u32 2147483647, %v722
          %v2485 = vand.u32 2147483647, %v728
          %v2486 = vadd.f32 %v2482, %v2483
          %v2487 = vadd.f32 %v2486, %v2484
          %v2488 = vadd.f32 %v2487, %v2485
          %v2489 = vrot.slane %v2488, 4
          %v2490 = vadd.f32 %v2488, %v2489
          %v2491 = vrot.slane %v2490, 2
          %v2492 = vadd.f32 %v2490, %v2491
          %v2493 = vrot.slane %v2492, 1
          %v2494 = vadd.f32 %v2492, %v2493
          %v2495 = vsel %vm604, %v1177, -inf
          %v2496 = vmax.f32 %v1169, %v1173
          %v2497 = vmax.f32 %v2496, %v2495
          %v2498 = vrot.slane %v2497, 4
          %v2499 = vmax.f32 %v2497, %v2498
          %v2500 = vrot.slane %v2499, 2
          %v2501 = vmax.f32 %v2499, %v2500
          %v2502 = vrot.slane %v2501, 1
          %v2503 = vmax.f32 %v2501, %v2502
          %v2504 = vmul.f32 %v2494, %v2503
          %v2505 = vadd.f32 %v734, %v1234
          %v2506 = vadd.f32 %v740, %v1238
          %v2507 = vadd.f32 %v746, %v1242
          %v2508 = vadd.f32 %v752, %v1246
          %v2509 = vadd.f32 %v734, %v1253
          %v2510 = vadd.f32 %v740, %v1257
          %v2511 = vadd.f32 %v746, %v1261
          %v2512 = vadd.f32 %v752, %v1265
          %v2513 = vadd.f32 %v734, %v1272
          %v2514 = vadd.f32 %v740, %v1276
          %v2515 = vadd.f32 %v746, %v1280
          %v2516 = vadd.f32 %v752, %v1284
          %v2517 = vadd.f32 %v734, %v1291
          %v2518 = vadd.f32 %v740, %v1295
          %v2519 = vadd.f32 %v746, %v1299
          %v2520 = vadd.f32 %v752, %v1303
          %v2521 = vtanh.pop %v2505
          %v2522 = vtanh.pop %v2506
          %v2523 = vtanh.pop %v2507
          %v2524 = vtanh.pop %v2508
          %v2525 = vtanh.pop %v2509
          %v2526 = vtanh.pop %v2510
          %v2527 = vtanh.pop %v2511
          %v2528 = vtanh.pop %v2512
          %v2529 = vtanh.pop %v2513
          %v2530 = vtanh.pop %v2514
          %v2531 = vtanh.pop %v2515
          %v2532 = vtanh.pop %v2516
          %v2533 = vtanh.pop %v2517
          %v2534 = vtanh.pop %v2518
          %v2535 = vtanh.pop %v2519
          %v2536 = vtanh.pop %v2520
          %v2537 = vmul.f32 %v2521, %v710
          %v2538 = vmul.f32 %v2522, %v716
          %v2539 = vmul.f32 %v2523, %v722
          %v2540 = vmul.f32 %v2524, %v728
          %v2541 = vmul.f32 %v2525, %v710
          %v2542 = vmul.f32 %v2526, %v716
          %v2543 = vmul.f32 %v2527, %v722
          %v2544 = vmul.f32 %v2528, %v728
          %v2545 = vmul.f32 %v2529, %v710
          %v2546 = vmul.f32 %v2530, %v716
          %v2547 = vmul.f32 %v2531, %v722
          %v2548 = vmul.f32 %v2532, %v728
          %v2549 = vmul.f32 %v2533, %v710
          %v2550 = vmul.f32 %v2534, %v716
          %v2551 = vmul.f32 %v2535, %v722
          %v2552 = vmul.f32 %v2536, %v728
          %v2553 = vadd.f32 %v2537, %v2538
          %v2554 = vadd.f32 %v2553, %v2539
          %v2555 = vadd.f32 %v2554, %v2540
          %v2556 = vrot.slane %v2555, 4
          %v2557 = vadd.f32 %v2555, %v2556
          %v2558 = vrot.slane %v2557, 2
          %v2559 = vadd.f32 %v2557, %v2558
          %v2560 = vrot.slane %v2559, 1
          %v2561 = vadd.f32 %v2559, %v2560
          %v2562 = vadd.f32 %v2541, %v2542
          %v2563 = vadd.f32 %v2562, %v2543
          %v2564 = vadd.f32 %v2563, %v2544
          %v2565 = vrot.slane %v2564, 4
          %v2566 = vadd.f32 %v2564, %v2565
          %v2567 = vrot.slane %v2566, 2
          %v2568 = vadd.f32 %v2566, %v2567
          %v2569 = vrot.slane %v2568, 1
          %v2570 = vadd.f32 %v2568, %v2569
          %v2571 = vadd.f32 %v2545, %v2546
          %v2572 = vadd.f32 %v2571, %v2547
          %v2573 = vadd.f32 %v2572, %v2548
          %v2574 = vrot.slane %v2573, 4
          %v2575 = vadd.f32 %v2573, %v2574
          %v2576 = vrot.slane %v2575, 2
          %v2577 = vadd.f32 %v2575, %v2576
          %v2578 = vrot.slane %v2577, 1
          %v2579 = vadd.f32 %v2577, %v2578
          %v2580 = vadd.f32 %v2549, %v2550
          %v2581 = vadd.f32 %v2580, %v2551
          %v2582 = vadd.f32 %v2581, %v2552
          %v2583 = vrot.slane %v2582, 4
          %v2584 = vadd.f32 %v2582, %v2583
          %v2585 = vrot.slane %v2584, 2
          %v2586 = vadd.f32 %v2584, %v2585
          %v2587 = vrot.slane %v2586, 1
          %v2588 = vadd.f32 %v2586, %v2587
          %v2593 = vsel %vm1392, %v2570, %v2561
          %v2594 = vsel %vm1394, %v2579, %v2593
          %v2595 = vsel %vm1396, %v2588, %v2594
          %v2597 = vmul.f32 %v1169, %v2595
          %v2598 = vsub.f32 %v2597, %v2504
          %v2599 = vmul.f32 %v2598, 1.442695
          %v2600 = vpow.pop %v2599
          %v2601 = vsel %vm1403, %v2600, 0.0
          %v2602 = vrot.slane %v2601, 4
          %v2603 = vadd.f32 %v2601, %v2602
          %v2604 = vrot.slane %v2603, 2
          %v2605 = vadd.f32 %v2603, %v2604
          %v2606 = vrot.slane %v2605, 1
          %v2607 = vadd.f32 %v2605, %v2606
          %v2608 = vadd.f32 %v2607, 0.0
          %v2609 = vmul.f32 %v2600, %v1169
          %v2612 = vunpack.c.l.s4 1966171168
          %v2613 = vunpack.c.0.s8 %v2612
          %v2614 = vlaneseq
          %v2615 = vshrl.u32 %v2614, 7
          %v2616 = vsub.s32 %v2613, %v2615
          %v2617 = vrot.slane %v2609, %v2616
          %v2618 = vcombine.high %v2617, %v2617
          %v2620 = vunpack.c.l.s4 1966171168
          %v2621 = vunpack.c.0.s8 %v2620
          %v2622 = vlaneseq
          %v2623 = vshrl.u32 %v2622, 7
          %v2624 = vsub.s32 %v2621, %v2623
          %v2625 = vrot.slane %v2617, %v2624
          %v2627 = vunpack.c.l.s4 1966171168
          %v2628 = vunpack.c.0.s8 %v2627
          %v2629 = vlaneseq
          %v2630 = vshrl.u32 %v2629, 7
          %v2631 = vsub.s32 %v2628, %v2630
          %v2632 = vrot.slane %v2618, %v2631
          %v2633 = vcombine.high %v2625, %v2625
          %v2634 = vcombine.high %v2632, %v2632
          %v2635 = vlaneseq
          %v2636 = vshrl.u32 %v2635, 7
          %v2637 = vsub.s32 0, %v2636
          %v2638 = vrot.slane %v2625, %v2637
          %v2639 = vlaneseq
          %v2640 = vshrl.u32 %v2639, 7
          %v2641 = vsub.s32 0, %v2640
          %v2642 = vrot.slane %v2632, %v2641
          %v2643 = vlaneseq
          %v2644 = vshrl.u32 %v2643, 7
          %v2645 = vsub.s32 0, %v2644
          %v2646 = vrot.slane %v2633, %v2645
          %v2647 = vlaneseq
          %v2648 = vshrl.u32 %v2647, 7
          %v2649 = vsub.s32 0, %v2648
          %v2650 = vrot.slane %v2634, %v2649
          %v2655 = vmul.f32 %v2638, %v2521
          %v2656 = vmul.f32 %v2638, %v2522
          %v2657 = vmul.f32 %v2638, %v2523
          %v2658 = vmul.f32 %v2638, %v2524
          %v2659 = vmul.f32 %v2642, %v2525
          %v2660 = vmul.f32 %v2642, %v2526
          %v2661 = vmul.f32 %v2642, %v2527
          %v2662 = vmul.f32 %v2642, %v2528
          %v2663 = vmul.f32 %v2646, %v2529
          %v2664 = vmul.f32 %v2646, %v2530
          %v2665 = vmul.f32 %v2646, %v2531
          %v2666 = vmul.f32 %v2646, %v2532
          %v2667 = vmul.f32 %v2650, %v2533
          %v2668 = vmul.f32 %v2650, %v2534
          %v2669 = vmul.f32 %v2650, %v2535
          %v2670 = vmul.f32 %v2650, %v2536
          %v2671 = vadd.f32 %v2655, %v2659
          %v2672 = vadd.f32 %v2671, %v2663
          %v2673 = vadd.f32 %v2672, %v2667
          %v2674 = vadd.f32 %v2656, %v2660
          %v2675 = vadd.f32 %v2674, %v2664
          %v2676 = vadd.f32 %v2675, %v2668
          %v2677 = vadd.f32 %v2657, %v2661
          %v2678 = vadd.f32 %v2677, %v2665
          %v2679 = vadd.f32 %v2678, %v2669
          %v2680 = vadd.f32 %v2658, %v2662
          %v2681 = vadd.f32 %v2680, %v2666
          %v2682 = vadd.f32 %v2681, %v2670
          %v2683 = vadd.f32 %v2673, 0.0
          %v2684 = vadd.f32 %v2676, 0.0
          %v2685 = vadd.f32 %v2679, 0.0
          %v2686 = vadd.f32 %v2682, 0.0
          %v2687 = vadd.f32 %v734, %v1496
          %v2688 = vadd.f32 %v740, %v1500
          %v2689 = vadd.f32 %v746, %v1504
          %v2690 = vadd.f32 %v752, %v1508
          %v2691 = vadd.f32 %v734, %v1515
          %v2692 = vadd.f32 %v740, %v1519
          %v2693 = vadd.f32 %v746, %v1523
          %v2694 = vadd.f32 %v752, %v1527
          %v2695 = vadd.f32 %v734, %v1534
          %v2696 = vadd.f32 %v740, %v1538
          %v2697 = vadd.f32 %v746, %v1542
          %v2698 = vadd.f32 %v752, %v1546
          %v2699 = vadd.f32 %v734, %v1553
          %v2700 = vadd.f32 %v740, %v1557
          %v2701 = vadd.f32 %v746, %v1561
          %v2702 = vadd.f32 %v752, %v1565
          %v2703 = vtanh.pop %v2687
          %v2704 = vtanh.pop %v2688
          %v2705 = vtanh.pop %v2689
          %v2706 = vtanh.pop %v2690
          %v2707 = vtanh.pop %v2691
          %v2708 = vtanh.pop %v2692
          %v2709 = vtanh.pop %v2693
          %v2710 = vtanh.pop %v2694
          %v2711 = vtanh.pop %v2695
          %v2712 = vtanh.pop %v2696
          %v2713 = vtanh.pop %v2697
          %v2714 = vtanh.pop %v2698
          %v2715 = vtanh.pop %v2699
          %v2716 = vtanh.pop %v2700
          %v2717 = vtanh.pop %v2701
          %v2718 = vtanh.pop %v2702
          %v2719 = vmul.f32 %v2703, %v710
          %v2720 = vmul.f32 %v2704, %v716
          %v2721 = vmul.f32 %v2705, %v722
          %v2722 = vmul.f32 %v2706, %v728
          %v2723 = vmul.f32 %v2707, %v710
          %v2724 = vmul.f32 %v2708, %v716
          %v2725 = vmul.f32 %v2709, %v722
          %v2726 = vmul.f32 %v2710, %v728
          %v2727 = vmul.f32 %v2711, %v710
          %v2728 = vmul.f32 %v2712, %v716
          %v2729 = vmul.f32 %v2713, %v722
          %v2730 = vmul.f32 %v2714, %v728
          %v2731 = vmul.f32 %v2715, %v710
          %v2732 = vmul.f32 %v2716, %v716
          %v2733 = vmul.f32 %v2717, %v722
          %v2734 = vmul.f32 %v2718, %v728
          %v2735 = vadd.f32 %v2719, %v2720
          %v2736 = vadd.f32 %v2735, %v2721
          %v2737 = vadd.f32 %v2736, %v2722
          %v2738 = vrot.slane %v2737, 4
          %v2739 = vadd.f32 %v2737, %v2738
          %v2740 = vrot.slane %v2739, 2
          %v2741 = vadd.f32 %v2739, %v2740
          %v2742 = vrot.slane %v2741, 1
          %v2743 = vadd.f32 %v2741, %v2742
          %v2744 = vadd.f32 %v2723, %v2724
          %v2745 = vadd.f32 %v2744, %v2725
          %v2746 = vadd.f32 %v2745, %v2726
          %v2747 = vrot.slane %v2746, 4
          %v2748 = vadd.f32 %v2746, %v2747
          %v2749 = vrot.slane %v2748, 2
          %v2750 = vadd.f32 %v2748, %v2749
          %v2751 = vrot.slane %v2750, 1
          %v2752 = vadd.f32 %v2750, %v2751
          %v2753 = vadd.f32 %v2727, %v2728
          %v2754 = vadd.f32 %v2753, %v2729
          %v2755 = vadd.f32 %v2754, %v2730
          %v2756 = vrot.slane %v2755, 4
          %v2757 = vadd.f32 %v2755, %v2756
          %v2758 = vrot.slane %v2757, 2
          %v2759 = vadd.f32 %v2757, %v2758
          %v2760 = vrot.slane %v2759, 1
          %v2761 = vadd.f32 %v2759, %v2760
          %v2762 = vadd.f32 %v2731, %v2732
          %v2763 = vadd.f32 %v2762, %v2733
          %v2764 = vadd.f32 %v2763, %v2734
          %v2765 = vrot.slane %v2764, 4
          %v2766 = vadd.f32 %v2764, %v2765
          %v2767 = vrot.slane %v2766, 2
          %v2768 = vadd.f32 %v2766, %v2767
          %v2769 = vrot.slane %v2768, 1
          %v2770 = vadd.f32 %v2768, %v2769
          %v2775 = vsel %vm1654, %v2752, %v2743
          %v2776 = vsel %vm1656, %v2761, %v2775
          %v2777 = vsel %vm1658, %v2770, %v2776
          %v2779 = vmul.f32 %v1169, %v2777
          %v2780 = vsub.f32 %v2779, %v2504
          %v2781 = vmul.f32 %v2780, 1.442695
          %v2782 = vpow.pop %v2781
          %v2784 = vrot.slane %v2782, 4
          %v2786 = vsel %vm1403, %v2784, 0.0
          %v2787 = vrot.slane %v2786, 4
          %v2788 = vadd.f32 %v2786, %v2787
          %v2789 = vrot.slane %v2788, 2
          %v2790 = vadd.f32 %v2788, %v2789
          %v2791 = vrot.slane %v2790, 1
          %v2792 = vadd.f32 %v2790, %v2791
          %v2793 = vadd.f32 %v2608, %v2792
          %v2794 = vmul.f32 %v2782, %v1169
          %v2796 = vcombine.high %v2794, %v2794
          %v2798 = vunpack.c.l.s4 1966171168
          %v2799 = vunpack.c.0.s8 %v2798
          %v2800 = vlaneseq
          %v2801 = vshrl.u32 %v2800, 7
          %v2802 = vsub.s32 %v2799, %v2801
          %v2803 = vrot.slane %v2796, %v2802
          %v2804 = vcombine.high %v2803, %v2803
          %v2806 = vunpack.c.l.s4 1966171168
          %v2807 = vunpack.c.0.s8 %v2806
          %v2808 = vlaneseq
          %v2809 = vshrl.u32 %v2808, 7
          %v2810 = vsub.s32 %v2807, %v2809
          %v2811 = vrot.slane %v2803, %v2810
          %v2813 = vunpack.c.l.s4 1966171168
          %v2814 = vunpack.c.0.s8 %v2813
          %v2815 = vlaneseq
          %v2816 = vshrl.u32 %v2815, 7
          %v2817 = vsub.s32 %v2814, %v2816
          %v2818 = vrot.slane %v2804, %v2817
          %v2819 = vcombine.high %v2811, %v2811
          %v2820 = vcombine.high %v2818, %v2818
          %v2821 = vlaneseq
          %v2822 = vshrl.u32 %v2821, 7
          %v2823 = vsub.s32 0, %v2822
          %v2824 = vrot.slane %v2811, %v2823
          %v2825 = vlaneseq
          %v2826 = vshrl.u32 %v2825, 7
          %v2827 = vsub.s32 0, %v2826
          %v2828 = vrot.slane %v2818, %v2827
          %v2829 = vlaneseq
          %v2830 = vshrl.u32 %v2829, 7
          %v2831 = vsub.s32 0, %v2830
          %v2832 = vrot.slane %v2819, %v2831
          %v2833 = vlaneseq
          %v2834 = vshrl.u32 %v2833, 7
          %v2835 = vsub.s32 0, %v2834
          %v2836 = vrot.slane %v2820, %v2835
          %v2841 = vmul.f32 %v2824, %v2703
          %v2842 = vmul.f32 %v2824, %v2704
          %v2843 = vmul.f32 %v2824, %v2705
          %v2844 = vmul.f32 %v2824, %v2706
          %v2845 = vmul.f32 %v2828, %v2707
          %v2846 = vmul.f32 %v2828, %v2708
          %v2847 = vmul.f32 %v2828, %v2709
          %v2848 = vmul.f32 %v2828, %v2710
          %v2849 = vmul.f32 %v2832, %v2711
          %v2850 = vmul.f32 %v2832, %v2712
          %v2851 = vmul.f32 %v2832, %v2713
          %v2852 = vmul.f32 %v2832, %v2714
          %v2853 = vmul.f32 %v2836, %v2715
          %v2854 = vmul.f32 %v2836, %v2716
          %v2855 = vmul.f32 %v2836, %v2717
          %v2856 = vmul.f32 %v2836, %v2718
          %v2857 = vadd.f32 %v2841, %v2845
          %v2858 = vadd.f32 %v2857, %v2849
          %v2859 = vadd.f32 %v2858, %v2853
          %v2860 = vadd.f32 %v2842, %v2846
          %v2861 = vadd.f32 %v2860, %v2850
          %v2862 = vadd.f32 %v2861, %v2854
          %v2863 = vadd.f32 %v2843, %v2847
          %v2864 = vadd.f32 %v2863, %v2851
          %v2865 = vadd.f32 %v2864, %v2855
          %v2866 = vadd.f32 %v2844, %v2848
          %v2867 = vadd.f32 %v2866, %v2852
          %v2868 = vadd.f32 %v2867, %v2856
          %v2869 = vadd.f32 %v2683, %v2859
          %v2870 = vadd.f32 %v2684, %v2862
          %v2871 = vadd.f32 %v2685, %v2865
          %v2872 = vadd.f32 %v2686, %v2868
          %v2873 = vadd.f32 %v734, %v1761
          %v2874 = vadd.f32 %v740, %v1765
          %v2875 = vadd.f32 %v746, %v1769
          %v2876 = vadd.f32 %v752, %v1773
          %v2877 = vadd.f32 %v734, %v1780
          %v2878 = vadd.f32 %v740, %v1784
          %v2879 = vadd.f32 %v746, %v1788
          %v2880 = vadd.f32 %v752, %v1792
          %v2881 = vadd.f32 %v734, %v1799
          %v2882 = vadd.f32 %v740, %v1803
          %v2883 = vadd.f32 %v746, %v1807
          %v2884 = vadd.f32 %v752, %v1811
          %v2885 = vadd.f32 %v734, %v1818
          %v2886 = vadd.f32 %v740, %v1822
          %v2887 = vadd.f32 %v746, %v1826
          %v2888 = vadd.f32 %v752, %v1830
          %v2889 = vtanh.pop %v2873
          %v2890 = vtanh.pop %v2874
          %v2891 = vtanh.pop %v2875
          %v2892 = vtanh.pop %v2876
          %v2893 = vtanh.pop %v2877
          %v2894 = vtanh.pop %v2878
          %v2895 = vtanh.pop %v2879
          %v2896 = vtanh.pop %v2880
          %v2897 = vtanh.pop %v2881
          %v2898 = vtanh.pop %v2882
          %v2899 = vtanh.pop %v2883
          %v2900 = vtanh.pop %v2884
          %v2901 = vtanh.pop %v2885
          %v2902 = vtanh.pop %v2886
          %v2903 = vtanh.pop %v2887
          %v2904 = vtanh.pop %v2888
          %v2905 = vmul.f32 %v2889, %v710
          %v2906 = vmul.f32 %v2890, %v716
          %v2907 = vmul.f32 %v2891, %v722
          %v2908 = vmul.f32 %v2892, %v728
          %v2909 = vmul.f32 %v2893, %v710
          %v2910 = vmul.f32 %v2894, %v716
          %v2911 = vmul.f32 %v2895, %v722
          %v2912 = vmul.f32 %v2896, %v728
          %v2913 = vmul.f32 %v2897, %v710
          %v2914 = vmul.f32 %v2898, %v716
          %v2915 = vmul.f32 %v2899, %v722
          %v2916 = vmul.f32 %v2900, %v728
          %v2917 = vmul.f32 %v2901, %v710
          %v2918 = vmul.f32 %v2902, %v716
          %v2919 = vmul.f32 %v2903, %v722
          %v2920 = vmul.f32 %v2904, %v728
          %v2921 = vadd.f32 %v2905, %v2906
          %v2922 = vadd.f32 %v2921, %v2907
          %v2923 = vadd.f32 %v2922, %v2908
          %v2924 = vrot.slane %v2923, 4
          %v2925 = vadd.f32 %v2923, %v2924
          %v2926 = vrot.slane %v2925, 2
          %v2927 = vadd.f32 %v2925, %v2926
          %v2928 = vrot.slane %v2927, 1
          %v2929 = vadd.f32 %v2927, %v2928
          %v2930 = vadd.f32 %v2909, %v2910
          %v2931 = vadd.f32 %v2930, %v2911
          %v2932 = vadd.f32 %v2931, %v2912
          %v2933 = vrot.slane %v2932, 4
          %v2934 = vadd.f32 %v2932, %v2933
          %v2935 = vrot.slane %v2934, 2
          %v2936 = vadd.f32 %v2934, %v2935
          %v2937 = vrot.slane %v2936, 1
          %v2938 = vadd.f32 %v2936, %v2937
          %v2939 = vadd.f32 %v2913, %v2914
          %v2940 = vadd.f32 %v2939, %v2915
          %v2941 = vadd.f32 %v2940, %v2916
          %v2942 = vrot.slane %v2941, 4
          %v2943 = vadd.f32 %v2941, %v2942
          %v2944 = vrot.slane %v2943, 2
          %v2945 = vadd.f32 %v2943, %v2944
          %v2946 = vrot.slane %v2945, 1
          %v2947 = vadd.f32 %v2945, %v2946
          %v2948 = vadd.f32 %v2917, %v2918
          %v2949 = vadd.f32 %v2948, %v2919
          %v2950 = vadd.f32 %v2949, %v2920
          %v2951 = vrot.slane %v2950, 4
          %v2952 = vadd.f32 %v2950, %v2951
          %v2953 = vrot.slane %v2952, 2
          %v2954 = vadd.f32 %v2952, %v2953
          %v2955 = vrot.slane %v2954, 1
          %v2956 = vadd.f32 %v2954, %v2955
          %v2961 = vsel %vm1392, %v2938, %v2929
          %v2962 = vsel %vm1394, %v2947, %v2961
          %v2963 = vsel %vm1396, %v2956, %v2962
          %v2965 = vmul.f32 %v1173, %v2963
          %v2966 = vsub.f32 %v2965, %v2504
          %v2967 = vmul.f32 %v2966, 1.442695
          %v2968 = vpow.pop %v2967
          %v2969 = vsel %vm1403, %v2968, 0.0
          %v2970 = vrot.slane %v2969, 4
          %v2971 = vadd.f32 %v2969, %v2970
          %v2972 = vrot.slane %v2971, 2
          %v2973 = vadd.f32 %v2971, %v2972
          %v2974 = vrot.slane %v2973, 1
          %v2975 = vadd.f32 %v2973, %v2974
          %v2976 = vadd.f32 %v2793, %v2975
          %v2977 = vmul.f32 %v2968, %v1173
          %v2980 = vunpack.c.l.s4 1966171168
          %v2981 = vunpack.c.0.s8 %v2980
          %v2982 = vlaneseq
          %v2983 = vshrl.u32 %v2982, 7
          %v2984 = vsub.s32 %v2981, %v2983
          %v2985 = vrot.slane %v2977, %v2984
          %v2986 = vcombine.high %v2985, %v2985
          %v2988 = vunpack.c.l.s4 1966171168
          %v2989 = vunpack.c.0.s8 %v2988
          %v2990 = vlaneseq
          %v2991 = vshrl.u32 %v2990, 7
          %v2992 = vsub.s32 %v2989, %v2991
          %v2993 = vrot.slane %v2985, %v2992
          %v2995 = vunpack.c.l.s4 1966171168
          %v2996 = vunpack.c.0.s8 %v2995
          %v2997 = vlaneseq
          %v2998 = vshrl.u32 %v2997, 7
          %v2999 = vsub.s32 %v2996, %v2998
          %v3000 = vrot.slane %v2986, %v2999
          %v3001 = vcombine.high %v2993, %v2993
          %v3002 = vcombine.high %v3000, %v3000
          %v3003 = vlaneseq
          %v3004 = vshrl.u32 %v3003, 7
          %v3005 = vsub.s32 0, %v3004
          %v3006 = vrot.slane %v2993, %v3005
          %v3007 = vlaneseq
          %v3008 = vshrl.u32 %v3007, 7
          %v3009 = vsub.s32 0, %v3008
          %v3010 = vrot.slane %v3000, %v3009
          %v3011 = vlaneseq
          %v3012 = vshrl.u32 %v3011, 7
          %v3013 = vsub.s32 0, %v3012
          %v3014 = vrot.slane %v3001, %v3013
          %v3015 = vlaneseq
          %v3016 = vshrl.u32 %v3015, 7
          %v3017 = vsub.s32 0, %v3016
          %v3018 = vrot.slane %v3002, %v3017
          %v3023 = vmul.f32 %v3006, %v2889
          %v3024 = vmul.f32 %v3006, %v2890
          %v3025 = vmul.f32 %v3006, %v2891
          %v3026 = vmul.f32 %v3006, %v2892
          %v3027 = vmul.f32 %v3010, %v2893
          %v3028 = vmul.f32 %v3010, %v2894
          %v3029 = vmul.f32 %v3010, %v2895
          %v3030 = vmul.f32 %v3010, %v2896
          %v3031 = vmul.f32 %v3014, %v2897
          %v3032 = vmul.f32 %v3014, %v2898
          %v3033 = vmul.f32 %v3014, %v2899
          %v3034 = vmul.f32 %v3014, %v2900
          %v3035 = vmul.f32 %v3018, %v2901
          %v3036 = vmul.f32 %v3018, %v2902
          %v3037 = vmul.f32 %v3018, %v2903
          %v3038 = vmul.f32 %v3018, %v2904
          %v3039 = vadd.f32 %v3023, %v3027
          %v3040 = vadd.f32 %v3039, %v3031
          %v3041 = vadd.f32 %v3040, %v3035
          %v3042 = vadd.f32 %v3024, %v3028
          %v3043 = vadd.f32 %v3042, %v3032
          %v3044 = vadd.f32 %v3043, %v3036
          %v3045 = vadd.f32 %v3025, %v3029
          %v3046 = vadd.f32 %v3045, %v3033
          %v3047 = vadd.f32 %v3046, %v3037
          %v3048 = vadd.f32 %v3026, %v3030
          %v3049 = vadd.f32 %v3048, %v3034
          %v3050 = vadd.f32 %v3049, %v3038
          %v3051 = vadd.f32 %v2869, %v3041
          %v3052 = vadd.f32 %v2870, %v3044
          %v3053 = vadd.f32 %v2871, %v3047
          %v3054 = vadd.f32 %v2872, %v3050
          %v3055 = vadd.f32 %v734, %v2019
          %v3056 = vadd.f32 %v740, %v2023
          %v3057 = vadd.f32 %v746, %v2027
          %v3058 = vadd.f32 %v752, %v2031
          %v3059 = vadd.f32 %v734, %v2038
          %v3060 = vadd.f32 %v740, %v2042
          %v3061 = vadd.f32 %v746, %v2046
          %v3062 = vadd.f32 %v752, %v2050
          %v3063 = vadd.f32 %v734, %v2057
          %v3064 = vadd.f32 %v740, %v2061
          %v3065 = vadd.f32 %v746, %v2065
          %v3066 = vadd.f32 %v752, %v2069
          %v3067 = vadd.f32 %v734, %v2076
          %v3068 = vadd.f32 %v740, %v2080
          %v3069 = vadd.f32 %v746, %v2084
          %v3070 = vadd.f32 %v752, %v2088
          %v3071 = vtanh.pop %v3055
          %v3072 = vtanh.pop %v3056
          %v3073 = vtanh.pop %v3057
          %v3074 = vtanh.pop %v3058
          %v3075 = vtanh.pop %v3059
          %v3076 = vtanh.pop %v3060
          %v3077 = vtanh.pop %v3061
          %v3078 = vtanh.pop %v3062
          %v3079 = vtanh.pop %v3063
          %v3080 = vtanh.pop %v3064
          %v3081 = vtanh.pop %v3065
          %v3082 = vtanh.pop %v3066
          %v3083 = vtanh.pop %v3067
          %v3084 = vtanh.pop %v3068
          %v3085 = vtanh.pop %v3069
          %v3086 = vtanh.pop %v3070
          %v3087 = vmul.f32 %v3071, %v710
          %v3088 = vmul.f32 %v3072, %v716
          %v3089 = vmul.f32 %v3073, %v722
          %v3090 = vmul.f32 %v3074, %v728
          %v3091 = vmul.f32 %v3075, %v710
          %v3092 = vmul.f32 %v3076, %v716
          %v3093 = vmul.f32 %v3077, %v722
          %v3094 = vmul.f32 %v3078, %v728
          %v3095 = vmul.f32 %v3079, %v710
          %v3096 = vmul.f32 %v3080, %v716
          %v3097 = vmul.f32 %v3081, %v722
          %v3098 = vmul.f32 %v3082, %v728
          %v3099 = vmul.f32 %v3083, %v710
          %v3100 = vmul.f32 %v3084, %v716
          %v3101 = vmul.f32 %v3085, %v722
          %v3102 = vmul.f32 %v3086, %v728
          %v3103 = vadd.f32 %v3087, %v3088
          %v3104 = vadd.f32 %v3103, %v3089
          %v3105 = vadd.f32 %v3104, %v3090
          %v3106 = vrot.slane %v3105, 4
          %v3107 = vadd.f32 %v3105, %v3106
          %v3108 = vrot.slane %v3107, 2
          %v3109 = vadd.f32 %v3107, %v3108
          %v3110 = vrot.slane %v3109, 1
          %v3111 = vadd.f32 %v3109, %v3110
          %v3112 = vadd.f32 %v3091, %v3092
          %v3113 = vadd.f32 %v3112, %v3093
          %v3114 = vadd.f32 %v3113, %v3094
          %v3115 = vrot.slane %v3114, 4
          %v3116 = vadd.f32 %v3114, %v3115
          %v3117 = vrot.slane %v3116, 2
          %v3118 = vadd.f32 %v3116, %v3117
          %v3119 = vrot.slane %v3118, 1
          %v3120 = vadd.f32 %v3118, %v3119
          %v3121 = vadd.f32 %v3095, %v3096
          %v3122 = vadd.f32 %v3121, %v3097
          %v3123 = vadd.f32 %v3122, %v3098
          %v3124 = vrot.slane %v3123, 4
          %v3125 = vadd.f32 %v3123, %v3124
          %v3126 = vrot.slane %v3125, 2
          %v3127 = vadd.f32 %v3125, %v3126
          %v3128 = vrot.slane %v3127, 1
          %v3129 = vadd.f32 %v3127, %v3128
          %v3130 = vadd.f32 %v3099, %v3100
          %v3131 = vadd.f32 %v3130, %v3101
          %v3132 = vadd.f32 %v3131, %v3102
          %v3133 = vrot.slane %v3132, 4
          %v3134 = vadd.f32 %v3132, %v3133
          %v3135 = vrot.slane %v3134, 2
          %v3136 = vadd.f32 %v3134, %v3135
          %v3137 = vrot.slane %v3136, 1
          %v3138 = vadd.f32 %v3136, %v3137
          %v3143 = vsel %vm1654, %v3120, %v3111
          %v3144 = vsel %vm1656, %v3129, %v3143
          %v3145 = vsel %vm1658, %v3138, %v3144
          %v3147 = vmul.f32 %v1173, %v3145
          %v3148 = vsub.f32 %v3147, %v2504
          %v3149 = vmul.f32 %v3148, 1.442695
          %v3150 = vpow.pop %v3149
          %v3152 = vrot.slane %v3150, 4
          %v3154 = vsel %vm1403, %v3152, 0.0
          %v3155 = vrot.slane %v3154, 4
          %v3156 = vadd.f32 %v3154, %v3155
          %v3157 = vrot.slane %v3156, 2
          %v3158 = vadd.f32 %v3156, %v3157
          %v3159 = vrot.slane %v3158, 1
          %v3160 = vadd.f32 %v3158, %v3159
          %v3161 = vadd.f32 %v2976, %v3160
          %v3162 = vmul.f32 %v3150, %v1173
          %v3164 = vcombine.high %v3162, %v3162
          %v3166 = vunpack.c.l.s4 1966171168
          %v3167 = vunpack.c.0.s8 %v3166
          %v3168 = vlaneseq
          %v3169 = vshrl.u32 %v3168, 7
          %v3170 = vsub.s32 %v3167, %v3169
          %v3171 = vrot.slane %v3164, %v3170
          %v3172 = vcombine.high %v3171, %v3171
          %v3174 = vunpack.c.l.s4 1966171168
          %v3175 = vunpack.c.0.s8 %v3174
          %v3176 = vlaneseq
          %v3177 = vshrl.u32 %v3176, 7
          %v3178 = vsub.s32 %v3175, %v3177
          %v3179 = vrot.slane %v3171, %v3178
          %v3181 = vunpack.c.l.s4 1966171168
          %v3182 = vunpack.c.0.s8 %v3181
          %v3183 = vlaneseq
          %v3184 = vshrl.u32 %v3183, 7
          %v3185 = vsub.s32 %v3182, %v3184
          %v3186 = vrot.slane %v3172, %v3185
          %v3187 = vcombine.high %v3179, %v3179
          %v3188 = vcombine.high %v3186, %v3186
          %v3189 = vlaneseq
          %v3190 = vshrl.u32 %v3189, 7
          %v3191 = vsub.s32 0, %v3190
          %v3192 = vrot.slane %v3179, %v3191
          %v3193 = vlaneseq
          %v3194 = vshrl.u32 %v3193, 7
          %v3195 = vsub.s32 0, %v3194
          %v3196 = vrot.slane %v3186, %v3195
          %v3197 = vlaneseq
          %v3198 = vshrl.u32 %v3197, 7
          %v3199 = vsub.s32 0, %v3198
          %v3200 = vrot.slane %v3187, %v3199
          %v3201 = vlaneseq
          %v3202 = vshrl.u32 %v3201, 7
          %v3203 = vsub.s32 0, %v3202
          %v3204 = vrot.slane %v3188, %v3203
          %v3209 = vmul.f32 %v3192, %v3071
          %v3210 = vmul.f32 %v3192, %v3072
          %v3211 = vmul.f32 %v3192, %v3073
          %v3212 = vmul.f32 %v3192, %v3074
          %v3213 = vmul.f32 %v3196, %v3075
          %v3214 = vmul.f32 %v3196, %v3076
          %v3215 = vmul.f32 %v3196, %v3077
          %v3216 = vmul.f32 %v3196, %v3078
          %v3217 = vmul.f32 %v3200, %v3079
          %v3218 = vmul.f32 %v3200, %v3080
          %v3219 = vmul.f32 %v3200, %v3081
          %v3220 = vmul.f32 %v3200, %v3082
          %v3221 = vmul.f32 %v3204, %v3083
          %v3222 = vmul.f32 %v3204, %v3084
          %v3223 = vmul.f32 %v3204, %v3085
          %v3224 = vmul.f32 %v3204, %v3086
          %v3225 = vadd.f32 %v3209, %v3213
          %v3226 = vadd.f32 %v3225, %v3217
          %v3227 = vadd.f32 %v3226, %v3221
          %v3228 = vadd.f32 %v3210, %v3214
          %v3229 = vadd.f32 %v3228, %v3218
          %v3230 = vadd.f32 %v3229, %v3222
          %v3231 = vadd.f32 %v3211, %v3215
          %v3232 = vadd.f32 %v3231, %v3219
          %v3233 = vadd.f32 %v3232, %v3223
          %v3234 = vadd.f32 %v3212, %v3216
          %v3235 = vadd.f32 %v3234, %v3220
          %v3236 = vadd.f32 %v3235, %v3224
          %v3237 = vadd.f32 %v3051, %v3227
          %v3238 = vadd.f32 %v3052, %v3230
          %v3239 = vadd.f32 %v3053, %v3233
          %v3240 = vadd.f32 %v3054, %v3236
          %v3241 = vadd.f32 %v734, %v2281
          %v3242 = vadd.f32 %v740, %v2285
          %v3243 = vadd.f32 %v746, %v2289
          %v3244 = vadd.f32 %v752, %v2293
          %v3245 = vadd.f32 %v734, %v2300
          %v3246 = vadd.f32 %v740, %v2304
          %v3247 = vadd.f32 %v746, %v2308
          %v3248 = vadd.f32 %v752, %v2312
          %v3249 = vadd.f32 %v734, %v2319
          %v3250 = vadd.f32 %v740, %v2323
          %v3251 = vadd.f32 %v746, %v2327
          %v3252 = vadd.f32 %v752, %v2331
          %v3253 = vtanh.pop %v3241
          %v3254 = vtanh.pop %v3242
          %v3255 = vtanh.pop %v3243
          %v3256 = vtanh.pop %v3244
          %v3257 = vtanh.pop %v3245
          %v3258 = vtanh.pop %v3246
          %v3259 = vtanh.pop %v3247
          %v3260 = vtanh.pop %v3248
          %v3261 = vtanh.pop %v3249
          %v3262 = vtanh.pop %v3250
          %v3263 = vtanh.pop %v3251
          %v3264 = vtanh.pop %v3252
          %v3265 = vmul.f32 %v3253, %v710
          %v3266 = vmul.f32 %v3254, %v716
          %v3267 = vmul.f32 %v3255, %v722
          %v3268 = vmul.f32 %v3256, %v728
          %v3269 = vmul.f32 %v3257, %v710
          %v3270 = vmul.f32 %v3258, %v716
          %v3271 = vmul.f32 %v3259, %v722
          %v3272 = vmul.f32 %v3260, %v728
          %v3273 = vmul.f32 %v3261, %v710
          %v3274 = vmul.f32 %v3262, %v716
          %v3275 = vmul.f32 %v3263, %v722
          %v3276 = vmul.f32 %v3264, %v728
          %v3277 = vadd.f32 %v3265, %v3266
          %v3278 = vadd.f32 %v3277, %v3267
          %v3279 = vadd.f32 %v3278, %v3268
          %v3280 = vrot.slane %v3279, 4
          %v3281 = vadd.f32 %v3279, %v3280
          %v3282 = vrot.slane %v3281, 2
          %v3283 = vadd.f32 %v3281, %v3282
          %v3284 = vrot.slane %v3283, 1
          %v3285 = vadd.f32 %v3283, %v3284
          %v3286 = vadd.f32 %v3269, %v3270
          %v3287 = vadd.f32 %v3286, %v3271
          %v3288 = vadd.f32 %v3287, %v3272
          %v3289 = vrot.slane %v3288, 4
          %v3290 = vadd.f32 %v3288, %v3289
          %v3291 = vrot.slane %v3290, 2
          %v3292 = vadd.f32 %v3290, %v3291
          %v3293 = vrot.slane %v3292, 1
          %v3294 = vadd.f32 %v3292, %v3293
          %v3295 = vadd.f32 %v3273, %v3274
          %v3296 = vadd.f32 %v3295, %v3275
          %v3297 = vadd.f32 %v3296, %v3276
          %v3298 = vrot.slane %v3297, 4
          %v3299 = vadd.f32 %v3297, %v3298
          %v3300 = vrot.slane %v3299, 2
          %v3301 = vadd.f32 %v3299, %v3300
          %v3302 = vrot.slane %v3301, 1
          %v3303 = vadd.f32 %v3301, %v3302
          %v3307 = vsel %vm1392, %v3294, %v3285
          %v3308 = vsel %vm1394, %v3303, %v3307
          %v3310 = vmul.f32 %v1177, %v3308
          %v3311 = vsub.f32 %v3310, %v2504
          %v3312 = vmul.f32 %v3311, 1.442695
          %v3313 = vpow.pop %v3312
          %v3314 = vsel %vm604, %v3313, 0.0
          %v3315 = vrot.slane %v3314, 4
          %v3316 = vadd.f32 %v3314, %v3315
          %v3317 = vrot.slane %v3316, 2
          %v3318 = vadd.f32 %v3316, %v3317
          %v3319 = vrot.slane %v3318, 1
          %v3320 = vadd.f32 %v3318, %v3319
          %v3321 = vadd.f32 %v3161, %v3320
          %v3322 = vmul.f32 %v3313, %v1177
          %v3325 = vunpack.c.l.s4 1966171168
          %v3326 = vunpack.c.0.s8 %v3325
          %v3327 = vlaneseq
          %v3328 = vshrl.u32 %v3327, 7
          %v3329 = vsub.s32 %v3326, %v3328
          %v3330 = vrot.slane %v3322, %v3329
          %v3331 = vcombine.high %v3330, %v3330
          %v3333 = vunpack.c.l.s4 1966171168
          %v3334 = vunpack.c.0.s8 %v3333
          %v3335 = vlaneseq
          %v3336 = vshrl.u32 %v3335, 7
          %v3337 = vsub.s32 %v3334, %v3336
          %v3338 = vrot.slane %v3330, %v3337
          %v3340 = vunpack.c.l.s4 1966171168
          %v3341 = vunpack.c.0.s8 %v3340
          %v3342 = vlaneseq
          %v3343 = vshrl.u32 %v3342, 7
          %v3344 = vsub.s32 %v3341, %v3343
          %v3345 = vrot.slane %v3331, %v3344
          %v3346 = vcombine.high %v3338, %v3338
          %v3347 = vlaneseq
          %v3348 = vshrl.u32 %v3347, 7
          %v3349 = vsub.s32 0, %v3348
          %v3350 = vrot.slane %v3338, %v3349
          %v3351 = vlaneseq
          %v3352 = vshrl.u32 %v3351, 7
          %v3353 = vsub.s32 0, %v3352
          %v3354 = vrot.slane %v3345, %v3353
          %v3355 = vlaneseq
          %v3356 = vshrl.u32 %v3355, 7
          %v3357 = vsub.s32 0, %v3356
          %v3358 = vrot.slane %v3346, %v3357
          %v3362 = vmul.f32 %v3350, %v3253
          %v3363 = vmul.f32 %v3350, %v3254
          %v3364 = vmul.f32 %v3350, %v3255
          %v3365 = vmul.f32 %v3350, %v3256
          %v3366 = vmul.f32 %v3354, %v3257
          %v3367 = vmul.f32 %v3354, %v3258
          %v3368 = vmul.f32 %v3354, %v3259
          %v3369 = vmul.f32 %v3354, %v3260
          %v3370 = vmul.f32 %v3358, %v3261
          %v3371 = vmul.f32 %v3358, %v3262
          %v3372 = vmul.f32 %v3358, %v3263
          %v3373 = vmul.f32 %v3358, %v3264
          %v3374 = vadd.f32 %v3362, %v3366
          %v3375 = vadd.f32 %v3374, %v3370
          %v3376 = vadd.f32 %v3363, %v3367
          %v3377 = vadd.f32 %v3376, %v3371
          %v3378 = vadd.f32 %v3364, %v3368
          %v3379 = vadd.f32 %v3378, %v3372
          %v3380 = vadd.f32 %v3365, %v3369
          %v3381 = vadd.f32 %v3380, %v3373
          %v3382 = vadd.f32 %v3237, %v3375
          %v3383 = vadd.f32 %v3238, %v3377
          %v3384 = vadd.f32 %v3239, %v3379
          %v3385 = vadd.f32 %v3240, %v3381
          %v3386 = vrcp.pop %v3321
          %v3387 = vmul.f32 %v3382, %v3386
          %v3388 = vmul.f32 %v3383, %v3386
          %v3389 = vmul.f32 %v3384, %v3386
          %v3390 = vmul.f32 %v3385, %v3386
          %v3391 = vand.u32 2147483647, %v863
          %v3392 = vand.u32 2147483647, %v869
          %v3393 = vand.u32 2147483647, %v875
          %v3394 = vand.u32 2147483647, %v881
          %v3395 = vadd.f32 %v3391, %v3392
          %v3396 = vadd.f32 %v3395, %v3393
          %v3397 = vadd.f32 %v3396, %v3394
          %v3398 = vrot.slane %v3397, 4
          %v3399 = vadd.f32 %v3397, %v3398
          %v3400 = vrot.slane %v3399, 2
          %v3401 = vadd.f32 %v3399, %v3400
          %v3402 = vrot.slane %v3401, 1
          %v3403 = vadd.f32 %v3401, %v3402
          %v3404 = vsel %vm604, %v1178, -inf
          %v3405 = vmax.f32 %v1170, %v1174
          %v3406 = vmax.f32 %v3405, %v3404
          %v3407 = vrot.slane %v3406, 4
          %v3408 = vmax.f32 %v3406, %v3407
          %v3409 = vrot.slane %v3408, 2
          %v3410 = vmax.f32 %v3408, %v3409
          %v3411 = vrot.slane %v3410, 1
          %v3412 = vmax.f32 %v3410, %v3411
          %v3413 = vmul.f32 %v3403, %v3412
          %v3414 = vadd.f32 %v887, %v1234
          %v3415 = vadd.f32 %v893, %v1238
          %v3416 = vadd.f32 %v899, %v1242
          %v3417 = vadd.f32 %v905, %v1246
          %v3418 = vadd.f32 %v887, %v1253
          %v3419 = vadd.f32 %v893, %v1257
          %v3420 = vadd.f32 %v899, %v1261
          %v3421 = vadd.f32 %v905, %v1265
          %v3422 = vadd.f32 %v887, %v1272
          %v3423 = vadd.f32 %v893, %v1276
          %v3424 = vadd.f32 %v899, %v1280
          %v3425 = vadd.f32 %v905, %v1284
          %v3426 = vadd.f32 %v887, %v1291
          %v3427 = vadd.f32 %v893, %v1295
          %v3428 = vadd.f32 %v899, %v1299
          %v3429 = vadd.f32 %v905, %v1303
          %v3430 = vtanh.pop %v3414
          %v3431 = vtanh.pop %v3415
          %v3432 = vtanh.pop %v3416
          %v3433 = vtanh.pop %v3417
          %v3434 = vtanh.pop %v3418
          %v3435 = vtanh.pop %v3419
          %v3436 = vtanh.pop %v3420
          %v3437 = vtanh.pop %v3421
          %v3438 = vtanh.pop %v3422
          %v3439 = vtanh.pop %v3423
          %v3440 = vtanh.pop %v3424
          %v3441 = vtanh.pop %v3425
          %v3442 = vtanh.pop %v3426
          %v3443 = vtanh.pop %v3427
          %v3444 = vtanh.pop %v3428
          %v3445 = vtanh.pop %v3429
          %v3446 = vmul.f32 %v3430, %v863
          %v3447 = vmul.f32 %v3431, %v869
          %v3448 = vmul.f32 %v3432, %v875
          %v3449 = vmul.f32 %v3433, %v881
          %v3450 = vmul.f32 %v3434, %v863
          %v3451 = vmul.f32 %v3435, %v869
          %v3452 = vmul.f32 %v3436, %v875
          %v3453 = vmul.f32 %v3437, %v881
          %v3454 = vmul.f32 %v3438, %v863
          %v3455 = vmul.f32 %v3439, %v869
          %v3456 = vmul.f32 %v3440, %v875
          %v3457 = vmul.f32 %v3441, %v881
          %v3458 = vmul.f32 %v3442, %v863
          %v3459 = vmul.f32 %v3443, %v869
          %v3460 = vmul.f32 %v3444, %v875
          %v3461 = vmul.f32 %v3445, %v881
          %v3462 = vadd.f32 %v3446, %v3447
          %v3463 = vadd.f32 %v3462, %v3448
          %v3464 = vadd.f32 %v3463, %v3449
          %v3465 = vrot.slane %v3464, 4
          %v3466 = vadd.f32 %v3464, %v3465
          %v3467 = vrot.slane %v3466, 2
          %v3468 = vadd.f32 %v3466, %v3467
          %v3469 = vrot.slane %v3468, 1
          %v3470 = vadd.f32 %v3468, %v3469
          %v3471 = vadd.f32 %v3450, %v3451
          %v3472 = vadd.f32 %v3471, %v3452
          %v3473 = vadd.f32 %v3472, %v3453
          %v3474 = vrot.slane %v3473, 4
          %v3475 = vadd.f32 %v3473, %v3474
          %v3476 = vrot.slane %v3475, 2
          %v3477 = vadd.f32 %v3475, %v3476
          %v3478 = vrot.slane %v3477, 1
          %v3479 = vadd.f32 %v3477, %v3478
          %v3480 = vadd.f32 %v3454, %v3455
          %v3481 = vadd.f32 %v3480, %v3456
          %v3482 = vadd.f32 %v3481, %v3457
          %v3483 = vrot.slane %v3482, 4
          %v3484 = vadd.f32 %v3482, %v3483
          %v3485 = vrot.slane %v3484, 2
          %v3486 = vadd.f32 %v3484, %v3485
          %v3487 = vrot.slane %v3486, 1
          %v3488 = vadd.f32 %v3486, %v3487
          %v3489 = vadd.f32 %v3458, %v3459
          %v3490 = vadd.f32 %v3489, %v3460
          %v3491 = vadd.f32 %v3490, %v3461
          %v3492 = vrot.slane %v3491, 4
          %v3493 = vadd.f32 %v3491, %v3492
          %v3494 = vrot.slane %v3493, 2
          %v3495 = vadd.f32 %v3493, %v3494
          %v3496 = vrot.slane %v3495, 1
          %v3497 = vadd.f32 %v3495, %v3496
          %v3502 = vsel %vm1392, %v3479, %v3470
          %v3503 = vsel %vm1394, %v3488, %v3502
          %v3504 = vsel %vm1396, %v3497, %v3503
          %v3506 = vmul.f32 %v1170, %v3504
          %v3507 = vsub.f32 %v3506, %v3413
          %v3508 = vmul.f32 %v3507, 1.442695
          %v3509 = vpow.pop %v3508
          %v3510 = vsel %vm1403, %v3509, 0.0
          %v3511 = vrot.slane %v3510, 4
          %v3512 = vadd.f32 %v3510, %v3511
          %v3513 = vrot.slane %v3512, 2
          %v3514 = vadd.f32 %v3512, %v3513
          %v3515 = vrot.slane %v3514, 1
          %v3516 = vadd.f32 %v3514, %v3515
          %v3517 = vadd.f32 %v3516, 0.0
          %v3518 = vmul.f32 %v3509, %v1170
          %v3521 = vunpack.c.l.s4 1966171168
          %v3522 = vunpack.c.0.s8 %v3521
          %v3523 = vlaneseq
          %v3524 = vshrl.u32 %v3523, 7
          %v3525 = vsub.s32 %v3522, %v3524
          %v3526 = vrot.slane %v3518, %v3525
          %v3527 = vcombine.high %v3526, %v3526
          %v3529 = vunpack.c.l.s4 1966171168
          %v3530 = vunpack.c.0.s8 %v3529
          %v3531 = vlaneseq
          %v3532 = vshrl.u32 %v3531, 7
          %v3533 = vsub.s32 %v3530, %v3532
          %v3534 = vrot.slane %v3526, %v3533
          %v3536 = vunpack.c.l.s4 1966171168
          %v3537 = vunpack.c.0.s8 %v3536
          %v3538 = vlaneseq
          %v3539 = vshrl.u32 %v3538, 7
          %v3540 = vsub.s32 %v3537, %v3539
          %v3541 = vrot.slane %v3527, %v3540
          %v3542 = vcombine.high %v3534, %v3534
          %v3543 = vcombine.high %v3541, %v3541
          %v3544 = vlaneseq
          %v3545 = vshrl.u32 %v3544, 7
          %v3546 = vsub.s32 0, %v3545
          %v3547 = vrot.slane %v3534, %v3546
          %v3548 = vlaneseq
          %v3549 = vshrl.u32 %v3548, 7
          %v3550 = vsub.s32 0, %v3549
          %v3551 = vrot.slane %v3541, %v3550
          %v3552 = vlaneseq
          %v3553 = vshrl.u32 %v3552, 7
          %v3554 = vsub.s32 0, %v3553
          %v3555 = vrot.slane %v3542, %v3554
          %v3556 = vlaneseq
          %v3557 = vshrl.u32 %v3556, 7
          %v3558 = vsub.s32 0, %v3557
          %v3559 = vrot.slane %v3543, %v3558
          %v3564 = vmul.f32 %v3547, %v3430
          %v3565 = vmul.f32 %v3547, %v3431
          %v3566 = vmul.f32 %v3547, %v3432
          %v3567 = vmul.f32 %v3547, %v3433
          %v3568 = vmul.f32 %v3551, %v3434
          %v3569 = vmul.f32 %v3551, %v3435
          %v3570 = vmul.f32 %v3551, %v3436
          %v3571 = vmul.f32 %v3551, %v3437
          %v3572 = vmul.f32 %v3555, %v3438
          %v3573 = vmul.f32 %v3555, %v3439
          %v3574 = vmul.f32 %v3555, %v3440
          %v3575 = vmul.f32 %v3555, %v3441
          %v3576 = vmul.f32 %v3559, %v3442
          %v3577 = vmul.f32 %v3559, %v3443
          %v3578 = vmul.f32 %v3559, %v3444
          %v3579 = vmul.f32 %v3559, %v3445
          %v3580 = vadd.f32 %v3564, %v3568
          %v3581 = vadd.f32 %v3580, %v3572
          %v3582 = vadd.f32 %v3581, %v3576
          %v3583 = vadd.f32 %v3565, %v3569
          %v3584 = vadd.f32 %v3583, %v3573
          %v3585 = vadd.f32 %v3584, %v3577
          %v3586 = vadd.f32 %v3566, %v3570
          %v3587 = vadd.f32 %v3586, %v3574
          %v3588 = vadd.f32 %v3587, %v3578
          %v3589 = vadd.f32 %v3567, %v3571
          %v3590 = vadd.f32 %v3589, %v3575
          %v3591 = vadd.f32 %v3590, %v3579
          %v3592 = vadd.f32 %v3582, 0.0
          %v3593 = vadd.f32 %v3585, 0.0
          %v3594 = vadd.f32 %v3588, 0.0
          %v3595 = vadd.f32 %v3591, 0.0
          %v3596 = vadd.f32 %v887, %v1496
          %v3597 = vadd.f32 %v893, %v1500
          %v3598 = vadd.f32 %v899, %v1504
          %v3599 = vadd.f32 %v905, %v1508
          %v3600 = vadd.f32 %v887, %v1515
          %v3601 = vadd.f32 %v893, %v1519
          %v3602 = vadd.f32 %v899, %v1523
          %v3603 = vadd.f32 %v905, %v1527
          %v3604 = vadd.f32 %v887, %v1534
          %v3605 = vadd.f32 %v893, %v1538
          %v3606 = vadd.f32 %v899, %v1542
          %v3607 = vadd.f32 %v905, %v1546
          %v3608 = vadd.f32 %v887, %v1553
          %v3609 = vadd.f32 %v893, %v1557
          %v3610 = vadd.f32 %v899, %v1561
          %v3611 = vadd.f32 %v905, %v1565
          %v3612 = vtanh.pop %v3596
          %v3613 = vtanh.pop %v3597
          %v3614 = vtanh.pop %v3598
          %v3615 = vtanh.pop %v3599
          %v3616 = vtanh.pop %v3600
          %v3617 = vtanh.pop %v3601
          %v3618 = vtanh.pop %v3602
          %v3619 = vtanh.pop %v3603
          %v3620 = vtanh.pop %v3604
          %v3621 = vtanh.pop %v3605
          %v3622 = vtanh.pop %v3606
          %v3623 = vtanh.pop %v3607
          %v3624 = vtanh.pop %v3608
          %v3625 = vtanh.pop %v3609
          %v3626 = vtanh.pop %v3610
          %v3627 = vtanh.pop %v3611
          %v3628 = vmul.f32 %v3612, %v863
          %v3629 = vmul.f32 %v3613, %v869
          %v3630 = vmul.f32 %v3614, %v875
          %v3631 = vmul.f32 %v3615, %v881
          %v3632 = vmul.f32 %v3616, %v863
          %v3633 = vmul.f32 %v3617, %v869
          %v3634 = vmul.f32 %v3618, %v875
          %v3635 = vmul.f32 %v3619, %v881
          %v3636 = vmul.f32 %v3620, %v863
          %v3637 = vmul.f32 %v3621, %v869
          %v3638 = vmul.f32 %v3622, %v875
          %v3639 = vmul.f32 %v3623, %v881
          %v3640 = vmul.f32 %v3624, %v863
          %v3641 = vmul.f32 %v3625, %v869
          %v3642 = vmul.f32 %v3626, %v875
          %v3643 = vmul.f32 %v3627, %v881
          %v3644 = vadd.f32 %v3628, %v3629
          %v3645 = vadd.f32 %v3644, %v3630
          %v3646 = vadd.f32 %v3645, %v3631
          %v3647 = vrot.slane %v3646, 4
          %v3648 = vadd.f32 %v3646, %v3647
          %v3649 = vrot.slane %v3648, 2
          %v3650 = vadd.f32 %v3648, %v3649
          %v3651 = vrot.slane %v3650, 1
          %v3652 = vadd.f32 %v3650, %v3651
          %v3653 = vadd.f32 %v3632, %v3633
          %v3654 = vadd.f32 %v3653, %v3634
          %v3655 = vadd.f32 %v3654, %v3635
          %v3656 = vrot.slane %v3655, 4
          %v3657 = vadd.f32 %v3655, %v3656
          %v3658 = vrot.slane %v3657, 2
          %v3659 = vadd.f32 %v3657, %v3658
          %v3660 = vrot.slane %v3659, 1
          %v3661 = vadd.f32 %v3659, %v3660
          %v3662 = vadd.f32 %v3636, %v3637
          %v3663 = vadd.f32 %v3662, %v3638
          %v3664 = vadd.f32 %v3663, %v3639
          %v3665 = vrot.slane %v3664, 4
          %v3666 = vadd.f32 %v3664, %v3665
          %v3667 = vrot.slane %v3666, 2
          %v3668 = vadd.f32 %v3666, %v3667
          %v3669 = vrot.slane %v3668, 1
          %v3670 = vadd.f32 %v3668, %v3669
          %v3671 = vadd.f32 %v3640, %v3641
          %v3672 = vadd.f32 %v3671, %v3642
          %v3673 = vadd.f32 %v3672, %v3643
          %v3674 = vrot.slane %v3673, 4
          %v3675 = vadd.f32 %v3673, %v3674
          %v3676 = vrot.slane %v3675, 2
          %v3677 = vadd.f32 %v3675, %v3676
          %v3678 = vrot.slane %v3677, 1
          %v3679 = vadd.f32 %v3677, %v3678
          %v3684 = vsel %vm1654, %v3661, %v3652
          %v3685 = vsel %vm1656, %v3670, %v3684
          %v3686 = vsel %vm1658, %v3679, %v3685
          %v3688 = vmul.f32 %v1170, %v3686
          %v3689 = vsub.f32 %v3688, %v3413
          %v3690 = vmul.f32 %v3689, 1.442695
          %v3691 = vpow.pop %v3690
          %v3693 = vrot.slane %v3691, 4
          %v3695 = vsel %vm1403, %v3693, 0.0
          %v3696 = vrot.slane %v3695, 4
          %v3697 = vadd.f32 %v3695, %v3696
          %v3698 = vrot.slane %v3697, 2
          %v3699 = vadd.f32 %v3697, %v3698
          %v3700 = vrot.slane %v3699, 1
          %v3701 = vadd.f32 %v3699, %v3700
          %v3702 = vadd.f32 %v3517, %v3701
          %v3703 = vmul.f32 %v3691, %v1170
          %v3705 = vcombine.high %v3703, %v3703
          %v3707 = vunpack.c.l.s4 1966171168
          %v3708 = vunpack.c.0.s8 %v3707
          %v3709 = vlaneseq
          %v3710 = vshrl.u32 %v3709, 7
          %v3711 = vsub.s32 %v3708, %v3710
          %v3712 = vrot.slane %v3705, %v3711
          %v3713 = vcombine.high %v3712, %v3712
          %v3715 = vunpack.c.l.s4 1966171168
          %v3716 = vunpack.c.0.s8 %v3715
          %v3717 = vlaneseq
          %v3718 = vshrl.u32 %v3717, 7
          %v3719 = vsub.s32 %v3716, %v3718
          %v3720 = vrot.slane %v3712, %v3719
          %v3722 = vunpack.c.l.s4 1966171168
          %v3723 = vunpack.c.0.s8 %v3722
          %v3724 = vlaneseq
          %v3725 = vshrl.u32 %v3724, 7
          %v3726 = vsub.s32 %v3723, %v3725
          %v3727 = vrot.slane %v3713, %v3726
          %v3728 = vcombine.high %v3720, %v3720
          %v3729 = vcombine.high %v3727, %v3727
          %v3730 = vlaneseq
          %v3731 = vshrl.u32 %v3730, 7
          %v3732 = vsub.s32 0, %v3731
          %v3733 = vrot.slane %v3720, %v3732
          %v3734 = vlaneseq
          %v3735 = vshrl.u32 %v3734, 7
          %v3736 = vsub.s32 0, %v3735
          %v3737 = vrot.slane %v3727, %v3736
          %v3738 = vlaneseq
          %v3739 = vshrl.u32 %v3738, 7
          %v3740 = vsub.s32 0, %v3739
          %v3741 = vrot.slane %v3728, %v3740
          %v3742 = vlaneseq
          %v3743 = vshrl.u32 %v3742, 7
          %v3744 = vsub.s32 0, %v3743
          %v3745 = vrot.slane %v3729, %v3744
          %v3750 = vmul.f32 %v3733, %v3612
          %v3751 = vmul.f32 %v3733, %v3613
          %v3752 = vmul.f32 %v3733, %v3614
          %v3753 = vmul.f32 %v3733, %v3615
          %v3754 = vmul.f32 %v3737, %v3616
          %v3755 = vmul.f32 %v3737, %v3617
          %v3756 = vmul.f32 %v3737, %v3618
          %v3757 = vmul.f32 %v3737, %v3619
          %v3758 = vmul.f32 %v3741, %v3620
          %v3759 = vmul.f32 %v3741, %v3621
          %v3760 = vmul.f32 %v3741, %v3622
          %v3761 = vmul.f32 %v3741, %v3623
          %v3762 = vmul.f32 %v3745, %v3624
          %v3763 = vmul.f32 %v3745, %v3625
          %v3764 = vmul.f32 %v3745, %v3626
          %v3765 = vmul.f32 %v3745, %v3627
          %v3766 = vadd.f32 %v3750, %v3754
          %v3767 = vadd.f32 %v3766, %v3758
          %v3768 = vadd.f32 %v3767, %v3762
          %v3769 = vadd.f32 %v3751, %v3755
          %v3770 = vadd.f32 %v3769, %v3759
          %v3771 = vadd.f32 %v3770, %v3763
          %v3772 = vadd.f32 %v3752, %v3756
          %v3773 = vadd.f32 %v3772, %v3760
          %v3774 = vadd.f32 %v3773, %v3764
          %v3775 = vadd.f32 %v3753, %v3757
          %v3776 = vadd.f32 %v3775, %v3761
          %v3777 = vadd.f32 %v3776, %v3765
          %v3778 = vadd.f32 %v3592, %v3768
          %v3779 = vadd.f32 %v3593, %v3771
          %v3780 = vadd.f32 %v3594, %v3774
          %v3781 = vadd.f32 %v3595, %v3777
          %v3782 = vadd.f32 %v887, %v1761
          %v3783 = vadd.f32 %v893, %v1765
          %v3784 = vadd.f32 %v899, %v1769
          %v3785 = vadd.f32 %v905, %v1773
          %v3786 = vadd.f32 %v887, %v1780
          %v3787 = vadd.f32 %v893, %v1784
          %v3788 = vadd.f32 %v899, %v1788
          %v3789 = vadd.f32 %v905, %v1792
          %v3790 = vadd.f32 %v887, %v1799
          %v3791 = vadd.f32 %v893, %v1803
          %v3792 = vadd.f32 %v899, %v1807
          %v3793 = vadd.f32 %v905, %v1811
          %v3794 = vadd.f32 %v887, %v1818
          %v3795 = vadd.f32 %v893, %v1822
          %v3796 = vadd.f32 %v899, %v1826
          %v3797 = vadd.f32 %v905, %v1830
          %v3798 = vtanh.pop %v3782
          %v3799 = vtanh.pop %v3783
          %v3800 = vtanh.pop %v3784
          %v3801 = vtanh.pop %v3785
          %v3802 = vtanh.pop %v3786
          %v3803 = vtanh.pop %v3787
          %v3804 = vtanh.pop %v3788
          %v3805 = vtanh.pop %v3789
          %v3806 = vtanh.pop %v3790
          %v3807 = vtanh.pop %v3791
          %v3808 = vtanh.pop %v3792
          %v3809 = vtanh.pop %v3793
          %v3810 = vtanh.pop %v3794
          %v3811 = vtanh.pop %v3795
          %v3812 = vtanh.pop %v3796
          %v3813 = vtanh.pop %v3797
          %v3814 = vmul.f32 %v3798, %v863
          %v3815 = vmul.f32 %v3799, %v869
          %v3816 = vmul.f32 %v3800, %v875
          %v3817 = vmul.f32 %v3801, %v881
          %v3818 = vmul.f32 %v3802, %v863
          %v3819 = vmul.f32 %v3803, %v869
          %v3820 = vmul.f32 %v3804, %v875
          %v3821 = vmul.f32 %v3805, %v881
          %v3822 = vmul.f32 %v3806, %v863
          %v3823 = vmul.f32 %v3807, %v869
          %v3824 = vmul.f32 %v3808, %v875
          %v3825 = vmul.f32 %v3809, %v881
          %v3826 = vmul.f32 %v3810, %v863
          %v3827 = vmul.f32 %v3811, %v869
          %v3828 = vmul.f32 %v3812, %v875
          %v3829 = vmul.f32 %v3813, %v881
          %v3830 = vadd.f32 %v3814, %v3815
          %v3831 = vadd.f32 %v3830, %v3816
          %v3832 = vadd.f32 %v3831, %v3817
          %v3833 = vrot.slane %v3832, 4
          %v3834 = vadd.f32 %v3832, %v3833
          %v3835 = vrot.slane %v3834, 2
          %v3836 = vadd.f32 %v3834, %v3835
          %v3837 = vrot.slane %v3836, 1
          %v3838 = vadd.f32 %v3836, %v3837
          %v3839 = vadd.f32 %v3818, %v3819
          %v3840 = vadd.f32 %v3839, %v3820
          %v3841 = vadd.f32 %v3840, %v3821
          %v3842 = vrot.slane %v3841, 4
          %v3843 = vadd.f32 %v3841, %v3842
          %v3844 = vrot.slane %v3843, 2
          %v3845 = vadd.f32 %v3843, %v3844
          %v3846 = vrot.slane %v3845, 1
          %v3847 = vadd.f32 %v3845, %v3846
          %v3848 = vadd.f32 %v3822, %v3823
          %v3849 = vadd.f32 %v3848, %v3824
          %v3850 = vadd.f32 %v3849, %v3825
          %v3851 = vrot.slane %v3850, 4
          %v3852 = vadd.f32 %v3850, %v3851
          %v3853 = vrot.slane %v3852, 2
          %v3854 = vadd.f32 %v3852, %v3853
          %v3855 = vrot.slane %v3854, 1
          %v3856 = vadd.f32 %v3854, %v3855
          %v3857 = vadd.f32 %v3826, %v3827
          %v3858 = vadd.f32 %v3857, %v3828
          %v3859 = vadd.f32 %v3858, %v3829
          %v3860 = vrot.slane %v3859, 4
          %v3861 = vadd.f32 %v3859, %v3860
          %v3862 = vrot.slane %v3861, 2
          %v3863 = vadd.f32 %v3861, %v3862
          %v3864 = vrot.slane %v3863, 1
          %v3865 = vadd.f32 %v3863, %v3864
          %v3870 = vsel %vm1392, %v3847, %v3838
          %v3871 = vsel %vm1394, %v3856, %v3870
          %v3872 = vsel %vm1396, %v3865, %v3871
          %v3874 = vmul.f32 %v1174, %v3872
          %v3875 = vsub.f32 %v3874, %v3413
          %v3876 = vmul.f32 %v3875, 1.442695
          %v3877 = vpow.pop %v3876
          %v3878 = vsel %vm1403, %v3877, 0.0
          %v3879 = vrot.slane %v3878, 4
          %v3880 = vadd.f32 %v3878, %v3879
          %v3881 = vrot.slane %v3880, 2
          %v3882 = vadd.f32 %v3880, %v3881
          %v3883 = vrot.slane %v3882, 1
          %v3884 = vadd.f32 %v3882, %v3883
          %v3885 = vadd.f32 %v3702, %v3884
          %v3886 = vmul.f32 %v3877, %v1174
          %v3889 = vunpack.c.l.s4 1966171168
          %v3890 = vunpack.c.0.s8 %v3889
          %v3891 = vlaneseq
          %v3892 = vshrl.u32 %v3891, 7
          %v3893 = vsub.s32 %v3890, %v3892
          %v3894 = vrot.slane %v3886, %v3893
          %v3895 = vcombine.high %v3894, %v3894
          %v3897 = vunpack.c.l.s4 1966171168
          %v3898 = vunpack.c.0.s8 %v3897
          %v3899 = vlaneseq
          %v3900 = vshrl.u32 %v3899, 7
          %v3901 = vsub.s32 %v3898, %v3900
          %v3902 = vrot.slane %v3894, %v3901
          %v3904 = vunpack.c.l.s4 1966171168
          %v3905 = vunpack.c.0.s8 %v3904
          %v3906 = vlaneseq
          %v3907 = vshrl.u32 %v3906, 7
          %v3908 = vsub.s32 %v3905, %v3907
          %v3909 = vrot.slane %v3895, %v3908
          %v3910 = vcombine.high %v3902, %v3902
          %v3911 = vcombine.high %v3909, %v3909
          %v3912 = vlaneseq
          %v3913 = vshrl.u32 %v3912, 7
          %v3914 = vsub.s32 0, %v3913
          %v3915 = vrot.slane %v3902, %v3914
          %v3916 = vlaneseq
          %v3917 = vshrl.u32 %v3916, 7
          %v3918 = vsub.s32 0, %v3917
          %v3919 = vrot.slane %v3909, %v3918
          %v3920 = vlaneseq
          %v3921 = vshrl.u32 %v3920, 7
          %v3922 = vsub.s32 0, %v3921
          %v3923 = vrot.slane %v3910, %v3922
          %v3924 = vlaneseq
          %v3925 = vshrl.u32 %v3924, 7
          %v3926 = vsub.s32 0, %v3925
          %v3927 = vrot.slane %v3911, %v3926
          %v3932 = vmul.f32 %v3915, %v3798
          %v3933 = vmul.f32 %v3915, %v3799
          %v3934 = vmul.f32 %v3915, %v3800
          %v3935 = vmul.f32 %v3915, %v3801
          %v3936 = vmul.f32 %v3919, %v3802
          %v3937 = vmul.f32 %v3919, %v3803
          %v3938 = vmul.f32 %v3919, %v3804
          %v3939 = vmul.f32 %v3919, %v3805
          %v3940 = vmul.f32 %v3923, %v3806
          %v3941 = vmul.f32 %v3923, %v3807
          %v3942 = vmul.f32 %v3923, %v3808
          %v3943 = vmul.f32 %v3923, %v3809
          %v3944 = vmul.f32 %v3927, %v3810
          %v3945 = vmul.f32 %v3927, %v3811
          %v3946 = vmul.f32 %v3927, %v3812
          %v3947 = vmul.f32 %v3927, %v3813
          %v3948 = vadd.f32 %v3932, %v3936
          %v3949 = vadd.f32 %v3948, %v3940
          %v3950 = vadd.f32 %v3949, %v3944
          %v3951 = vadd.f32 %v3933, %v3937
          %v3952 = vadd.f32 %v3951, %v3941
          %v3953 = vadd.f32 %v3952, %v3945
          %v3954 = vadd.f32 %v3934, %v3938
          %v3955 = vadd.f32 %v3954, %v3942
          %v3956 = vadd.f32 %v3955, %v3946
          %v3957 = vadd.f32 %v3935, %v3939
          %v3958 = vadd.f32 %v3957, %v3943
          %v3959 = vadd.f32 %v3958, %v3947
          %v3960 = vadd.f32 %v3778, %v3950
          %v3961 = vadd.f32 %v3779, %v3953
          %v3962 = vadd.f32 %v3780, %v3956
          %v3963 = vadd.f32 %v3781, %v3959
          %v3964 = vadd.f32 %v887, %v2019
          %v3965 = vadd.f32 %v893, %v2023
          %v3966 = vadd.f32 %v899, %v2027
          %v3967 = vadd.f32 %v905, %v2031
          %v3968 = vadd.f32 %v887, %v2038
          %v3969 = vadd.f32 %v893, %v2042
          %v3970 = vadd.f32 %v899, %v2046
          %v3971 = vadd.f32 %v905, %v2050
          %v3972 = vadd.f32 %v887, %v2057
          %v3973 = vadd.f32 %v893, %v2061
          %v3974 = vadd.f32 %v899, %v2065
          %v3975 = vadd.f32 %v905, %v2069
          %v3976 = vadd.f32 %v887, %v2076
          %v3977 = vadd.f32 %v893, %v2080
          %v3978 = vadd.f32 %v899, %v2084
          %v3979 = vadd.f32 %v905, %v2088
          %v3980 = vtanh.pop %v3964
          %v3981 = vtanh.pop %v3965
          %v3982 = vtanh.pop %v3966
          %v3983 = vtanh.pop %v3967
          %v3984 = vtanh.pop %v3968
          %v3985 = vtanh.pop %v3969
          %v3986 = vtanh.pop %v3970
          %v3987 = vtanh.pop %v3971
          %v3988 = vtanh.pop %v3972
          %v3989 = vtanh.pop %v3973
          %v3990 = vtanh.pop %v3974
          %v3991 = vtanh.pop %v3975
          %v3992 = vtanh.pop %v3976
          %v3993 = vtanh.pop %v3977
          %v3994 = vtanh.pop %v3978
          %v3995 = vtanh.pop %v3979
          %v3996 = vmul.f32 %v3980, %v863
          %v3997 = vmul.f32 %v3981, %v869
          %v3998 = vmul.f32 %v3982, %v875
          %v3999 = vmul.f32 %v3983, %v881
          %v4000 = vmul.f32 %v3984, %v863
          %v4001 = vmul.f32 %v3985, %v869
          %v4002 = vmul.f32 %v3986, %v875
          %v4003 = vmul.f32 %v3987, %v881
          %v4004 = vmul.f32 %v3988, %v863
          %v4005 = vmul.f32 %v3989, %v869
          %v4006 = vmul.f32 %v3990, %v875
          %v4007 = vmul.f32 %v3991, %v881
          %v4008 = vmul.f32 %v3992, %v863
          %v4009 = vmul.f32 %v3993, %v869
          %v4010 = vmul.f32 %v3994, %v875
          %v4011 = vmul.f32 %v3995, %v881
          %v4012 = vadd.f32 %v3996, %v3997
          %v4013 = vadd.f32 %v4012, %v3998
          %v4014 = vadd.f32 %v4013, %v3999
          %v4015 = vrot.slane %v4014, 4
          %v4016 = vadd.f32 %v4014, %v4015
          %v4017 = vrot.slane %v4016, 2
          %v4018 = vadd.f32 %v4016, %v4017
          %v4019 = vrot.slane %v4018, 1
          %v4020 = vadd.f32 %v4018, %v4019
          %v4021 = vadd.f32 %v4000, %v4001
          %v4022 = vadd.f32 %v4021, %v4002
          %v4023 = vadd.f32 %v4022, %v4003
          %v4024 = vrot.slane %v4023, 4
          %v4025 = vadd.f32 %v4023, %v4024
          %v4026 = vrot.slane %v4025, 2
          %v4027 = vadd.f32 %v4025, %v4026
          %v4028 = vrot.slane %v4027, 1
          %v4029 = vadd.f32 %v4027, %v4028
          %v4030 = vadd.f32 %v4004, %v4005
          %v4031 = vadd.f32 %v4030, %v4006
          %v4032 = vadd.f32 %v4031, %v4007
          %v4033 = vrot.slane %v4032, 4
          %v4034 = vadd.f32 %v4032, %v4033
          %v4035 = vrot.slane %v4034, 2
          %v4036 = vadd.f32 %v4034, %v4035
          %v4037 = vrot.slane %v4036, 1
          %v4038 = vadd.f32 %v4036, %v4037
          %v4039 = vadd.f32 %v4008, %v4009
          %v4040 = vadd.f32 %v4039, %v4010
          %v4041 = vadd.f32 %v4040, %v4011
          %v4042 = vrot.slane %v4041, 4
          %v4043 = vadd.f32 %v4041, %v4042
          %v4044 = vrot.slane %v4043, 2
          %v4045 = vadd.f32 %v4043, %v4044
          %v4046 = vrot.slane %v4045, 1
          %v4047 = vadd.f32 %v4045, %v4046
          %v4052 = vsel %vm1654, %v4029, %v4020
          %v4053 = vsel %vm1656, %v4038, %v4052
          %v4054 = vsel %vm1658, %v4047, %v4053
          %v4056 = vmul.f32 %v1174, %v4054
          %v4057 = vsub.f32 %v4056, %v3413
          %v4058 = vmul.f32 %v4057, 1.442695
          %v4059 = vpow.pop %v4058
          %v4061 = vrot.slane %v4059, 4
          %v4063 = vsel %vm1403, %v4061, 0.0
          %v4064 = vrot.slane %v4063, 4
          %v4065 = vadd.f32 %v4063, %v4064
          %v4066 = vrot.slane %v4065, 2
          %v4067 = vadd.f32 %v4065, %v4066
          %v4068 = vrot.slane %v4067, 1
          %v4069 = vadd.f32 %v4067, %v4068
          %v4070 = vadd.f32 %v3885, %v4069
          %v4071 = vmul.f32 %v4059, %v1174
          %v4073 = vcombine.high %v4071, %v4071
          %v4075 = vunpack.c.l.s4 1966171168
          %v4076 = vunpack.c.0.s8 %v4075
          %v4077 = vlaneseq
          %v4078 = vshrl.u32 %v4077, 7
          %v4079 = vsub.s32 %v4076, %v4078
          %v4080 = vrot.slane %v4073, %v4079
          %v4081 = vcombine.high %v4080, %v4080
          %v4083 = vunpack.c.l.s4 1966171168
          %v4084 = vunpack.c.0.s8 %v4083
          %v4085 = vlaneseq
          %v4086 = vshrl.u32 %v4085, 7
          %v4087 = vsub.s32 %v4084, %v4086
          %v4088 = vrot.slane %v4080, %v4087
          %v4090 = vunpack.c.l.s4 1966171168
          %v4091 = vunpack.c.0.s8 %v4090
          %v4092 = vlaneseq
          %v4093 = vshrl.u32 %v4092, 7
          %v4094 = vsub.s32 %v4091, %v4093
          %v4095 = vrot.slane %v4081, %v4094
          %v4096 = vcombine.high %v4088, %v4088
          %v4097 = vcombine.high %v4095, %v4095
          %v4098 = vlaneseq
          %v4099 = vshrl.u32 %v4098, 7
          %v4100 = vsub.s32 0, %v4099
          %v4101 = vrot.slane %v4088, %v4100
          %v4102 = vlaneseq
          %v4103 = vshrl.u32 %v4102, 7
          %v4104 = vsub.s32 0, %v4103
          %v4105 = vrot.slane %v4095, %v4104
          %v4106 = vlaneseq
          %v4107 = vshrl.u32 %v4106, 7
          %v4108 = vsub.s32 0, %v4107
          %v4109 = vrot.slane %v4096, %v4108
          %v4110 = vlaneseq
          %v4111 = vshrl.u32 %v4110, 7
          %v4112 = vsub.s32 0, %v4111
          %v4113 = vrot.slane %v4097, %v4112
          %v4118 = vmul.f32 %v4101, %v3980
          %v4119 = vmul.f32 %v4101, %v3981
          %v4120 = vmul.f32 %v4101, %v3982
          %v4121 = vmul.f32 %v4101, %v3983
          %v4122 = vmul.f32 %v4105, %v3984
          %v4123 = vmul.f32 %v4105, %v3985
          %v4124 = vmul.f32 %v4105, %v3986
          %v4125 = vmul.f32 %v4105, %v3987
          %v4126 = vmul.f32 %v4109, %v3988
          %v4127 = vmul.f32 %v4109, %v3989
          %v4128 = vmul.f32 %v4109, %v3990
          %v4129 = vmul.f32 %v4109, %v3991
          %v4130 = vmul.f32 %v4113, %v3992
          %v4131 = vmul.f32 %v4113, %v3993
          %v4132 = vmul.f32 %v4113, %v3994
          %v4133 = vmul.f32 %v4113, %v3995
          %v4134 = vadd.f32 %v4118, %v4122
          %v4135 = vadd.f32 %v4134, %v4126
          %v4136 = vadd.f32 %v4135, %v4130
          %v4137 = vadd.f32 %v4119, %v4123
          %v4138 = vadd.f32 %v4137, %v4127
          %v4139 = vadd.f32 %v4138, %v4131
          %v4140 = vadd.f32 %v4120, %v4124
          %v4141 = vadd.f32 %v4140, %v4128
          %v4142 = vadd.f32 %v4141, %v4132
          %v4143 = vadd.f32 %v4121, %v4125
          %v4144 = vadd.f32 %v4143, %v4129
          %v4145 = vadd.f32 %v4144, %v4133
          %v4146 = vadd.f32 %v3960, %v4136
          %v4147 = vadd.f32 %v3961, %v4139
          %v4148 = vadd.f32 %v3962, %v4142
          %v4149 = vadd.f32 %v3963, %v4145
          %v4150 = vadd.f32 %v887, %v2281
          %v4151 = vadd.f32 %v893, %v2285
          %v4152 = vadd.f32 %v899, %v2289
          %v4153 = vadd.f32 %v905, %v2293
          %v4154 = vadd.f32 %v887, %v2300
          %v4155 = vadd.f32 %v893, %v2304
          %v4156 = vadd.f32 %v899, %v2308
          %v4157 = vadd.f32 %v905, %v2312
          %v4158 = vadd.f32 %v887, %v2319
          %v4159 = vadd.f32 %v893, %v2323
          %v4160 = vadd.f32 %v899, %v2327
          %v4161 = vadd.f32 %v905, %v2331
          %v4162 = vtanh.pop %v4150
          %v4163 = vtanh.pop %v4151
          %v4164 = vtanh.pop %v4152
          %v4165 = vtanh.pop %v4153
          %v4166 = vtanh.pop %v4154
          %v4167 = vtanh.pop %v4155
          %v4168 = vtanh.pop %v4156
          %v4169 = vtanh.pop %v4157
          %v4170 = vtanh.pop %v4158
          %v4171 = vtanh.pop %v4159
          %v4172 = vtanh.pop %v4160
          %v4173 = vtanh.pop %v4161
          %v4174 = vmul.f32 %v4162, %v863
          %v4175 = vmul.f32 %v4163, %v869
          %v4176 = vmul.f32 %v4164, %v875
          %v4177 = vmul.f32 %v4165, %v881
          %v4178 = vmul.f32 %v4166, %v863
          %v4179 = vmul.f32 %v4167, %v869
          %v4180 = vmul.f32 %v4168, %v875
          %v4181 = vmul.f32 %v4169, %v881
          %v4182 = vmul.f32 %v4170, %v863
          %v4183 = vmul.f32 %v4171, %v869
          %v4184 = vmul.f32 %v4172, %v875
          %v4185 = vmul.f32 %v4173, %v881
          %v4186 = vadd.f32 %v4174, %v4175
          %v4187 = vadd.f32 %v4186, %v4176
          %v4188 = vadd.f32 %v4187, %v4177
          %v4189 = vrot.slane %v4188, 4
          %v4190 = vadd.f32 %v4188, %v4189
          %v4191 = vrot.slane %v4190, 2
          %v4192 = vadd.f32 %v4190, %v4191
          %v4193 = vrot.slane %v4192, 1
          %v4194 = vadd.f32 %v4192, %v4193
          %v4195 = vadd.f32 %v4178, %v4179
          %v4196 = vadd.f32 %v4195, %v4180
          %v4197 = vadd.f32 %v4196, %v4181
          %v4198 = vrot.slane %v4197, 4
          %v4199 = vadd.f32 %v4197, %v4198
          %v4200 = vrot.slane %v4199, 2
          %v4201 = vadd.f32 %v4199, %v4200
          %v4202 = vrot.slane %v4201, 1
          %v4203 = vadd.f32 %v4201, %v4202
          %v4204 = vadd.f32 %v4182, %v4183
          %v4205 = vadd.f32 %v4204, %v4184
          %v4206 = vadd.f32 %v4205, %v4185
          %v4207 = vrot.slane %v4206, 4
          %v4208 = vadd.f32 %v4206, %v4207
          %v4209 = vrot.slane %v4208, 2
          %v4210 = vadd.f32 %v4208, %v4209
          %v4211 = vrot.slane %v4210, 1
          %v4212 = vadd.f32 %v4210, %v4211
          %v4216 = vsel %vm1392, %v4203, %v4194
          %v4217 = vsel %vm1394, %v4212, %v4216
          %v4219 = vmul.f32 %v1178, %v4217
          %v4220 = vsub.f32 %v4219, %v3413
          %v4221 = vmul.f32 %v4220, 1.442695
          %v4222 = vpow.pop %v4221
          %v4223 = vsel %vm604, %v4222, 0.0
          %v4224 = vrot.slane %v4223, 4
          %v4225 = vadd.f32 %v4223, %v4224
          %v4226 = vrot.slane %v4225, 2
          %v4227 = vadd.f32 %v4225, %v4226
          %v4228 = vrot.slane %v4227, 1
          %v4229 = vadd.f32 %v4227, %v4228
          %v4230 = vadd.f32 %v4070, %v4229
          %v4231 = vmul.f32 %v4222, %v1178
          %v4234 = vunpack.c.l.s4 1966171168
          %v4235 = vunpack.c.0.s8 %v4234
          %v4236 = vlaneseq
          %v4237 = vshrl.u32 %v4236, 7
          %v4238 = vsub.s32 %v4235, %v4237
          %v4239 = vrot.slane %v4231, %v4238
          %v4240 = vcombine.high %v4239, %v4239
          %v4242 = vunpack.c.l.s4 1966171168
          %v4243 = vunpack.c.0.s8 %v4242
          %v4244 = vlaneseq
          %v4245 = vshrl.u32 %v4244, 7
          %v4246 = vsub.s32 %v4243, %v4245
          %v4247 = vrot.slane %v4239, %v4246
          %v4249 = vunpack.c.l.s4 1966171168
          %v4250 = vunpack.c.0.s8 %v4249
          %v4251 = vlaneseq
          %v4252 = vshrl.u32 %v4251, 7
          %v4253 = vsub.s32 %v4250, %v4252
          %v4254 = vrot.slane %v4240, %v4253
          %v4255 = vcombine.high %v4247, %v4247
          %v4256 = vlaneseq
          %v4257 = vshrl.u32 %v4256, 7
          %v4258 = vsub.s32 0, %v4257
          %v4259 = vrot.slane %v4247, %v4258
          %v4260 = vlaneseq
          %v4261 = vshrl.u32 %v4260, 7
          %v4262 = vsub.s32 0, %v4261
          %v4263 = vrot.slane %v4254, %v4262
          %v4264 = vlaneseq
          %v4265 = vshrl.u32 %v4264, 7
          %v4266 = vsub.s32 0, %v4265
          %v4267 = vrot.slane %v4255, %v4266
          %v4271 = vmul.f32 %v4259, %v4162
          %v4272 = vmul.f32 %v4259, %v4163
          %v4273 = vmul.f32 %v4259, %v4164
          %v4274 = vmul.f32 %v4259, %v4165
          %v4275 = vmul.f32 %v4263, %v4166
          %v4276 = vmul.f32 %v4263, %v4167
          %v4277 = vmul.f32 %v4263, %v4168
          %v4278 = vmul.f32 %v4263, %v4169
          %v4279 = vmul.f32 %v4267, %v4170
          %v4280 = vmul.f32 %v4267, %v4171
          %v4281 = vmul.f32 %v4267, %v4172
          %v4282 = vmul.f32 %v4267, %v4173
          %v4283 = vadd.f32 %v4271, %v4275
          %v4284 = vadd.f32 %v4283, %v4279
          %v4285 = vadd.f32 %v4272, %v4276
          %v4286 = vadd.f32 %v4285, %v4280
          %v4287 = vadd.f32 %v4273, %v4277
          %v4288 = vadd.f32 %v4287, %v4281
          %v4289 = vadd.f32 %v4274, %v4278
          %v4290 = vadd.f32 %v4289, %v4282
          %v4291 = vadd.f32 %v4146, %v4284
          %v4292 = vadd.f32 %v4147, %v4286
          %v4293 = vadd.f32 %v4148, %v4288
          %v4294 = vadd.f32 %v4149, %v4290
          %v4295 = vrcp.pop %v4230
          %v4296 = vmul.f32 %v4291, %v4295
          %v4297 = vmul.f32 %v4292, %v4295
          %v4298 = vmul.f32 %v4293, %v4295
          %v4299 = vmul.f32 %v4294, %v4295
          %v4300 = vand.u32 2147483647, %v865
          %v4301 = vand.u32 2147483647, %v871
          %v4302 = vand.u32 2147483647, %v877
          %v4303 = vand.u32 2147483647, %v883
          %v4304 = vadd.f32 %v4300, %v4301
          %v4305 = vadd.f32 %v4304, %v4302
          %v4306 = vadd.f32 %v4305, %v4303
          %v4307 = vrot.slane %v4306, 4
          %v4308 = vadd.f32 %v4306, %v4307
          %v4309 = vrot.slane %v4308, 2
          %v4310 = vadd.f32 %v4308, %v4309
          %v4311 = vrot.slane %v4310, 1
          %v4312 = vadd.f32 %v4310, %v4311
          %v4313 = vsel %vm604, %v1179, -inf
          %v4314 = vmax.f32 %v1171, %v1175
          %v4315 = vmax.f32 %v4314, %v4313
          %v4316 = vrot.slane %v4315, 4
          %v4317 = vmax.f32 %v4315, %v4316
          %v4318 = vrot.slane %v4317, 2
          %v4319 = vmax.f32 %v4317, %v4318
          %v4320 = vrot.slane %v4319, 1
          %v4321 = vmax.f32 %v4319, %v4320
          %v4322 = vmul.f32 %v4312, %v4321
          %v4323 = vadd.f32 %v889, %v1234
          %v4324 = vadd.f32 %v895, %v1238
          %v4325 = vadd.f32 %v901, %v1242
          %v4326 = vadd.f32 %v907, %v1246
          %v4327 = vadd.f32 %v889, %v1253
          %v4328 = vadd.f32 %v895, %v1257
          %v4329 = vadd.f32 %v901, %v1261
          %v4330 = vadd.f32 %v907, %v1265
          %v4331 = vadd.f32 %v889, %v1272
          %v4332 = vadd.f32 %v895, %v1276
          %v4333 = vadd.f32 %v901, %v1280
          %v4334 = vadd.f32 %v907, %v1284
          %v4335 = vadd.f32 %v889, %v1291
          %v4336 = vadd.f32 %v895, %v1295
          %v4337 = vadd.f32 %v901, %v1299
          %v4338 = vadd.f32 %v907, %v1303
          %v4339 = vtanh.pop %v4323
          %v4340 = vtanh.pop %v4324
          %v4341 = vtanh.pop %v4325
          %v4342 = vtanh.pop %v4326
          %v4343 = vtanh.pop %v4327
          %v4344 = vtanh.pop %v4328
          %v4345 = vtanh.pop %v4329
          %v4346 = vtanh.pop %v4330
          %v4347 = vtanh.pop %v4331
          %v4348 = vtanh.pop %v4332
          %v4349 = vtanh.pop %v4333
          %v4350 = vtanh.pop %v4334
          %v4351 = vtanh.pop %v4335
          %v4352 = vtanh.pop %v4336
          %v4353 = vtanh.pop %v4337
          %v4354 = vtanh.pop %v4338
          %v4355 = vmul.f32 %v4339, %v865
          %v4356 = vmul.f32 %v4340, %v871
          %v4357 = vmul.f32 %v4341, %v877
          %v4358 = vmul.f32 %v4342, %v883
          %v4359 = vmul.f32 %v4343, %v865
          %v4360 = vmul.f32 %v4344, %v871
          %v4361 = vmul.f32 %v4345, %v877
          %v4362 = vmul.f32 %v4346, %v883
          %v4363 = vmul.f32 %v4347, %v865
          %v4364 = vmul.f32 %v4348, %v871
          %v4365 = vmul.f32 %v4349, %v877
          %v4366 = vmul.f32 %v4350, %v883
          %v4367 = vmul.f32 %v4351, %v865
          %v4368 = vmul.f32 %v4352, %v871
          %v4369 = vmul.f32 %v4353, %v877
          %v4370 = vmul.f32 %v4354, %v883
          %v4371 = vadd.f32 %v4355, %v4356
          %v4372 = vadd.f32 %v4371, %v4357
          %v4373 = vadd.f32 %v4372, %v4358
          %v4374 = vrot.slane %v4373, 4
          %v4375 = vadd.f32 %v4373, %v4374
          %v4376 = vrot.slane %v4375, 2
          %v4377 = vadd.f32 %v4375, %v4376
          %v4378 = vrot.slane %v4377, 1
          %v4379 = vadd.f32 %v4377, %v4378
          %v4380 = vadd.f32 %v4359, %v4360
          %v4381 = vadd.f32 %v4380, %v4361
          %v4382 = vadd.f32 %v4381, %v4362
          %v4383 = vrot.slane %v4382, 4
          %v4384 = vadd.f32 %v4382, %v4383
          %v4385 = vrot.slane %v4384, 2
          %v4386 = vadd.f32 %v4384, %v4385
          %v4387 = vrot.slane %v4386, 1
          %v4388 = vadd.f32 %v4386, %v4387
          %v4389 = vadd.f32 %v4363, %v4364
          %v4390 = vadd.f32 %v4389, %v4365
          %v4391 = vadd.f32 %v4390, %v4366
          %v4392 = vrot.slane %v4391, 4
          %v4393 = vadd.f32 %v4391, %v4392
          %v4394 = vrot.slane %v4393, 2
          %v4395 = vadd.f32 %v4393, %v4394
          %v4396 = vrot.slane %v4395, 1
          %v4397 = vadd.f32 %v4395, %v4396
          %v4398 = vadd.f32 %v4367, %v4368
          %v4399 = vadd.f32 %v4398, %v4369
          %v4400 = vadd.f32 %v4399, %v4370
          %v4401 = vrot.slane %v4400, 4
          %v4402 = vadd.f32 %v4400, %v4401
          %v4403 = vrot.slane %v4402, 2
          %v4404 = vadd.f32 %v4402, %v4403
          %v4405 = vrot.slane %v4404, 1
          %v4406 = vadd.f32 %v4404, %v4405
          %v4411 = vsel %vm1392, %v4388, %v4379
          %v4412 = vsel %vm1394, %v4397, %v4411
          %v4413 = vsel %vm1396, %v4406, %v4412
          %v4415 = vmul.f32 %v1171, %v4413
          %v4416 = vsub.f32 %v4415, %v4322
          %v4417 = vmul.f32 %v4416, 1.442695
          %v4418 = vpow.pop %v4417
          %v4419 = vsel %vm1403, %v4418, 0.0
          %v4420 = vrot.slane %v4419, 4
          %v4421 = vadd.f32 %v4419, %v4420
          %v4422 = vrot.slane %v4421, 2
          %v4423 = vadd.f32 %v4421, %v4422
          %v4424 = vrot.slane %v4423, 1
          %v4425 = vadd.f32 %v4423, %v4424
          %v4426 = vadd.f32 %v4425, 0.0
          %v4427 = vmul.f32 %v4418, %v1171
          %v4430 = vunpack.c.l.s4 1966171168
          %v4431 = vunpack.c.0.s8 %v4430
          %v4432 = vlaneseq
          %v4433 = vshrl.u32 %v4432, 7
          %v4434 = vsub.s32 %v4431, %v4433
          %v4435 = vrot.slane %v4427, %v4434
          %v4436 = vcombine.high %v4435, %v4435
          %v4438 = vunpack.c.l.s4 1966171168
          %v4439 = vunpack.c.0.s8 %v4438
          %v4440 = vlaneseq
          %v4441 = vshrl.u32 %v4440, 7
          %v4442 = vsub.s32 %v4439, %v4441
          %v4443 = vrot.slane %v4435, %v4442
          %v4445 = vunpack.c.l.s4 1966171168
          %v4446 = vunpack.c.0.s8 %v4445
          %v4447 = vlaneseq
          %v4448 = vshrl.u32 %v4447, 7
          %v4449 = vsub.s32 %v4446, %v4448
          %v4450 = vrot.slane %v4436, %v4449
          %v4451 = vcombine.high %v4443, %v4443
          %v4452 = vcombine.high %v4450, %v4450
          %v4453 = vlaneseq
          %v4454 = vshrl.u32 %v4453, 7
          %v4455 = vsub.s32 0, %v4454
          %v4456 = vrot.slane %v4443, %v4455
          %v4457 = vlaneseq
          %v4458 = vshrl.u32 %v4457, 7
          %v4459 = vsub.s32 0, %v4458
          %v4460 = vrot.slane %v4450, %v4459
          %v4461 = vlaneseq
          %v4462 = vshrl.u32 %v4461, 7
          %v4463 = vsub.s32 0, %v4462
          %v4464 = vrot.slane %v4451, %v4463
          %v4465 = vlaneseq
          %v4466 = vshrl.u32 %v4465, 7
          %v4467 = vsub.s32 0, %v4466
          %v4468 = vrot.slane %v4452, %v4467
          %v4473 = vmul.f32 %v4456, %v4339
          %v4474 = vmul.f32 %v4456, %v4340
          %v4475 = vmul.f32 %v4456, %v4341
          %v4476 = vmul.f32 %v4456, %v4342
          %v4477 = vmul.f32 %v4460, %v4343
          %v4478 = vmul.f32 %v4460, %v4344
          %v4479 = vmul.f32 %v4460, %v4345
          %v4480 = vmul.f32 %v4460, %v4346
          %v4481 = vmul.f32 %v4464, %v4347
          %v4482 = vmul.f32 %v4464, %v4348
          %v4483 = vmul.f32 %v4464, %v4349
          %v4484 = vmul.f32 %v4464, %v4350
          %v4485 = vmul.f32 %v4468, %v4351
          %v4486 = vmul.f32 %v4468, %v4352
          %v4487 = vmul.f32 %v4468, %v4353
          %v4488 = vmul.f32 %v4468, %v4354
          %v4489 = vadd.f32 %v4473, %v4477
          %v4490 = vadd.f32 %v4489, %v4481
          %v4491 = vadd.f32 %v4490, %v4485
          %v4492 = vadd.f32 %v4474, %v4478
          %v4493 = vadd.f32 %v4492, %v4482
          %v4494 = vadd.f32 %v4493, %v4486
          %v4495 = vadd.f32 %v4475, %v4479
          %v4496 = vadd.f32 %v4495, %v4483
          %v4497 = vadd.f32 %v4496, %v4487
          %v4498 = vadd.f32 %v4476, %v4480
          %v4499 = vadd.f32 %v4498, %v4484
          %v4500 = vadd.f32 %v4499, %v4488
          %v4501 = vadd.f32 %v4491, 0.0
          %v4502 = vadd.f32 %v4494, 0.0
          %v4503 = vadd.f32 %v4497, 0.0
          %v4504 = vadd.f32 %v4500, 0.0
          %v4505 = vadd.f32 %v889, %v1496
          %v4506 = vadd.f32 %v895, %v1500
          %v4507 = vadd.f32 %v901, %v1504
          %v4508 = vadd.f32 %v907, %v1508
          %v4509 = vadd.f32 %v889, %v1515
          %v4510 = vadd.f32 %v895, %v1519
          %v4511 = vadd.f32 %v901, %v1523
          %v4512 = vadd.f32 %v907, %v1527
          %v4513 = vadd.f32 %v889, %v1534
          %v4514 = vadd.f32 %v895, %v1538
          %v4515 = vadd.f32 %v901, %v1542
          %v4516 = vadd.f32 %v907, %v1546
          %v4517 = vadd.f32 %v889, %v1553
          %v4518 = vadd.f32 %v895, %v1557
          %v4519 = vadd.f32 %v901, %v1561
          %v4520 = vadd.f32 %v907, %v1565
          %v4521 = vtanh.pop %v4505
          %v4522 = vtanh.pop %v4506
          %v4523 = vtanh.pop %v4507
          %v4524 = vtanh.pop %v4508
          %v4525 = vtanh.pop %v4509
          %v4526 = vtanh.pop %v4510
          %v4527 = vtanh.pop %v4511
          %v4528 = vtanh.pop %v4512
          %v4529 = vtanh.pop %v4513
          %v4530 = vtanh.pop %v4514
          %v4531 = vtanh.pop %v4515
          %v4532 = vtanh.pop %v4516
          %v4533 = vtanh.pop %v4517
          %v4534 = vtanh.pop %v4518
          %v4535 = vtanh.pop %v4519
          %v4536 = vtanh.pop %v4520
          %v4537 = vmul.f32 %v4521, %v865
          %v4538 = vmul.f32 %v4522, %v871
          %v4539 = vmul.f32 %v4523, %v877
          %v4540 = vmul.f32 %v4524, %v883
          %v4541 = vmul.f32 %v4525, %v865
          %v4542 = vmul.f32 %v4526, %v871
          %v4543 = vmul.f32 %v4527, %v877
          %v4544 = vmul.f32 %v4528, %v883
          %v4545 = vmul.f32 %v4529, %v865
          %v4546 = vmul.f32 %v4530, %v871
          %v4547 = vmul.f32 %v4531, %v877
          %v4548 = vmul.f32 %v4532, %v883
          %v4549 = vmul.f32 %v4533, %v865
          %v4550 = vmul.f32 %v4534, %v871
          %v4551 = vmul.f32 %v4535, %v877
          %v4552 = vmul.f32 %v4536, %v883
          %v4553 = vadd.f32 %v4537, %v4538
          %v4554 = vadd.f32 %v4553, %v4539
          %v4555 = vadd.f32 %v4554, %v4540
          %v4556 = vrot.slane %v4555, 4
          %v4557 = vadd.f32 %v4555, %v4556
          %v4558 = vrot.slane %v4557, 2
          %v4559 = vadd.f32 %v4557, %v4558
          %v4560 = vrot.slane %v4559, 1
          %v4561 = vadd.f32 %v4559, %v4560
          %v4562 = vadd.f32 %v4541, %v4542
          %v4563 = vadd.f32 %v4562, %v4543
          %v4564 = vadd.f32 %v4563, %v4544
          %v4565 = vrot.slane %v4564, 4
          %v4566 = vadd.f32 %v4564, %v4565
          %v4567 = vrot.slane %v4566, 2
          %v4568 = vadd.f32 %v4566, %v4567
          %v4569 = vrot.slane %v4568, 1
          %v4570 = vadd.f32 %v4568, %v4569
          %v4571 = vadd.f32 %v4545, %v4546
          %v4572 = vadd.f32 %v4571, %v4547
          %v4573 = vadd.f32 %v4572, %v4548
          %v4574 = vrot.slane %v4573, 4
          %v4575 = vadd.f32 %v4573, %v4574
          %v4576 = vrot.slane %v4575, 2
          %v4577 = vadd.f32 %v4575, %v4576
          %v4578 = vrot.slane %v4577, 1
          %v4579 = vadd.f32 %v4577, %v4578
          %v4580 = vadd.f32 %v4549, %v4550
          %v4581 = vadd.f32 %v4580, %v4551
          %v4582 = vadd.f32 %v4581, %v4552
          %v4583 = vrot.slane %v4582, 4
          %v4584 = vadd.f32 %v4582, %v4583
          %v4585 = vrot.slane %v4584, 2
          %v4586 = vadd.f32 %v4584, %v4585
          %v4587 = vrot.slane %v4586, 1
          %v4588 = vadd.f32 %v4586, %v4587
          %v4593 = vsel %vm1654, %v4570, %v4561
          %v4594 = vsel %vm1656, %v4579, %v4593
          %v4595 = vsel %vm1658, %v4588, %v4594
          %v4597 = vmul.f32 %v1171, %v4595
          %v4598 = vsub.f32 %v4597, %v4322
          %v4599 = vmul.f32 %v4598, 1.442695
          %v4600 = vpow.pop %v4599
          %v4602 = vrot.slane %v4600, 4
          %v4604 = vsel %vm1403, %v4602, 0.0
          %v4605 = vrot.slane %v4604, 4
          %v4606 = vadd.f32 %v4604, %v4605
          %v4607 = vrot.slane %v4606, 2
          %v4608 = vadd.f32 %v4606, %v4607
          %v4609 = vrot.slane %v4608, 1
          %v4610 = vadd.f32 %v4608, %v4609
          %v4611 = vadd.f32 %v4426, %v4610
          %v4612 = vmul.f32 %v4600, %v1171
          %v4614 = vcombine.high %v4612, %v4612
          %v4616 = vunpack.c.l.s4 1966171168
          %v4617 = vunpack.c.0.s8 %v4616
          %v4618 = vlaneseq
          %v4619 = vshrl.u32 %v4618, 7
          %v4620 = vsub.s32 %v4617, %v4619
          %v4621 = vrot.slane %v4614, %v4620
          %v4622 = vcombine.high %v4621, %v4621
          %v4624 = vunpack.c.l.s4 1966171168
          %v4625 = vunpack.c.0.s8 %v4624
          %v4626 = vlaneseq
          %v4627 = vshrl.u32 %v4626, 7
          %v4628 = vsub.s32 %v4625, %v4627
          %v4629 = vrot.slane %v4621, %v4628
          %v4631 = vunpack.c.l.s4 1966171168
          %v4632 = vunpack.c.0.s8 %v4631
          %v4633 = vlaneseq
          %v4634 = vshrl.u32 %v4633, 7
          %v4635 = vsub.s32 %v4632, %v4634
          %v4636 = vrot.slane %v4622, %v4635
          %v4637 = vcombine.high %v4629, %v4629
          %v4638 = vcombine.high %v4636, %v4636
          %v4639 = vlaneseq
          %v4640 = vshrl.u32 %v4639, 7
          %v4641 = vsub.s32 0, %v4640
          %v4642 = vrot.slane %v4629, %v4641
          %v4643 = vlaneseq
          %v4644 = vshrl.u32 %v4643, 7
          %v4645 = vsub.s32 0, %v4644
          %v4646 = vrot.slane %v4636, %v4645
          %v4647 = vlaneseq
          %v4648 = vshrl.u32 %v4647, 7
          %v4649 = vsub.s32 0, %v4648
          %v4650 = vrot.slane %v4637, %v4649
          %v4651 = vlaneseq
          %v4652 = vshrl.u32 %v4651, 7
          %v4653 = vsub.s32 0, %v4652
          %v4654 = vrot.slane %v4638, %v4653
          %v4659 = vmul.f32 %v4642, %v4521
          %v4660 = vmul.f32 %v4642, %v4522
          %v4661 = vmul.f32 %v4642, %v4523
          %v4662 = vmul.f32 %v4642, %v4524
          %v4663 = vmul.f32 %v4646, %v4525
          %v4664 = vmul.f32 %v4646, %v4526
          %v4665 = vmul.f32 %v4646, %v4527
          %v4666 = vmul.f32 %v4646, %v4528
          %v4667 = vmul.f32 %v4650, %v4529
          %v4668 = vmul.f32 %v4650, %v4530
          %v4669 = vmul.f32 %v4650, %v4531
          %v4670 = vmul.f32 %v4650, %v4532
          %v4671 = vmul.f32 %v4654, %v4533
          %v4672 = vmul.f32 %v4654, %v4534
          %v4673 = vmul.f32 %v4654, %v4535
          %v4674 = vmul.f32 %v4654, %v4536
          %v4675 = vadd.f32 %v4659, %v4663
          %v4676 = vadd.f32 %v4675, %v4667
          %v4677 = vadd.f32 %v4676, %v4671
          %v4678 = vadd.f32 %v4660, %v4664
          %v4679 = vadd.f32 %v4678, %v4668
          %v4680 = vadd.f32 %v4679, %v4672
          %v4681 = vadd.f32 %v4661, %v4665
          %v4682 = vadd.f32 %v4681, %v4669
          %v4683 = vadd.f32 %v4682, %v4673
          %v4684 = vadd.f32 %v4662, %v4666
          %v4685 = vadd.f32 %v4684, %v4670
          %v4686 = vadd.f32 %v4685, %v4674
          %v4687 = vadd.f32 %v4501, %v4677
          %v4688 = vadd.f32 %v4502, %v4680
          %v4689 = vadd.f32 %v4503, %v4683
          %v4690 = vadd.f32 %v4504, %v4686
          %v4691 = vadd.f32 %v889, %v1761
          %v4692 = vadd.f32 %v895, %v1765
          %v4693 = vadd.f32 %v901, %v1769
          %v4694 = vadd.f32 %v907, %v1773
          %v4695 = vadd.f32 %v889, %v1780
          %v4696 = vadd.f32 %v895, %v1784
          %v4697 = vadd.f32 %v901, %v1788
          %v4698 = vadd.f32 %v907, %v1792
          %v4699 = vadd.f32 %v889, %v1799
          %v4700 = vadd.f32 %v895, %v1803
          %v4701 = vadd.f32 %v901, %v1807
          %v4702 = vadd.f32 %v907, %v1811
          %v4703 = vadd.f32 %v889, %v1818
          %v4704 = vadd.f32 %v895, %v1822
          %v4705 = vadd.f32 %v901, %v1826
          %v4706 = vadd.f32 %v907, %v1830
          %v4707 = vtanh.pop %v4691
          %v4708 = vtanh.pop %v4692
          %v4709 = vtanh.pop %v4693
          %v4710 = vtanh.pop %v4694
          %v4711 = vtanh.pop %v4695
          %v4712 = vtanh.pop %v4696
          %v4713 = vtanh.pop %v4697
          %v4714 = vtanh.pop %v4698
          %v4715 = vtanh.pop %v4699
          %v4716 = vtanh.pop %v4700
          %v4717 = vtanh.pop %v4701
          %v4718 = vtanh.pop %v4702
          %v4719 = vtanh.pop %v4703
          %v4720 = vtanh.pop %v4704
          %v4721 = vtanh.pop %v4705
          %v4722 = vtanh.pop %v4706
          %v4723 = vmul.f32 %v4707, %v865
          %v4724 = vmul.f32 %v4708, %v871
          %v4725 = vmul.f32 %v4709, %v877
          %v4726 = vmul.f32 %v4710, %v883
          %v4727 = vmul.f32 %v4711, %v865
          %v4728 = vmul.f32 %v4712, %v871
          %v4729 = vmul.f32 %v4713, %v877
          %v4730 = vmul.f32 %v4714, %v883
          %v4731 = vmul.f32 %v4715, %v865
          %v4732 = vmul.f32 %v4716, %v871
          %v4733 = vmul.f32 %v4717, %v877
          %v4734 = vmul.f32 %v4718, %v883
          %v4735 = vmul.f32 %v4719, %v865
          %v4736 = vmul.f32 %v4720, %v871
          %v4737 = vmul.f32 %v4721, %v877
          %v4738 = vmul.f32 %v4722, %v883
          %v4739 = vadd.f32 %v4723, %v4724
          %v4740 = vadd.f32 %v4739, %v4725
          %v4741 = vadd.f32 %v4740, %v4726
          %v4742 = vrot.slane %v4741, 4
          %v4743 = vadd.f32 %v4741, %v4742
          %v4744 = vrot.slane %v4743, 2
          %v4745 = vadd.f32 %v4743, %v4744
          %v4746 = vrot.slane %v4745, 1
          %v4747 = vadd.f32 %v4745, %v4746
          %v4748 = vadd.f32 %v4727, %v4728
          %v4749 = vadd.f32 %v4748, %v4729
          %v4750 = vadd.f32 %v4749, %v4730
          %v4751 = vrot.slane %v4750, 4
          %v4752 = vadd.f32 %v4750, %v4751
          %v4753 = vrot.slane %v4752, 2
          %v4754 = vadd.f32 %v4752, %v4753
          %v4755 = vrot.slane %v4754, 1
          %v4756 = vadd.f32 %v4754, %v4755
          %v4757 = vadd.f32 %v4731, %v4732
          %v4758 = vadd.f32 %v4757, %v4733
          %v4759 = vadd.f32 %v4758, %v4734
          %v4760 = vrot.slane %v4759, 4
          %v4761 = vadd.f32 %v4759, %v4760
          %v4762 = vrot.slane %v4761, 2
          %v4763 = vadd.f32 %v4761, %v4762
          %v4764 = vrot.slane %v4763, 1
          %v4765 = vadd.f32 %v4763, %v4764
          %v4766 = vadd.f32 %v4735, %v4736
          %v4767 = vadd.f32 %v4766, %v4737
          %v4768 = vadd.f32 %v4767, %v4738
          %v4769 = vrot.slane %v4768, 4
          %v4770 = vadd.f32 %v4768, %v4769
          %v4771 = vrot.slane %v4770, 2
          %v4772 = vadd.f32 %v4770, %v4771
          %v4773 = vrot.slane %v4772, 1
          %v4774 = vadd.f32 %v4772, %v4773
          %v4779 = vsel %vm1392, %v4756, %v4747
          %v4780 = vsel %vm1394, %v4765, %v4779
          %v4781 = vsel %vm1396, %v4774, %v4780
          %v4783 = vmul.f32 %v1175, %v4781
          %v4784 = vsub.f32 %v4783, %v4322
          %v4785 = vmul.f32 %v4784, 1.442695
          %v4786 = vpow.pop %v4785
          %v4787 = vsel %vm1403, %v4786, 0.0
          %v4788 = vrot.slane %v4787, 4
          %v4789 = vadd.f32 %v4787, %v4788
          %v4790 = vrot.slane %v4789, 2
          %v4791 = vadd.f32 %v4789, %v4790
          %v4792 = vrot.slane %v4791, 1
          %v4793 = vadd.f32 %v4791, %v4792
          %v4794 = vadd.f32 %v4611, %v4793
          %v4795 = vmul.f32 %v4786, %v1175
          %v4798 = vunpack.c.l.s4 1966171168
          %v4799 = vunpack.c.0.s8 %v4798
          %v4800 = vlaneseq
          %v4801 = vshrl.u32 %v4800, 7
          %v4802 = vsub.s32 %v4799, %v4801
          %v4803 = vrot.slane %v4795, %v4802
          %v4804 = vcombine.high %v4803, %v4803
          %v4806 = vunpack.c.l.s4 1966171168
          %v4807 = vunpack.c.0.s8 %v4806
          %v4808 = vlaneseq
          %v4809 = vshrl.u32 %v4808, 7
          %v4810 = vsub.s32 %v4807, %v4809
          %v4811 = vrot.slane %v4803, %v4810
          %v4813 = vunpack.c.l.s4 1966171168
          %v4814 = vunpack.c.0.s8 %v4813
          %v4815 = vlaneseq
          %v4816 = vshrl.u32 %v4815, 7
          %v4817 = vsub.s32 %v4814, %v4816
          %v4818 = vrot.slane %v4804, %v4817
          %v4819 = vcombine.high %v4811, %v4811
          %v4820 = vcombine.high %v4818, %v4818
          %v4821 = vlaneseq
          %v4822 = vshrl.u32 %v4821, 7
          %v4823 = vsub.s32 0, %v4822
          %v4824 = vrot.slane %v4811, %v4823
          %v4825 = vlaneseq
          %v4826 = vshrl.u32 %v4825, 7
          %v4827 = vsub.s32 0, %v4826
          %v4828 = vrot.slane %v4818, %v4827
          %v4829 = vlaneseq
          %v4830 = vshrl.u32 %v4829, 7
          %v4831 = vsub.s32 0, %v4830
          %v4832 = vrot.slane %v4819, %v4831
          %v4833 = vlaneseq
          %v4834 = vshrl.u32 %v4833, 7
          %v4835 = vsub.s32 0, %v4834
          %v4836 = vrot.slane %v4820, %v4835
          %v4841 = vmul.f32 %v4824, %v4707
          %v4842 = vmul.f32 %v4824, %v4708
          %v4843 = vmul.f32 %v4824, %v4709
          %v4844 = vmul.f32 %v4824, %v4710
          %v4845 = vmul.f32 %v4828, %v4711
          %v4846 = vmul.f32 %v4828, %v4712
          %v4847 = vmul.f32 %v4828, %v4713
          %v4848 = vmul.f32 %v4828, %v4714
          %v4849 = vmul.f32 %v4832, %v4715
          %v4850 = vmul.f32 %v4832, %v4716
          %v4851 = vmul.f32 %v4832, %v4717
          %v4852 = vmul.f32 %v4832, %v4718
          %v4853 = vmul.f32 %v4836, %v4719
          %v4854 = vmul.f32 %v4836, %v4720
          %v4855 = vmul.f32 %v4836, %v4721
          %v4856 = vmul.f32 %v4836, %v4722
          %v4857 = vadd.f32 %v4841, %v4845
          %v4858 = vadd.f32 %v4857, %v4849
          %v4859 = vadd.f32 %v4858, %v4853
          %v4860 = vadd.f32 %v4842, %v4846
          %v4861 = vadd.f32 %v4860, %v4850
          %v4862 = vadd.f32 %v4861, %v4854
          %v4863 = vadd.f32 %v4843, %v4847
          %v4864 = vadd.f32 %v4863, %v4851
          %v4865 = vadd.f32 %v4864, %v4855
          %v4866 = vadd.f32 %v4844, %v4848
          %v4867 = vadd.f32 %v4866, %v4852
          %v4868 = vadd.f32 %v4867, %v4856
          %v4869 = vadd.f32 %v4687, %v4859
          %v4870 = vadd.f32 %v4688, %v4862
          %v4871 = vadd.f32 %v4689, %v4865
          %v4872 = vadd.f32 %v4690, %v4868
          %v4873 = vadd.f32 %v889, %v2019
          %v4874 = vadd.f32 %v895, %v2023
          %v4875 = vadd.f32 %v901, %v2027
          %v4876 = vadd.f32 %v907, %v2031
          %v4877 = vadd.f32 %v889, %v2038
          %v4878 = vadd.f32 %v895, %v2042
          %v4879 = vadd.f32 %v901, %v2046
          %v4880 = vadd.f32 %v907, %v2050
          %v4881 = vadd.f32 %v889, %v2057
          %v4882 = vadd.f32 %v895, %v2061
          %v4883 = vadd.f32 %v901, %v2065
          %v4884 = vadd.f32 %v907, %v2069
          %v4885 = vadd.f32 %v889, %v2076
          %v4886 = vadd.f32 %v895, %v2080
          %v4887 = vadd.f32 %v901, %v2084
          %v4888 = vadd.f32 %v907, %v2088
          %v4889 = vtanh.pop %v4873
          %v4890 = vtanh.pop %v4874
          %v4891 = vtanh.pop %v4875
          %v4892 = vtanh.pop %v4876
          %v4893 = vtanh.pop %v4877
          %v4894 = vtanh.pop %v4878
          %v4895 = vtanh.pop %v4879
          %v4896 = vtanh.pop %v4880
          %v4897 = vtanh.pop %v4881
          %v4898 = vtanh.pop %v4882
          %v4899 = vtanh.pop %v4883
          %v4900 = vtanh.pop %v4884
          %v4901 = vtanh.pop %v4885
          %v4902 = vtanh.pop %v4886
          %v4903 = vtanh.pop %v4887
          %v4904 = vtanh.pop %v4888
          %v4905 = vmul.f32 %v4889, %v865
          %v4906 = vmul.f32 %v4890, %v871
          %v4907 = vmul.f32 %v4891, %v877
          %v4908 = vmul.f32 %v4892, %v883
          %v4909 = vmul.f32 %v4893, %v865
          %v4910 = vmul.f32 %v4894, %v871
          %v4911 = vmul.f32 %v4895, %v877
          %v4912 = vmul.f32 %v4896, %v883
          %v4913 = vmul.f32 %v4897, %v865
          %v4914 = vmul.f32 %v4898, %v871
          %v4915 = vmul.f32 %v4899, %v877
          %v4916 = vmul.f32 %v4900, %v883
          %v4917 = vmul.f32 %v4901, %v865
          %v4918 = vmul.f32 %v4902, %v871
          %v4919 = vmul.f32 %v4903, %v877
          %v4920 = vmul.f32 %v4904, %v883
          %v4921 = vadd.f32 %v4905, %v4906
          %v4922 = vadd.f32 %v4921, %v4907
          %v4923 = vadd.f32 %v4922, %v4908
          %v4924 = vrot.slane %v4923, 4
          %v4925 = vadd.f32 %v4923, %v4924
          %v4926 = vrot.slane %v4925, 2
          %v4927 = vadd.f32 %v4925, %v4926
          %v4928 = vrot.slane %v4927, 1
          %v4929 = vadd.f32 %v4927, %v4928
          %v4930 = vadd.f32 %v4909, %v4910
          %v4931 = vadd.f32 %v4930, %v4911
          %v4932 = vadd.f32 %v4931, %v4912
          %v4933 = vrot.slane %v4932, 4
          %v4934 = vadd.f32 %v4932, %v4933
          %v4935 = vrot.slane %v4934, 2
          %v4936 = vadd.f32 %v4934, %v4935
          %v4937 = vrot.slane %v4936, 1
          %v4938 = vadd.f32 %v4936, %v4937
          %v4939 = vadd.f32 %v4913, %v4914
          %v4940 = vadd.f32 %v4939, %v4915
          %v4941 = vadd.f32 %v4940, %v4916
          %v4942 = vrot.slane %v4941, 4
          %v4943 = vadd.f32 %v4941, %v4942
          %v4944 = vrot.slane %v4943, 2
          %v4945 = vadd.f32 %v4943, %v4944
          %v4946 = vrot.slane %v4945, 1
          %v4947 = vadd.f32 %v4945, %v4946
          %v4948 = vadd.f32 %v4917, %v4918
          %v4949 = vadd.f32 %v4948, %v4919
          %v4950 = vadd.f32 %v4949, %v4920
          %v4951 = vrot.slane %v4950, 4
          %v4952 = vadd.f32 %v4950, %v4951
          %v4953 = vrot.slane %v4952, 2
          %v4954 = vadd.f32 %v4952, %v4953
          %v4955 = vrot.slane %v4954, 1
          %v4956 = vadd.f32 %v4954, %v4955
          %v4961 = vsel %vm1654, %v4938, %v4929
          %v4962 = vsel %vm1656, %v4947, %v4961
          %v4963 = vsel %vm1658, %v4956, %v4962
          %v4965 = vmul.f32 %v1175, %v4963
          %v4966 = vsub.f32 %v4965, %v4322
          %v4967 = vmul.f32 %v4966, 1.442695
          %v4968 = vpow.pop %v4967
          %v4970 = vrot.slane %v4968, 4
          %v4972 = vsel %vm1403, %v4970, 0.0
          %v4973 = vrot.slane %v4972, 4
          %v4974 = vadd.f32 %v4972, %v4973
          %v4975 = vrot.slane %v4974, 2
          %v4976 = vadd.f32 %v4974, %v4975
          %v4977 = vrot.slane %v4976, 1
          %v4978 = vadd.f32 %v4976, %v4977
          %v4979 = vadd.f32 %v4794, %v4978
          %v4980 = vmul.f32 %v4968, %v1175
          %v4982 = vcombine.high %v4980, %v4980
          %v4984 = vunpack.c.l.s4 1966171168
          %v4985 = vunpack.c.0.s8 %v4984
          %v4986 = vlaneseq
          %v4987 = vshrl.u32 %v4986, 7
          %v4988 = vsub.s32 %v4985, %v4987
          %v4989 = vrot.slane %v4982, %v4988
          %v4990 = vcombine.high %v4989, %v4989
          %v4992 = vunpack.c.l.s4 1966171168
          %v4993 = vunpack.c.0.s8 %v4992
          %v4994 = vlaneseq
          %v4995 = vshrl.u32 %v4994, 7
          %v4996 = vsub.s32 %v4993, %v4995
          %v4997 = vrot.slane %v4989, %v4996
          %v4999 = vunpack.c.l.s4 1966171168
          %v5000 = vunpack.c.0.s8 %v4999
          %v5001 = vlaneseq
          %v5002 = vshrl.u32 %v5001, 7
          %v5003 = vsub.s32 %v5000, %v5002
          %v5004 = vrot.slane %v4990, %v5003
          %v5005 = vcombine.high %v4997, %v4997
          %v5006 = vcombine.high %v5004, %v5004
          %v5007 = vlaneseq
          %v5008 = vshrl.u32 %v5007, 7
          %v5009 = vsub.s32 0, %v5008
          %v5010 = vrot.slane %v4997, %v5009
          %v5011 = vlaneseq
          %v5012 = vshrl.u32 %v5011, 7
          %v5013 = vsub.s32 0, %v5012
          %v5014 = vrot.slane %v5004, %v5013
          %v5015 = vlaneseq
          %v5016 = vshrl.u32 %v5015, 7
          %v5017 = vsub.s32 0, %v5016
          %v5018 = vrot.slane %v5005, %v5017
          %v5019 = vlaneseq
          %v5020 = vshrl.u32 %v5019, 7
          %v5021 = vsub.s32 0, %v5020
          %v5022 = vrot.slane %v5006, %v5021
          %v5027 = vmul.f32 %v5010, %v4889
          %v5028 = vmul.f32 %v5010, %v4890
          %v5029 = vmul.f32 %v5010, %v4891
          %v5030 = vmul.f32 %v5010, %v4892
          %v5031 = vmul.f32 %v5014, %v4893
          %v5032 = vmul.f32 %v5014, %v4894
          %v5033 = vmul.f32 %v5014, %v4895
          %v5034 = vmul.f32 %v5014, %v4896
          %v5035 = vmul.f32 %v5018, %v4897
          %v5036 = vmul.f32 %v5018, %v4898
          %v5037 = vmul.f32 %v5018, %v4899
          %v5038 = vmul.f32 %v5018, %v4900
          %v5039 = vmul.f32 %v5022, %v4901
          %v5040 = vmul.f32 %v5022, %v4902
          %v5041 = vmul.f32 %v5022, %v4903
          %v5042 = vmul.f32 %v5022, %v4904
          %v5043 = vadd.f32 %v5027, %v5031
          %v5044 = vadd.f32 %v5043, %v5035
          %v5045 = vadd.f32 %v5044, %v5039
          %v5046 = vadd.f32 %v5028, %v5032
          %v5047 = vadd.f32 %v5046, %v5036
          %v5048 = vadd.f32 %v5047, %v5040
          %v5049 = vadd.f32 %v5029, %v5033
          %v5050 = vadd.f32 %v5049, %v5037
          %v5051 = vadd.f32 %v5050, %v5041
          %v5052 = vadd.f32 %v5030, %v5034
          %v5053 = vadd.f32 %v5052, %v5038
          %v5054 = vadd.f32 %v5053, %v5042
          %v5055 = vadd.f32 %v4869, %v5045
          %v5056 = vadd.f32 %v4870, %v5048
          %v5057 = vadd.f32 %v4871, %v5051
          %v5058 = vadd.f32 %v4872, %v5054
          %v5059 = vadd.f32 %v889, %v2281
          %v5060 = vadd.f32 %v895, %v2285
          %v5061 = vadd.f32 %v901, %v2289
          %v5062 = vadd.f32 %v907, %v2293
          %v5063 = vadd.f32 %v889, %v2300
          %v5064 = vadd.f32 %v895, %v2304
          %v5065 = vadd.f32 %v901, %v2308
          %v5066 = vadd.f32 %v907, %v2312
          %v5067 = vadd.f32 %v889, %v2319
          %v5068 = vadd.f32 %v895, %v2323
          %v5069 = vadd.f32 %v901, %v2327
          %v5070 = vadd.f32 %v907, %v2331
          %v5071 = vtanh.pop %v5059
          %v5072 = vtanh.pop %v5060
          %v5073 = vtanh.pop %v5061
          %v5074 = vtanh.pop %v5062
          %v5075 = vtanh.pop %v5063
          %v5076 = vtanh.pop %v5064
          %v5077 = vtanh.pop %v5065
          %v5078 = vtanh.pop %v5066
          %v5079 = vtanh.pop %v5067
          %v5080 = vtanh.pop %v5068
          %v5081 = vtanh.pop %v5069
          %v5082 = vtanh.pop %v5070
          %v5083 = vmul.f32 %v5071, %v865
          %v5084 = vmul.f32 %v5072, %v871
          %v5085 = vmul.f32 %v5073, %v877
          %v5086 = vmul.f32 %v5074, %v883
          %v5087 = vmul.f32 %v5075, %v865
          %v5088 = vmul.f32 %v5076, %v871
          %v5089 = vmul.f32 %v5077, %v877
          %v5090 = vmul.f32 %v5078, %v883
          %v5091 = vmul.f32 %v5079, %v865
          %v5092 = vmul.f32 %v5080, %v871
          %v5093 = vmul.f32 %v5081, %v877
          %v5094 = vmul.f32 %v5082, %v883
          %v5095 = vadd.f32 %v5083, %v5084
          %v5096 = vadd.f32 %v5095, %v5085
          %v5097 = vadd.f32 %v5096, %v5086
          %v5098 = vrot.slane %v5097, 4
          %v5099 = vadd.f32 %v5097, %v5098
          %v5100 = vrot.slane %v5099, 2
          %v5101 = vadd.f32 %v5099, %v5100
          %v5102 = vrot.slane %v5101, 1
          %v5103 = vadd.f32 %v5101, %v5102
          %v5104 = vadd.f32 %v5087, %v5088
          %v5105 = vadd.f32 %v5104, %v5089
          %v5106 = vadd.f32 %v5105, %v5090
          %v5107 = vrot.slane %v5106, 4
          %v5108 = vadd.f32 %v5106, %v5107
          %v5109 = vrot.slane %v5108, 2
          %v5110 = vadd.f32 %v5108, %v5109
          %v5111 = vrot.slane %v5110, 1
          %v5112 = vadd.f32 %v5110, %v5111
          %v5113 = vadd.f32 %v5091, %v5092
          %v5114 = vadd.f32 %v5113, %v5093
          %v5115 = vadd.f32 %v5114, %v5094
          %v5116 = vrot.slane %v5115, 4
          %v5117 = vadd.f32 %v5115, %v5116
          %v5118 = vrot.slane %v5117, 2
          %v5119 = vadd.f32 %v5117, %v5118
          %v5120 = vrot.slane %v5119, 1
          %v5121 = vadd.f32 %v5119, %v5120
          %v5125 = vsel %vm1392, %v5112, %v5103
          %v5126 = vsel %vm1394, %v5121, %v5125
          %v5128 = vmul.f32 %v1179, %v5126
          %v5129 = vsub.f32 %v5128, %v4322
          %v5130 = vmul.f32 %v5129, 1.442695
          %v5131 = vpow.pop %v5130
          %v5132 = vsel %vm604, %v5131, 0.0
          %v5133 = vrot.slane %v5132, 4
          %v5134 = vadd.f32 %v5132, %v5133
          %v5135 = vrot.slane %v5134, 2
          %v5136 = vadd.f32 %v5134, %v5135
          %v5137 = vrot.slane %v5136, 1
          %v5138 = vadd.f32 %v5136, %v5137
          %v5139 = vadd.f32 %v4979, %v5138
          %v5140 = vmul.f32 %v5131, %v1179
          %v5143 = vunpack.c.l.s4 1966171168
          %v5144 = vunpack.c.0.s8 %v5143
          %v5145 = vlaneseq
          %v5146 = vshrl.u32 %v5145, 7
          %v5147 = vsub.s32 %v5144, %v5146
          %v5148 = vrot.slane %v5140, %v5147
          %v5149 = vcombine.high %v5148, %v5148
          %v5151 = vunpack.c.l.s4 1966171168
          %v5152 = vunpack.c.0.s8 %v5151
          %v5153 = vlaneseq
          %v5154 = vshrl.u32 %v5153, 7
          %v5155 = vsub.s32 %v5152, %v5154
          %v5156 = vrot.slane %v5148, %v5155
          %v5158 = vunpack.c.l.s4 1966171168
          %v5159 = vunpack.c.0.s8 %v5158
          %v5160 = vlaneseq
          %v5161 = vshrl.u32 %v5160, 7
          %v5162 = vsub.s32 %v5159, %v5161
          %v5163 = vrot.slane %v5149, %v5162
          %v5164 = vcombine.high %v5156, %v5156
          %v5165 = vlaneseq
          %v5166 = vshrl.u32 %v5165, 7
          %v5167 = vsub.s32 0, %v5166
          %v5168 = vrot.slane %v5156, %v5167
          %v5169 = vlaneseq
          %v5170 = vshrl.u32 %v5169, 7
          %v5171 = vsub.s32 0, %v5170
          %v5172 = vrot.slane %v5163, %v5171
          %v5173 = vlaneseq
          %v5174 = vshrl.u32 %v5173, 7
          %v5175 = vsub.s32 0, %v5174
          %v5176 = vrot.slane %v5164, %v5175
          %v5180 = vmul.f32 %v5168, %v5071
          %v5181 = vmul.f32 %v5168, %v5072
          %v5182 = vmul.f32 %v5168, %v5073
          %v5183 = vmul.f32 %v5168, %v5074
          %v5184 = vmul.f32 %v5172, %v5075
          %v5185 = vmul.f32 %v5172, %v5076
          %v5186 = vmul.f32 %v5172, %v5077
          %v5187 = vmul.f32 %v5172, %v5078
          %v5188 = vmul.f32 %v5176, %v5079
          %v5189 = vmul.f32 %v5176, %v5080
          %v5190 = vmul.f32 %v5176, %v5081
          %v5191 = vmul.f32 %v5176, %v5082
          %v5192 = vadd.f32 %v5180, %v5184
          %v5193 = vadd.f32 %v5192, %v5188
          %v5194 = vadd.f32 %v5181, %v5185
          %v5195 = vadd.f32 %v5194, %v5189
          %v5196 = vadd.f32 %v5182, %v5186
          %v5197 = vadd.f32 %v5196, %v5190
          %v5198 = vadd.f32 %v5183, %v5187
          %v5199 = vadd.f32 %v5198, %v5191
          %v5200 = vadd.f32 %v5055, %v5193
          %v5201 = vadd.f32 %v5056, %v5195
          %v5202 = vadd.f32 %v5057, %v5197
          %v5203 = vadd.f32 %v5058, %v5199
          %v5204 = vrcp.pop %v5139
          %v5205 = vmul.f32 %v5200, %v5204
          %v5206 = vmul.f32 %v5201, %v5204
          %v5207 = vmul.f32 %v5202, %v5204
          %v5208 = vmul.f32 %v5203, %v5204
          %5210 = vset.pattern.permute.xlu0 0
          %5211 = vperm.xlu0 %5210, %v479
          %v5212 = vpop.permute.xlu0 %5211
          %5215 = vset.pattern.permute.xlu0 0
          %5216 = vperm.xlu0 %5215, %v480
          %v5217 = vpop.permute.xlu0 %5216
          %5220 = vset.pattern.permute.xlu0 0
          %5221 = vperm.xlu0 %5220, %v481
          %v5222 = vpop.permute.xlu0 %5221
          %vm5224 = vcmask 261120
          %v5226 = vsel %vm5224, %v472, 0
          %v5229 = vsel %vm5224, %v473, 0
          %v5232 = vsel %vm5224, %v474, 0
          %5234 = vmatprep.subr.mxu0 %v3387
          %5235 = vmatpush1.msra.mxu0 %v2478
          %5236 = vmatprep.subr.mxu0 %v3388
          %5237 = vmatpush1.msra.mxu0 %v2479
          %5238 = vmatprep.subr.mxu0 %v3389
          %5239 = vmatpush1.msra.mxu0 %v2480
          %5240 = vmatprep.subr.mxu0 %v3390
          %5241 = vmatpush1.msra.mxu0 %v2481
          %5242 = vmatprep.subr.mxu0 0.0
          %5243 = vmatpush1.msra.mxu0 0.0
          %5244 = vmatprep.subr.mxu0 0.0
          %5245 = vmatpush1.msra.mxu0 0.0
          %5246 = vmatprep.subr.mxu0 0.0
          %5247 = vmatpush1.msra.mxu0 0.0
          %5248 = vmatprep.subr.mxu0 0.0
          %5249 = vmatpush1.msra.mxu0 0.0
          %5250 = vmatprep.subr.mxu0 0.0
          %5251 = vmatpush1.msra.mxu0 0.0
          %5252 = vmatprep.subr.mxu0 0.0
          %5253 = vmatpush1.msra.mxu0 0.0
          %5254 = vmatprep.subr.mxu0 0.0
          %5255 = vmatpush1.msra.mxu0 0.0
          %5256 = vmatprep.subr.mxu0 0.0
          %5257 = vmatpush1.msra.mxu0 0.0
          %5258 = vmatprep.subr.mxu0 0.0
          %5259 = vmatpush1.msra.mxu0 0.0
          %5260 = vmatprep.subr.mxu0 0.0
          %5261 = vmatpush1.msra.mxu0 0.0
          %5262 = vmatprep.subr.mxu0 0.0
          %5263 = vmatpush1.msra.mxu0 0.0
          %5264 = vmatprep.subr.mxu0 0.0
          %5265 = vmatpush1.msra.mxu0 0.0
          %5266 = vmatprep.subr.mxu0 0.0
          %5267 = vmatpush1.msra.mxu0 0.0
          %5268 = vmatprep.subr.mxu0 0.0
          %5269 = vmatpush1.msra.mxu0 0.0
          %5270 = vmatprep.subr.mxu0 0.0
          %5271 = vmatpush1.msra.mxu0 0.0
          %5272 = vmatprep.subr.mxu0 0.0
          %5273 = vmatpush1.msra.mxu0 0.0
          %5274 = vmatprep.subr.mxu0 0.0
          %5275 = vmatpush1.msra.mxu0 0.0
          %5276 = vmatprep.subr.mxu0 0.0
          %5277 = vmatpush1.msra.mxu0 0.0
          %5278 = vmatprep.subr.mxu0 0.0
          %5279 = vmatpush1.msra.mxu0 0.0
          %5280 = vmatprep.subr.mxu0 0.0
          %5281 = vmatpush1.msra.mxu0 0.0
          %5282 = vmatprep.subr.mxu0 0.0
          %5283 = vmatpush1.msra.mxu0 0.0
          %5284 = vmatprep.subr.mxu0 0.0
          %5285 = vmatpush1.msra.mxu0 0.0
          %5286 = vmatprep.subr.mxu0 0.0
          %5287 = vmatpush1.msra.mxu0 0.0
          %5288 = vmatprep.subr.mxu0 0.0
          %5289 = vmatpush1.msra.mxu0 0.0
          %5290 = vmatprep.subr.mxu0 0.0
          %5291 = vmatpush1.msra.mxu0 0.0
          %5292 = vmatprep.subr.mxu0 0.0
          %5293 = vmatpush1.msra.mxu0 0.0
          %5294 = vmatprep.subr.mxu0 0.0
          %5295 = vmatpush1.msra.mxu0 0.0
          %5296 = vmatprep.subr.mxu0 0.0
          %5297 = vmatpush1.msra.mxu0 0.0
          %5298 = vmatprep.mubr.f32.mxu0 0.0
          %5299 = vmatmul.mubr.f32.gmra.mrb[0].mxu0 %v5226
          %v5300 = vpop.f32.mrb[0].mxu0
          %v5301 = vadd.f32 %v5212, %v5300
          %v5302 = vpop.f32.mrb[0].mxu0
          %v5303 = vadd.f32 %v5212, %v5302
          %5304 = vmatprep.mubr.f32.mxu0 0.0
          %5305 = vmatmul.mubr.f32.gmra.mrb[0].mxu0 %v5229
          %v5306 = vpop.f32.mrb[0].mxu0
          %v5307 = vadd.f32 %v5217, %v5306
          %v5308 = vpop.f32.mrb[0].mxu0
          %v5309 = vadd.f32 %v5217, %v5308
          %5310 = vmatprep.mubr.f32.mxu0 0.0
          %5311 = vmatmul.mubr.f32.gmra.mrb[0].mxu0 %v5232
          %v5312 = vpop.f32.mrb[0].mxu0
          %v5313 = vadd.f32 %v5222, %v5312
          %v5314 = vpop.f32.mrb[0].mxu0
          %v5315 = vadd.f32 %v5222, %v5314
          %5316 = vdwg.mxu0
          %5317 = vmatprep.subr.mxu0 %v5205
          %5318 = vmatpush1.msra.mxu0 %v4296
          %5319 = vmatprep.subr.mxu0 %v5206
          %5320 = vmatpush1.msra.mxu0 %v4297
          %5321 = vmatprep.subr.mxu0 %v5207
          %5322 = vmatpush1.msra.mxu0 %v4298
          %5323 = vmatprep.subr.mxu0 %v5208
          %5324 = vmatpush1.msra.mxu0 %v4299
          %5325 = vmatprep.subr.mxu0 0.0
          %5326 = vmatpush1.msra.mxu0 0.0
          %5327 = vmatprep.subr.mxu0 0.0
          %5328 = vmatpush1.msra.mxu0 0.0
          %5329 = vmatprep.subr.mxu0 0.0
          %5330 = vmatpush1.msra.mxu0 0.0
          %5331 = vmatprep.subr.mxu0 0.0
          %5332 = vmatpush1.msra.mxu0 0.0
          %5333 = vmatprep.subr.mxu0 0.0
          %5334 = vmatpush1.msra.mxu0 0.0
          %5335 = vmatprep.subr.mxu0 0.0
          %5336 = vmatpush1.msra.mxu0 0.0
          %5337 = vmatprep.subr.mxu0 0.0
          %5338 = vmatpush1.msra.mxu0 0.0
          %5339 = vmatprep.subr.mxu0 0.0
          %5340 = vmatpush1.msra.mxu0 0.0
          %5341 = vmatprep.subr.mxu0 0.0
          %5342 = vmatpush1.msra.mxu0 0.0
          %5343 = vmatprep.subr.mxu0 0.0
          %5344 = vmatpush1.msra.mxu0 0.0
          %5345 = vmatprep.subr.mxu0 0.0
          %5346 = vmatpush1.msra.mxu0 0.0
          %5347 = vmatprep.subr.mxu0 0.0
          %5348 = vmatpush1.msra.mxu0 0.0
          %5349 = vmatprep.subr.mxu0 0.0
          %5350 = vmatpush1.msra.mxu0 0.0
          %5351 = vmatprep.subr.mxu0 0.0
          %5352 = vmatpush1.msra.mxu0 0.0
          %5353 = vmatprep.subr.mxu0 0.0
          %5354 = vmatpush1.msra.mxu0 0.0
          %5355 = vmatprep.subr.mxu0 0.0
          %5356 = vmatpush1.msra.mxu0 0.0
          %5357 = vmatprep.subr.mxu0 0.0
          %5358 = vmatpush1.msra.mxu0 0.0
          %5359 = vmatprep.subr.mxu0 0.0
          %5360 = vmatpush1.msra.mxu0 0.0
          %5361 = vmatprep.subr.mxu0 0.0
          %5362 = vmatpush1.msra.mxu0 0.0
          %5363 = vmatprep.subr.mxu0 0.0
          %5364 = vmatpush1.msra.mxu0 0.0
          %5365 = vmatprep.subr.mxu0 0.0
          %5366 = vmatpush1.msra.mxu0 0.0
          %5367 = vmatprep.subr.mxu0 0.0
          %5368 = vmatpush1.msra.mxu0 0.0
          %5369 = vmatprep.subr.mxu0 0.0
          %5370 = vmatpush1.msra.mxu0 0.0
          %5371 = vmatprep.subr.mxu0 0.0
          %5372 = vmatpush1.msra.mxu0 0.0
          %5373 = vmatprep.subr.mxu0 0.0
          %5374 = vmatpush1.msra.mxu0 0.0
          %5375 = vmatprep.subr.mxu0 0.0
          %5376 = vmatpush1.msra.mxu0 0.0
          %5377 = vmatprep.subr.mxu0 0.0
          %5378 = vmatpush1.msra.mxu0 0.0
          %5379 = vmatprep.subr.mxu0 0.0
          %5380 = vmatpush1.msra.mxu0 0.0
          %5381 = vmatprep.mubr.f32.mxu0 0.0
          %5382 = vmatmul.mubr.f32.gmra.mrb[0].mxu0 %v5226
          %v5383 = vpop.f32.mrb[0].mxu0
          %v5384 = vadd.f32 %v5212, %v5383
          %v5385 = vpop.f32.mrb[0].mxu0
          %v5386 = vadd.f32 %v5212, %v5385
          %5387 = vmatprep.mubr.f32.mxu0 0.0
          %5388 = vmatmul.mubr.f32.gmra.mrb[0].mxu0 %v5229
          %v5389 = vpop.f32.mrb[0].mxu0
          %v5390 = vadd.f32 %v5217, %v5389
          %v5391 = vpop.f32.mrb[0].mxu0
          %v5392 = vadd.f32 %v5217, %v5391
          %5393 = vmatprep.mubr.f32.mxu0 0.0
          %5394 = vmatmul.mubr.f32.gmra.mrb[0].mxu0 %v5232
          %v5395 = vpop.f32.mrb[0].mxu0
          %v5396 = vadd.f32 %v5222, %v5395
          %v5397 = vpop.f32.mrb[0].mxu0
          %v5398 = vadd.f32 %v5222, %v5397
          %5399 = vdwg.mxu0
          %v5400 = vsel %vm1052, 1, 0
          %v5401 = vsel %vm1053, 1, 0
          %v5402 = vsel %vm1054, 1, 0
          %v5403 = vsel %vm1055, 1, 0
          %v5404 = vlaneseq
          %v5405 = vshrl.u32 %v5404, 7
          %v5406 = vsub.s32 0, %v5405
          %v5407 = vrot.slane %v5400, %v5406
          %v5408 = vlaneseq
          %v5409 = vshrl.u32 %v5408, 7
          %v5410 = vsub.s32 0, %v5409
          %v5411 = vrot.slane %v5401, %v5410
          %v5412 = vlaneseq
          %v5413 = vshrl.u32 %v5412, 7
          %v5414 = vsub.s32 0, %v5413
          %v5415 = vrot.slane %v5402, %v5414
          %v5416 = vlaneseq
          %v5417 = vshrl.u32 %v5416, 7
          %v5418 = vsub.s32 0, %v5417
          %v5419 = vrot.slane %v5403, %v5418
          %vm5420 = vcmp.eq.s32.totalorder %v5407, 1
          %vm5421 = vcmp.eq.s32.totalorder %v5411, 1
          %vm5422 = vcmp.eq.s32.totalorder %v5415, 1
          %vm5423 = vcmp.eq.s32.totalorder %v5419, 1
          %v5424 = vsel %vm5420, %v5301, 0.0
          %v5425 = vsel %vm5421, %v5303, 0.0
          %v5426 = vsel %vm5422, %v5384, 0.0
          %v5427 = vsel %vm5423, %v5386, 0.0
          %v5428 = vsel %vm5420, %v5307, 0.0
          %v5429 = vsel %vm5421, %v5309, 0.0
          %v5430 = vsel %vm5422, %v5390, 0.0
          %v5431 = vsel %vm5423, %v5392, 0.0
          %v5432 = vsel %vm5420, %v5313, 0.0
          %v5433 = vsel %vm5421, %v5315, 0.0
          %v5434 = vsel %vm5422, %v5396, 0.0
          %v5435 = vsel %vm5423, %v5398, 0.0
          %v5436 = vadd.f32 %v756, %v5424
          %v5437 = vadd.f32 %v758, %v5425
          %v5438 = vadd.f32 %v911, %v5426
          %v5439 = vadd.f32 %v913, %v5427
          %v5440 = vadd.f32 %v762, %v5428
          %v5441 = vadd.f32 %v764, %v5429
          %v5442 = vadd.f32 %v917, %v5430
          %v5443 = vadd.f32 %v919, %v5431
          %v5444 = vadd.f32 %v768, %v5432
          %v5445 = vadd.f32 %v770, %v5433
          %v5446 = vadd.f32 %v923, %v5434
          %v5447 = vadd.f32 %v925, %v5435
          %5448 = vst [vmem:[%s402] sm:$0xff] %v5436
          %5449 = vst [vmem:[%s402 + $0x8] sm:$0xff] %v5437
          %5450 = vst [vmem:[%s402 + $0x10] sm:$0xff] %v5438
          %5451 = vst [vmem:[%s402 + $0x18] sm:$0xff] %v5439
          %5452 = vst [vmem:[%s402 + $0x20] sm:$0xff] %v5440
          %5453 = vst [vmem:[%s402 + $0x28] sm:$0xff] %v5441
          %5454 = vst [vmem:[%s402 + $0x30] sm:$0xff] %v5442
          %5455 = vst [vmem:[%s402 + $0x38] sm:$0xff] %v5443
          %5456 = vst [vmem:[%s402 + $0x40] sm:$0x7] %v5444
          %5457 = vst [vmem:[%s402 + $0x48] sm:$0x7] %v5445
          %5458 = vst [vmem:[%s402 + $0x50] sm:$0x7] %v5446
          %5459 = vst [vmem:[%s402 + $0x58] sm:$0x7] %v5447
        $region83: #{tpu_custom_call.1} parent=70 // pred_fallthru
          _
        %p5460 = pneg %p1201
        // Predicated region
        $region84: #{tpu_custom_call.1} parent=70 // pred_check
          _
        $region85: #{tpu_custom_call.1} parent=70 // pred_check_branch
          %5462 = sbr.rel (%p1201) target = $region87
        $region86: #{tpu_custom_call.1} parent=70 // pred_region
          %5463 = vst [vmem:[%s402] sm:$0xff] %v756
          %5464 = vst [vmem:[%s402 + $0x8] sm:$0xff] %v758
          %5465 = vst [vmem:[%s402 + $0x10] sm:$0xff] %v911
          %5466 = vst [vmem:[%s402 + $0x18] sm:$0xff] %v913
          %5467 = vst [vmem:[%s402 + $0x20] sm:$0xff] %v762
          %5468 = vst [vmem:[%s402 + $0x28] sm:$0xff] %v764
          %5469 = vst [vmem:[%s402 + $0x30] sm:$0xff] %v917
          %5470 = vst [vmem:[%s402 + $0x38] sm:$0xff] %v919
          %5471 = vst [vmem:[%s402 + $0x40] sm:$0x7] %v768
          %5472 = vst [vmem:[%s402 + $0x48] sm:$0x7] %v770
          %5473 = vst [vmem:[%s402 + $0x50] sm:$0x7] %v923
          %5474 = vst [vmem:[%s402 + $0x58] sm:$0x7] %v925
        $region87: #{tpu_custom_call.1} parent=70 // pred_fallthru
          _
        %s5475 = sand.u32 %s212, 1
        %s5476 = scalar_lea.sflag [#allocation6], %s5475
        %s5477 = sand.u32 %s212, 1
        %s5478 = smul.addr %s5477, 96
        %s5479 = scalar_lea.vmem [#allocation7], %s5478
        // Predicated region
        $region88: #{tpu_custom_call.1} parent=70 // pred_check
          %p5480 = pneg %p222
        $region89: #{tpu_custom_call.1} parent=70 // pred_check_branch
          %5482 = sbr.rel (%p5480) target = $region91
        $region90: #{tpu_custom_call.1} parent=70 // pred_region
          %s5483 = smul.u32 4, %s26
          %s5485 = ssub.s32 1536, 1536
          %5486 = vsyncadd %s5476, %s5485
          %s5487 = smul.addr %s5483, 128
          %s5488 = scalar_lea.hbm %s8, %s5487
          %s5489 = sshll.u32 %s5479, 4
          %s5490 = int_to_ptr.vmem [resolvable:$true] %s5489
          %5495 = dma.vmem_to_hbm [thread:$0]  %s5490, 1536, %s5488, %s5476, 512, 1024, 32
        $region91: #{tpu_custom_call.1} parent=70 // pred_fallthru
          _
      $region71: #{tpu_custom_call.1} parent=5 // pred_fallthru
        _
      %p5496 = scmp.le.s32.totalorder 2, %s21
      // Predicated region
      $region92: #{tpu_custom_call.1} parent=5 // pred_check
        %p5497 = pneg %p5496
      $region93: #{tpu_custom_call.1} parent=5 // pred_check_branch
        %5499 = sbr.rel (%p5497) target = $region95
      $region94: #{tpu_custom_call.1} parent=5 // pred_region
        %s5500 = ssub.s32 %s21, 2
        // Predicated region
        $region96: #{tpu_custom_call.1} parent=94 // pred_check
          %p5501 = pneg %p228
        $region97: #{tpu_custom_call.1} parent=94 // pred_check_branch
          %5503 = sbr.rel (%p5501) target = $region99
        $region98: #{tpu_custom_call.1} parent=94 // pred_region
          %s5504 = sand.u32 %s213, 1
          %s5505 = scalar_lea.sflag [#allocation6], %s5504
          %s5506 = sand.u32 %s213, 1
          %s5507 = smul.addr %s5506, 96
          %s5508 = scalar_lea.vmem [#allocation7], %s5507
          %5509 = dma.done %s5505, 1536
        $region99: #{tpu_custom_call.1} parent=94 // pred_fallthru
          _
      $region95: #{tpu_custom_call.1} parent=5 // pred_fallthru
        _
    $region6: #{tpu_custom_call.1} parent=1 // loop_footer
      %s25 = sadd.s32 1, %s21
    $region7: #{tpu_custom_call.1} parent=1 // loop_footer_branch
      %20 = sbr.rel target = $region3
    $region8: #{tpu_custom_call.1} parent=1 // loop_exit
      _
    %5510 = vsyncpa [#allocation5], 1
    %s5511 = scalar_lea.sflag [#allocation5], 1
    %5512 = vsyncpa %s5511, 1
    %5513 = vsyncpa [#allocation6], 1
    %s5514 = scalar_lea.sflag [#allocation6], 1
    %5515 = vsyncpa %s5514, 1

</llo_original>
